<compile_context>
chip_gen: v7x
topology: tpu7x:2x2x1
jax: 0.10.0
libtpu: 0.0.40
codegen_flags: <defaults>
</compile_context>

<pallas_src>
import functools

import jax
import jax.numpy as jnp
from jax.experimental import pallas as pl
from jax.experimental.pallas import tpu as pltpu

LN_EPS = 1e-5
LANE = 128


def _round_up(x, m):
    return (x + m - 1) // m * m


def _pick_chunk(seq, cap=32):
    """Largest divisor of seq that is <= cap (time chunk length)."""
    best = 1
    for d in range(1, min(seq, cap) + 1):
        if seq % d == 0:
            best = d
    return best


def _gru_ln_update(gi, gh, h_prev, bh_n, gamma, beta, hp, n_valid):
    """PyTorch-semantics GRUCell update + LayerNorm on hp-padded lanes.

    gi already contains b_ih (all gates) + b_hh (r, z gates); bh_n is b_hh of
    the n gate (pre-broadcast to (batch, hp)). Padded lanes of h_prev are
    exactly zero and stay zero because padded lanes of gamma/beta are zero, so
    sums over all lanes equal sums over the n_valid real features.
    """
    r = jax.nn.sigmoid(gi[:, 0:hp] + gh[:, 0:hp])
    z = jax.nn.sigmoid(gi[:, hp:2 * hp] + gh[:, hp:2 * hp])
    n = jnp.tanh(gi[:, 2 * hp:3 * hp] + r * (gh[:, 2 * hp:3 * hp] + bh_n))
    h = (1.0 - z) * n + z * h_prev
    # LayerNorm (biased variance, eps=1e-5) via E[h^2] - mu^2 — no lane mask.
    inv = 1.0 / n_valid
    mu = jnp.sum(h, axis=-1, keepdims=True) * inv
    ex2 = jnp.sum(h * h, axis=-1, keepdims=True) * inv
    var = jnp.maximum(ex2 - mu * mu, 0.0)
    return (h - mu) * jax.lax.rsqrt(var + LN_EPS) * gamma + beta


def _gru_rnn_kernel(x_ref,
                    wih0_ref, whh0_ref, bin0_ref, bhn0_ref, g0_ref, be0_ref,
                    wih1_ref, whh1_ref, bin1_ref, bhn1_ref, g1_ref, be1_ref,
                    wfc_ref, bfc_ref,
                    out_ref,
                    gi0_ref, h0_ref, h1_ref,
                    *, chunk, batch, h0_pad, h0_valid, h1_pad, h1_valid, unroll):
    f32, bf16 = jnp.float32, jnp.bfloat16
    c = pl.program_id(0)

    @pl.when(c == 0)
    def _init():
        h0_ref[...] = jnp.zeros_like(h0_ref)
        h1_ref[...] = jnp.zeros_like(h1_ref)

    # Pre-pass: layer-0 input projection for every timestep of this chunk in one
    # MXU matmul (x rows are time-major: row t*batch + b <-> (t, b)). Stored as
    # bf16 to halve the scratch footprint and per-step gi0 load bytes.
    gi0_all = (jnp.dot(x_ref[...], wih0_ref[...], preferred_element_type=f32)
               + bin0_ref[...])
    gi0_ref[...] = gi0_all.reshape(chunk, batch, 3 * h0_pad).astype(bf16)

    # Loop-invariant constants: single ref read + broadcast, hoisted out of the
    # serial recurrence (JAX does not CSE broadcast_in_dim inside the loop).
    bhn0 = jnp.broadcast_to(bhn0_ref[...], (batch, h0_pad))
    g0 = jnp.broadcast_to(g0_ref[...], (batch, h0_pad))
    be0 = jnp.broadcast_to(be0_ref[...], (batch, h0_pad))
    bin1 = jnp.broadcast_to(bin1_ref[...], (batch, 3 * h1_pad))
    bhn1 = jnp.broadcast_to(bhn1_ref[...], (batch, h1_pad))
    g1 = jnp.broadcast_to(g1_ref[...], (batch, h1_pad))
    be1 = jnp.broadcast_to(be1_ref[...], (batch, h1_pad))

    def step(t, carry):
        h0, h1 = carry
        gi0 = gi0_ref[t].astype(f32)            # leading-axis index: tile-aligned
        # layer 0: only the h-dependent matmul sits on the serial path.
        gh0 = jnp.dot(h0.astype(bf16), whh0_ref[...], preferred_element_type=f32)
        h0 = _gru_ln_update(gi0, gh0, h0, bhn0, g0, be0, h0_pad, h0_valid)
        # layer 1 (each gate padded to 128 lanes -> lane-aligned gate slices).
        gi1 = jnp.dot(h0.astype(bf16), wih1_ref[...], preferred_element_type=f32) + bin1
        gh1 = jnp.dot(h1.astype(bf16), whh1_ref[...], preferred_element_type=f32)
        h1 = _gru_ln_update(gi1, gh1, h1, bhn1, g1, be1, h1_pad, h1_valid)
        return h0, h1

    h0, h1 = jax.lax.fori_loop(0, chunk, step, (h0_ref[...], h1_ref[...]),
                               unroll=unroll)
    h0_ref[...] = h0
    h1_ref[...] = h1

    @pl.when(c == pl.num_programs(0) - 1)
    def _finalize():
        # fc head (Dropout is identity at eval time) on the final hidden state.
        out_ref[...] = (jnp.dot(h1.astype(bf16), wfc_ref[...],
                                preferred_element_type=f32) + bfc_ref[...])


def gru_rnn_forward(x, packed, gru_layer_dims=(128, 64), chunk_cap=32):
    """x: (batch, seq, input_dim) float32. Returns (batch, output_dim) float32."""
    batch, seq, input_dim = x.shape
    h0_valid, h1_valid = gru_layer_dims
    h0_pad = _round_up(h0_valid, LANE)
    h1_pad = _round_up(h1_valid, LANE)
    output_dim = packed["bfc"].shape[-1]

    chunk = _pick_chunk(seq, chunk_cap)
    n_chunks = seq // chunk
    # The (8,128) block constraint on x only binds when there is more than one chunk.
    assert n_chunks == 1 or (chunk * batch) % 8 == 0, \
        "chunk*batch must be a multiple of 8 when time-chunking"

    # time-major, flattened to (seq*batch, input_dim); bf16 for the MXU pre-pass.
    x_tm = (jnp.transpose(x, (1, 0, 2))
            .reshape(seq * batch, input_dim)
            .astype(jnp.bfloat16))

    args = (
        x_tm,
        packed["wih0_t"], packed["whh0_t"], packed["bin0"], packed["bhn0"],
        packed["g0"], packed["be0"],
        packed["wih1_t"], packed["whh1_t"], packed["bin1"], packed["bhn1"],
        packed["g1"], packed["be1"],
        packed["wfc_t"], packed["bfc"],
    )

    def const_spec(shape):
        return pl.BlockSpec(shape, lambda c, _nd=len(shape): (0,) * _nd)

    in_specs = [pl.BlockSpec((chunk * batch, input_dim), lambda c: (c, 0))]
    in_specs += [const_spec(a.shape) for a in args[1:]]

    # Explicit scoped-VMEM budget from actual buffer sizes (with headroom),
    # capped so it stays sane on v7x (64 MiB physical VMEM).
    x_chunk_bytes = chunk * batch * input_dim * 2
    const_bytes = sum(int(a.size) * a.dtype.itemsize for a in args[1:])
    gi0_bytes = chunk * _round_up(batch, 16) * 3 * h0_pad * 2
    state_bytes = 4 * batch * (h0_pad + h1_pad)
    out_bytes = batch * output_dim * 4
    need = 2 * (x_chunk_bytes + const_bytes + out_bytes) + gi0_bytes + state_bytes
    vmem_limit = int(min(max(2 * need + (2 << 20), 16 << 20), 64 << 20))

    kernel = functools.partial(
        _gru_rnn_kernel, chunk=chunk, batch=batch,
        h0_pad=h0_pad, h0_valid=h0_valid, h1_pad=h1_pad, h1_valid=h1_valid,
        unroll=min(chunk, 8))

    return pl.pallas_call(
        kernel,
        out_shape=jax.ShapeDtypeStruct((batch, output_dim), jnp.float32),
        grid_spec=pltpu.PrefetchScalarGridSpec(
            num_scalar_prefetch=0,
            grid=(n_chunks,),
            in_specs=in_specs,
            out_specs=pl.BlockSpec((batch, output_dim), lambda c: (0, 0)),
            scratch_shapes=[
                pltpu.VMEM((chunk, batch, 3 * h0_pad), jnp.bfloat16),  # gi0 pre-pass
                pltpu.VMEM((batch, h0_pad), jnp.float32),              # carried h0
                pltpu.VMEM((batch, h1_pad), jnp.float32),              # carried h1
            ]),
        compiler_params=pltpu.CompilerParams(
            dimension_semantics=("arbitrary",),
            vmem_limit_bytes=vmem_limit),
    )(*args)


# ----------------------------------------------------------------------------
# parameter construction / packing
# ----------------------------------------------------------------------------
def init_raw_params(key, input_dim, gru_layer_dims=(128, 64), output_dim=2):
    """Synthetic parameters in PyTorch layout (nn.GRUCell / nn.LayerNorm / nn.Linear)."""
    dims = [input_dim] + list(gru_layer_dims)
    keys = jax.random.split(key, 16)
    k = iter(keys)

    def rnd(shape, scale=0.1):
        return (scale * jax.random.normal(next(k), shape)).astype(jnp.float32)

    p = {}
    for i in range(len(gru_layer_dims)):
        din, h = dims[i], dims[i + 1]
        p[f"wih{i}"] = rnd((3 * h, din))        # weight_ih
        p[f"whh{i}"] = rnd((3 * h, h))          # weight_hh
        p[f"bih{i}"] = rnd((3 * h,))
        p[f"bhh{i}"] = rnd((3 * h,))
        p[f"ln_w{i}"] = (1.0 + rnd((h,))).astype(jnp.float32)
        p[f"ln_b{i}"] = rnd((h,))
    p["wfc"] = rnd((output_dim, dims[-1]))      # Linear weight
    p["bfc"] = rnd((output_dim,))
    return p


def pack_params(raw, input_dim, gru_layer_dims=(128, 64), output_dim=2):
    """Fold biases, pad each gate to a 128-lane region, transpose, cast to bf16."""
    packed = {}
    dims = [input_dim] + list(gru_layer_dims)
    for i in range(len(gru_layer_dims)):
        h = dims[i + 1]
        hp = _round_up(h, LANE)
        wih_t = raw[f"wih{i}"].T.astype(jnp.float32)   # (din, 3h)
        whh_t = raw[f"whh{i}"].T.astype(jnp.float32)   # (h,   3h)
        bih, bhh = raw[f"bih{i}"], raw[f"bhh{i}"]
        # fold b_hh of the r/z gates into the input-side bias; keep b_hh_n separate.
        b_in = bih + jnp.concatenate([bhh[:2 * h], jnp.zeros((h,), jnp.float32)])

        def pad_gate_cols(a, h=h, hp=hp):              # (..., 3h) -> (..., 3hp)
            gates = [a[..., g * h:(g + 1) * h] for g in range(3)]
            widths = [(0, 0)] * (a.ndim - 1) + [(0, hp - h)]
            return jnp.concatenate([jnp.pad(g_, widths) for g_ in gates], axis=-1)

        packed[f"wih{i}_t"] = pad_gate_cols(wih_t).astype(jnp.bfloat16)
        whh_p = jnp.pad(pad_gate_cols(whh_t), ((0, hp - h), (0, 0)))
        packed[f"whh{i}_t"] = whh_p.astype(jnp.bfloat16)
        packed[f"bin{i}"] = pad_gate_cols(b_in[None, :]).astype(jnp.float32)
        packed[f"bhn{i}"] = jnp.pad(bhh[2 * h:], (0, hp - h))[None, :].astype(jnp.float32)
        packed[f"g{i}"] = jnp.pad(raw[f"ln_w{i}"], (0, hp - h))[None, :].astype(jnp.float32)
        packed[f"be{i}"] = jnp.pad(raw[f"ln_b{i}"], (0, hp - h))[None, :].astype(jnp.float32)

    h_last = dims[-1]
    hp_last = _round_up(h_last, LANE)
    wfc_t = raw["wfc"].T.astype(jnp.float32)           # (h_last, out)
    packed["wfc_t"] = jnp.pad(wfc_t, ((0, hp_last - h_last), (0, 0))).astype(jnp.bfloat16)
    packed["bfc"] = raw["bfc"][None, :].astype(jnp.float32)
    return packed


# ----------------------------------------------------------------------------
# pure-JAX reference (PyTorch forward semantics, eval mode) with matching
# bf16 matmul operands / f32 accumulation, so the kernel can be checked tightly.
# ----------------------------------------------------------------------------
def gru_rnn_reference(x, raw, gru_layer_dims=(128, 64)):
    bf16, f32 = jnp.bfloat16, jnp.float32
    batch, seq, _ = x.shape

    def cell(inp, h, wih, whh, bih, bhh):
        gi = jnp.dot(inp.astype(bf16), wih.T.astype(bf16),
                     preferred_element_type=f32) + bih
        gh = jnp.dot(h.astype(bf16), whh.T.astype(bf16),
                     preferred_element_type=f32) + bhh
        H = whh.shape[1]
        r = jax.nn.sigmoid(gi[:, :H] + gh[:, :H])
        z = jax.nn.sigmoid(gi[:, H:2 * H] + gh[:, H:2 * H])
        n = jnp.tanh(gi[:, 2 * H:] + r * gh[:, 2 * H:])
        return (1.0 - z) * n + z * h

    def layer_norm(h, w, b):
        mu = jnp.mean(h, axis=-1, keepdims=True)
        var = jnp.mean((h - mu) ** 2, axis=-1, keepdims=True)
        return (h - mu) * jax.lax.rsqrt(var + LN_EPS) * w + b

    hs = [jnp.zeros((batch, d), f32) for d in gru_layer_dims]
    for t in range(seq):
        inp = x[:, t, :]
        for i in range(len(gru_layer_dims)):
            hs[i] = layer_norm(
                cell(inp, hs[i], raw[f"wih{i}"], raw[f"whh{i}"],
                     raw[f"bih{i}"], raw[f"bhh{i}"]),
                raw[f"ln_w{i}"], raw[f"ln_b{i}"])
            inp = hs[i]
    return jnp.dot(hs[-1].astype(bf16), raw["wfc"].T.astype(bf16),
                   preferred_element_type=f32) + raw["bfc"]


if __name__ == "__main__":
    batch, seq, input_dim = 8, 8, 16
    gru_layer_dims = (128, 64)
    output_dim = 2

    key = jax.random.PRNGKey(0)
    kx, kp = jax.random.split(key)
    x = jax.random.normal(kx, (batch, seq, input_dim), dtype=jnp.float32)
    raw = init_raw_params(kp, input_dim, gru_layer_dims, output_dim)
    packed = pack_params(raw, input_dim, gru_layer_dims, output_dim)

    out = gru_rnn_forward(x, packed, gru_layer_dims)
    out = jax.block_until_ready(out)

    ref = gru_rnn_reference(x, raw, gru_layer_dims)
    assert out.shape == (batch, output_dim)
    max_err = jnp.max(jnp.abs(out - ref))
    assert jnp.allclose(out, ref, atol=2e-2, rtol=2e-2), f"max abs err {max_err}"

    print("KERNEL_OK")
</pallas_src>

<mosaic_0001>
module attributes {stable_mosaic.version = 11 : i64} {
  func.func @_gru_rnn_kernel(%arg0: i32, %arg1: memref<64x16xbf16, #tpu.memory_space<vmem>>, %arg2: memref<16x384xbf16, #tpu.memory_space<vmem>>, %arg3: memref<128x384xbf16, #tpu.memory_space<vmem>>, %arg4: memref<1x384xf32, #tpu.memory_space<vmem>>, %arg5: memref<1x128xf32, #tpu.memory_space<vmem>>, %arg6: memref<1x128xf32, #tpu.memory_space<vmem>>, %arg7: memref<1x128xf32, #tpu.memory_space<vmem>>, %arg8: memref<128x384xbf16, #tpu.memory_space<vmem>>, %arg9: memref<128x384xbf16, #tpu.memory_space<vmem>>, %arg10: memref<1x384xf32, #tpu.memory_space<vmem>>, %arg11: memref<1x128xf32, #tpu.memory_space<vmem>>, %arg12: memref<1x128xf32, #tpu.memory_space<vmem>>, %arg13: memref<1x128xf32, #tpu.memory_space<vmem>>, %arg14: memref<128x2xbf16, #tpu.memory_space<vmem>>, %arg15: memref<1x2xf32, #tpu.memory_space<vmem>>, %arg16: memref<8x2xf32, #tpu.memory_space<vmem>>, %arg17: memref<8x8x384xbf16, #tpu.memory_space<vmem>>, %arg18: memref<8x128xf32, #tpu.memory_space<vmem>>, %arg19: memref<8x128xf32, #tpu.memory_space<vmem>>) attributes {dimension_semantics = [#tpu.dimension_semantics<arbitrary>], iteration_bounds = array<i64: 1>, scalar_prefetch = 0 : i64, scratch_operands = 3 : i64, tpu.core_type = #tpu.core_type<tc>, window_params = [{transform_indices = @transform_0, window_bounds = array<i64: 64, 16>}, {pipeline_mode = #tpu.pipeline_mode<synchronous>, transform_indices = @transform_1, window_bounds = array<i64: 16, 384>}, {pipeline_mode = #tpu.pipeline_mode<synchronous>, transform_indices = @transform_2, window_bounds = array<i64: 128, 384>}, {pipeline_mode = #tpu.pipeline_mode<synchronous>, transform_indices = @transform_3, window_bounds = array<i64: 1, 384>}, {pipeline_mode = #tpu.pipeline_mode<synchronous>, transform_indices = @transform_4, window_bounds = array<i64: 1, 128>}, {pipeline_mode = #tpu.pipeline_mode<synchronous>, transform_indices = @transform_5, window_bounds = array<i64: 1, 128>}, {pipeline_mode = #tpu.pipeline_mode<synchronous>, transform_indices = @transform_6, window_bounds = array<i64: 1, 128>}, {pipeline_mode = #tpu.pipeline_mode<synchronous>, transform_indices = @transform_7, window_bounds = array<i64: 128, 384>}, {pipeline_mode = #tpu.pipeline_mode<synchronous>, transform_indices = @transform_8, window_bounds = array<i64: 128, 384>}, {pipeline_mode = #tpu.pipeline_mode<synchronous>, transform_indices = @transform_9, window_bounds = array<i64: 1, 384>}, {pipeline_mode = #tpu.pipeline_mode<synchronous>, transform_indices = @transform_10, window_bounds = array<i64: 1, 128>}, {pipeline_mode = #tpu.pipeline_mode<synchronous>, transform_indices = @transform_11, window_bounds = array<i64: 1, 128>}, {pipeline_mode = #tpu.pipeline_mode<synchronous>, transform_indices = @transform_12, window_bounds = array<i64: 1, 128>}, {pipeline_mode = #tpu.pipeline_mode<synchronous>, transform_indices = @transform_13, window_bounds = array<i64: 128, 2>}, {pipeline_mode = #tpu.pipeline_mode<synchronous>, transform_indices = @transform_14, window_bounds = array<i64: 1, 2>}, {pipeline_mode = #tpu.pipeline_mode<synchronous>, transform_indices = @transform_15, window_bounds = array<i64: 8, 2>}]} {
    %c0_i32 = arith.constant 0 : i32
    %0 = arith.cmpi eq, %arg0, %c0_i32 : i32
    %1 = arith.extui %0 : i1 to i32
    %c0_i32_0 = arith.constant 0 : i32
    %2 = arith.cmpi ne, %1, %c0_i32_0 : i32
    scf.if %2 {
      %cst_266 = arith.constant 0.000000e+00 : f32
      %936 = vector.broadcast %cst_266 : f32 to vector<8x128xf32>
      %c0_267 = arith.constant 0 : index
      %c0_268 = arith.constant 0 : index
      %937 = vector.load %arg18[%c0_267, %c0_268] : memref<8x128xf32, #tpu.memory_space<vmem>>, vector<8x128xf32>
      tpu.vector_store %arg18[%c0_267, %c0_268], %936 {strides = array<i32>} : memref<8x128xf32, #tpu.memory_space<vmem>>, vector<8x128xf32>,
      %cst_269 = arith.constant 0.000000e+00 : f32
      %938 = vector.broadcast %cst_269 : f32 to vector<8x128xf32>
      %c0_270 = arith.constant 0 : index
      %c0_271 = arith.constant 0 : index
      %939 = vector.load %arg19[%c0_270, %c0_271] : memref<8x128xf32, #tpu.memory_space<vmem>>, vector<8x128xf32>
      tpu.vector_store %arg19[%c0_270, %c0_271], %938 {strides = array<i32>} : memref<8x128xf32, #tpu.memory_space<vmem>>, vector<8x128xf32>,
    } else {
    }
    %c0 = arith.constant 0 : index
    %c0_1 = arith.constant 0 : index
    %3 = vector.load %arg1[%c0, %c0_1] : memref<64x16xbf16, #tpu.memory_space<vmem>>, vector<64x16xbf16>
    %c0_2 = arith.constant 0 : index
    %c0_3 = arith.constant 0 : index
    %4 = vector.load %arg2[%c0_2, %c0_3] : memref<16x384xbf16, #tpu.memory_space<vmem>>, vector<16x384xbf16>
    %cst = arith.constant dense<0.000000e+00> : vector<64x384xf32>
    %5 = tpu.matmul %3, %4, %cst {dimension_numbers = #tpu.dot_dimension_numbers<[1], [0], [0], [1], [0, 0, 1, 1], [], []>} : vector<64x16xbf16>, vector<16x384xbf16>, vector<64x384xf32> -> vector<64x384xf32>
    %c0_4 = arith.constant 0 : index
    %c0_5 = arith.constant 0 : index
    %6 = vector.load %arg4[%c0_4, %c0_5] : memref<1x384xf32, #tpu.memory_space<vmem>>, vector<1x384xf32>
    %7 = vector.broadcast %6 : vector<1x384xf32> to vector<64x384xf32>
    %8 = arith.addf %5, %7 : vector<64x384xf32>
    %9 = vector.shape_cast %8 : vector<64x384xf32> to vector<8x8x384xf32>
    %10 = arith.truncf %9 : vector<8x8x384xf32> to vector<8x8x384xbf16>
    %c0_6 = arith.constant 0 : index
    %c0_7 = arith.constant 0 : index
    %c0_8 = arith.constant 0 : index
    %11 = vector.load %arg17[%c0_6, %c0_7, %c0_8] : memref<8x8x384xbf16, #tpu.memory_space<vmem>>, vector<8x8x384xbf16>
    tpu.vector_store %arg17[%c0_6, %c0_7, %c0_8], %10 {strides = array<i32>} : memref<8x8x384xbf16, #tpu.memory_space<vmem>>, vector<8x8x384xbf16>,
    %c0_9 = arith.constant 0 : index
    %c0_10 = arith.constant 0 : index
    %12 = vector.load %arg5[%c0_9, %c0_10] : memref<1x128xf32, #tpu.memory_space<vmem>>, vector<1x128xf32>
    %13 = vector.shape_cast %12 : vector<1x128xf32> to vector<1x128xf32>
    %14 = vector.broadcast %13 : vector<1x128xf32> to vector<8x128xf32>
    %c0_11 = arith.constant 0 : index
    %c0_12 = arith.constant 0 : index
    %15 = vector.load %arg6[%c0_11, %c0_12] : memref<1x128xf32, #tpu.memory_space<vmem>>, vector<1x128xf32>
    %16 = vector.shape_cast %15 : vector<1x128xf32> to vector<1x128xf32>
    %17 = vector.broadcast %16 : vector<1x128xf32> to vector<8x128xf32>
    %c0_13 = arith.constant 0 : index
    %c0_14 = arith.constant 0 : index
    %18 = vector.load %arg7[%c0_13, %c0_14] : memref<1x128xf32, #tpu.memory_space<vmem>>, vector<1x128xf32>
    %19 = vector.shape_cast %18 : vector<1x128xf32> to vector<1x128xf32>
    %20 = vector.broadcast %19 : vector<1x128xf32> to vector<8x128xf32>
    %c0_15 = arith.constant 0 : index
    %c0_16 = arith.constant 0 : index
    %21 = vector.load %arg10[%c0_15, %c0_16] : memref<1x384xf32, #tpu.memory_space<vmem>>, vector<1x384xf32>
    %22 = vector.shape_cast %21 : vector<1x384xf32> to vector<1x384xf32>
    %23 = vector.broadcast %22 : vector<1x384xf32> to vector<8x384xf32>
    %c0_17 = arith.constant 0 : index
    %c0_18 = arith.constant 0 : index
    %24 = vector.load %arg11[%c0_17, %c0_18] : memref<1x128xf32, #tpu.memory_space<vmem>>, vector<1x128xf32>
    %25 = vector.shape_cast %24 : vector<1x128xf32> to vector<1x128xf32>
    %26 = vector.broadcast %25 : vector<1x128xf32> to vector<8x128xf32>
    %c0_19 = arith.constant 0 : index
    %c0_20 = arith.constant 0 : index
    %27 = vector.load %arg12[%c0_19, %c0_20] : memref<1x128xf32, #tpu.memory_space<vmem>>, vector<1x128xf32>
    %28 = vector.shape_cast %27 : vector<1x128xf32> to vector<1x128xf32>
    %29 = vector.broadcast %28 : vector<1x128xf32> to vector<8x128xf32>
    %c0_21 = arith.constant 0 : index
    %c0_22 = arith.constant 0 : index
    %30 = vector.load %arg13[%c0_21, %c0_22] : memref<1x128xf32, #tpu.memory_space<vmem>>, vector<1x128xf32>
    %31 = vector.shape_cast %30 : vector<1x128xf32> to vector<1x128xf32>
    %32 = vector.broadcast %31 : vector<1x128xf32> to vector<8x128xf32>
    %c0_23 = arith.constant 0 : index
    %c0_24 = arith.constant 0 : index
    %33 = vector.load %arg18[%c0_23, %c0_24] : memref<8x128xf32, #tpu.memory_space<vmem>>, vector<8x128xf32>
    %c0_25 = arith.constant 0 : index
    %c0_26 = arith.constant 0 : index
    %34 = vector.load %arg19[%c0_25, %c0_26] : memref<8x128xf32, #tpu.memory_space<vmem>>, vector<8x128xf32>
    %c0_i32_27 = arith.constant 0 : i32
    %35 = arith.index_cast %c0_i32_27 : i32 to index
    %c0_28 = arith.constant 0 : index
    %c0_29 = arith.constant 0 : index
    %36 = vector.load %arg17[%35, %c0_28, %c0_29] : memref<8x8x384xbf16, #tpu.memory_space<vmem>>, vector<1x8x384xbf16>
    %37 = vector.shape_cast %36 : vector<1x8x384xbf16> to vector<8x384xbf16>
    %38 = arith.extf %37 : vector<8x384xbf16> to vector<8x384xf32>
    %39 = arith.truncf %33 : vector<8x128xf32> to vector<8x128xbf16>
    %c0_30 = arith.constant 0 : index
    %c0_31 = arith.constant 0 : index
    %40 = vector.load %arg3[%c0_30, %c0_31] : memref<128x384xbf16, #tpu.memory_space<vmem>>, vector<128x384xbf16>
    %cst_32 = arith.constant dense<0.000000e+00> : vector<8x384xf32>
    %41 = tpu.matmul %39, %40, %cst_32 {dimension_numbers = #tpu.dot_dimension_numbers<[1], [0], [0], [1], [0, 0, 1, 1], [], []>} : vector<8x128xbf16>, vector<128x384xbf16>, vector<8x384xf32> -> vector<8x384xf32>
    %42 = vector.extract_strided_slice %38 {offsets = [0, 0], sizes = [8, 128], strides = [1, 1]} : vector<8x384xf32> to vector<8x128xf32>
    %43 = vector.extract_strided_slice %41 {offsets = [0, 0], sizes = [8, 128], strides = [1, 1]} : vector<8x384xf32> to vector<8x128xf32>
    %44 = arith.addf %42, %43 : vector<8x128xf32>
    %45 = arith.negf %44 : vector<8x128xf32>
    %46 = math.exp %45 : vector<8x128xf32>
    %cst_33 = arith.constant 1.000000e+00 : f32
    %47 = vector.broadcast %cst_33 : f32 to vector<8x128xf32>
    %48 = arith.addf %47, %46 : vector<8x128xf32>
    %49 = arith.divf %47, %48 : vector<8x128xf32>
    %50 = vector.extract_strided_slice %38 {offsets = [0, 128], sizes = [8, 128], strides = [1, 1]} : vector<8x384xf32> to vector<8x128xf32>
    %51 = vector.extract_strided_slice %41 {offsets = [0, 128], sizes = [8, 128], strides = [1, 1]} : vector<8x384xf32> to vector<8x128xf32>
    %52 = arith.addf %50, %51 : vector<8x128xf32>
    %53 = arith.negf %52 : vector<8x128xf32>
    %54 = math.exp %53 : vector<8x128xf32>
    %cst_34 = arith.constant 1.000000e+00 : f32
    %55 = vector.broadcast %cst_34 : f32 to vector<8x128xf32>
    %56 = arith.addf %55, %54 : vector<8x128xf32>
    %57 = arith.divf %55, %56 : vector<8x128xf32>
    %58 = vector.extract_strided_slice %38 {offsets = [0, 256], sizes = [8, 128], strides = [1, 1]} : vector<8x384xf32> to vector<8x128xf32>
    %59 = vector.extract_strided_slice %41 {offsets = [0, 256], sizes = [8, 128], strides = [1, 1]} : vector<8x384xf32> to vector<8x128xf32>
    %60 = arith.addf %59, %14 : vector<8x128xf32>
    %61 = arith.mulf %49, %60 : vector<8x128xf32>
    %62 = arith.addf %58, %61 : vector<8x128xf32>
    %63 = math.tanh %62 : vector<8x128xf32>
    %cst_35 = arith.constant 1.000000e+00 : f32
    %64 = vector.broadcast %cst_35 : f32 to vector<8x128xf32>
    %65 = arith.subf %64, %57 : vector<8x128xf32>
    %66 = arith.mulf %65, %63 : vector<8x128xf32>
    %67 = arith.mulf %57, %33 : vector<8x128xf32>
    %68 = arith.addf %66, %67 : vector<8x128xf32>
    %cst_36 = arith.constant dense<0.000000e+00> : vector<8xf32>
    %69 = vector.multi_reduction <add>, %68, %cst_36 [1] : vector<8x128xf32> to vector<8xf32>
    %70 = vector.shape_cast %69 : vector<8xf32> to vector<8x1xf32>
    %cst_37 = arith.constant 7.812500e-03 : f32
    %71 = vector.broadcast %cst_37 : f32 to vector<8x1xf32>
    %72 = arith.mulf %70, %71 : vector<8x1xf32>
    %73 = arith.mulf %68, %68 : vector<8x128xf32>
    %cst_38 = arith.constant dense<0.000000e+00> : vector<8xf32>
    %74 = vector.multi_reduction <add>, %73, %cst_38 [1] : vector<8x128xf32> to vector<8xf32>
    %75 = vector.shape_cast %74 : vector<8xf32> to vector<8x1xf32>
    %cst_39 = arith.constant 7.812500e-03 : f32
    %76 = vector.broadcast %cst_39 : f32 to vector<8x1xf32>
    %77 = arith.mulf %75, %76 : vector<8x1xf32>
    %78 = arith.mulf %72, %72 : vector<8x1xf32>
    %79 = arith.subf %77, %78 : vector<8x1xf32>
    %cst_40 = arith.constant 0.000000e+00 : f32
    %80 = vector.broadcast %cst_40 : f32 to vector<8x1xf32>
    %81 = arith.maximumf %79, %80 : vector<8x1xf32>
    %82 = vector.broadcast %72 : vector<8x1xf32> to vector<8x128xf32>
    %83 = arith.subf %68, %82 : vector<8x128xf32>
    %cst_41 = arith.constant 9.99999974E-6 : f32
    %84 = vector.broadcast %cst_41 : f32 to vector<8x1xf32>
    %85 = arith.addf %81, %84 : vector<8x1xf32>
    %86 = math.rsqrt %85 : vector<8x1xf32>
    %87 = vector.broadcast %86 : vector<8x1xf32> to vector<8x128xf32>
    %88 = arith.mulf %83, %87 : vector<8x128xf32>
    %89 = arith.mulf %88, %17 : vector<8x128xf32>
    %90 = arith.addf %89, %20 : vector<8x128xf32>
    %91 = arith.truncf %90 : vector<8x128xf32> to vector<8x128xbf16>
    %c0_42 = arith.constant 0 : index
    %c0_43 = arith.constant 0 : index
    %92 = vector.load %arg8[%c0_42, %c0_43] : memref<128x384xbf16, #tpu.memory_space<vmem>>, vector<128x384xbf16>
    %cst_44 = arith.constant dense<0.000000e+00> : vector<8x384xf32>
    %93 = tpu.matmul %91, %92, %cst_44 {dimension_numbers = #tpu.dot_dimension_numbers<[1], [0], [0], [1], [0, 0, 1, 1], [], []>} : vector<8x128xbf16>, vector<128x384xbf16>, vector<8x384xf32> -> vector<8x384xf32>
    %94 = arith.addf %93, %23 : vector<8x384xf32>
    %95 = arith.truncf %34 : vector<8x128xf32> to vector<8x128xbf16>
    %c0_45 = arith.constant 0 : index
    %c0_46 = arith.constant 0 : index
    %96 = vector.load %arg9[%c0_45, %c0_46] : memref<128x384xbf16, #tpu.memory_space<vmem>>, vector<128x384xbf16>
    %cst_47 = arith.constant dense<0.000000e+00> : vector<8x384xf32>
    %97 = tpu.matmul %95, %96, %cst_47 {dimension_numbers = #tpu.dot_dimension_numbers<[1], [0], [0], [1], [0, 0, 1, 1], [], []>} : vector<8x128xbf16>, vector<128x384xbf16>, vector<8x384xf32> -> vector<8x384xf32>
    %98 = vector.extract_strided_slice %94 {offsets = [0, 0], sizes = [8, 128], strides = [1, 1]} : vector<8x384xf32> to vector<8x128xf32>
    %99 = vector.extract_strided_slice %97 {offsets = [0, 0], sizes = [8, 128], strides = [1, 1]} : vector<8x384xf32> to vector<8x128xf32>
    %100 = arith.addf %98, %99 : vector<8x128xf32>
    %101 = arith.negf %100 : vector<8x128xf32>
    %102 = math.exp %101 : vector<8x128xf32>
    %cst_48 = arith.constant 1.000000e+00 : f32
    %103 = vector.broadcast %cst_48 : f32 to vector<8x128xf32>
    %104 = arith.addf %103, %102 : vector<8x128xf32>
    %105 = arith.divf %103, %104 : vector<8x128xf32>
    %106 = vector.extract_strided_slice %94 {offsets = [0, 128], sizes = [8, 128], strides = [1, 1]} : vector<8x384xf32> to vector<8x128xf32>
    %107 = vector.extract_strided_slice %97 {offsets = [0, 128], sizes = [8, 128], strides = [1, 1]} : vector<8x384xf32> to vector<8x128xf32>
    %108 = arith.addf %106, %107 : vector<8x128xf32>
    %109 = arith.negf %108 : vector<8x128xf32>
    %110 = math.exp %109 : vector<8x128xf32>
    %cst_49 = arith.constant 1.000000e+00 : f32
    %111 = vector.broadcast %cst_49 : f32 to vector<8x128xf32>
    %112 = arith.addf %111, %110 : vector<8x128xf32>
    %113 = arith.divf %111, %112 : vector<8x128xf32>
    %114 = vector.extract_strided_slice %94 {offsets = [0, 256], sizes = [8, 128], strides = [1, 1]} : vector<8x384xf32> to vector<8x128xf32>
    %115 = vector.extract_strided_slice %97 {offsets = [0, 256], sizes = [8, 128], strides = [1, 1]} : vector<8x384xf32> to vector<8x128xf32>
    %116 = arith.addf %115, %26 : vector<8x128xf32>
    %117 = arith.mulf %105, %116 : vector<8x128xf32>
    %118 = arith.addf %114, %117 : vector<8x128xf32>
    %119 = math.tanh %118 : vector<8x128xf32>
    %cst_50 = arith.constant 1.000000e+00 : f32
    %120 = vector.broadcast %cst_50 : f32 to vector<8x128xf32>
    %121 = arith.subf %120, %113 : vector<8x128xf32>
    %122 = arith.mulf %121, %119 : vector<8x128xf32>
    %123 = arith.mulf %113, %34 : vector<8x128xf32>
    %124 = arith.addf %122, %123 : vector<8x128xf32>
    %cst_51 = arith.constant dense<0.000000e+00> : vector<8xf32>
    %125 = vector.multi_reduction <add>, %124, %cst_51 [1] : vector<8x128xf32> to vector<8xf32>
    %126 = vector.shape_cast %125 : vector<8xf32> to vector<8x1xf32>
    %cst_52 = arith.constant 1.562500e-02 : f32
    %127 = vector.broadcast %cst_52 : f32 to vector<8x1xf32>
    %128 = arith.mulf %126, %127 : vector<8x1xf32>
    %129 = arith.mulf %124, %124 : vector<8x128xf32>
    %cst_53 = arith.constant dense<0.000000e+00> : vector<8xf32>
    %130 = vector.multi_reduction <add>, %129, %cst_53 [1] : vector<8x128xf32> to vector<8xf32>
    %131 = vector.shape_cast %130 : vector<8xf32> to vector<8x1xf32>
    %cst_54 = arith.constant 1.562500e-02 : f32
    %132 = vector.broadcast %cst_54 : f32 to vector<8x1xf32>
    %133 = arith.mulf %131, %132 : vector<8x1xf32>
    %134 = arith.mulf %128, %128 : vector<8x1xf32>
    %135 = arith.subf %133, %134 : vector<8x1xf32>
    %cst_55 = arith.constant 0.000000e+00 : f32
    %136 = vector.broadcast %cst_55 : f32 to vector<8x1xf32>
    %137 = arith.maximumf %135, %136 : vector<8x1xf32>
    %138 = vector.broadcast %128 : vector<8x1xf32> to vector<8x128xf32>
    %139 = arith.subf %124, %138 : vector<8x128xf32>
    %cst_56 = arith.constant 9.99999974E-6 : f32
    %140 = vector.broadcast %cst_56 : f32 to vector<8x1xf32>
    %141 = arith.addf %137, %140 : vector<8x1xf32>
    %142 = math.rsqrt %141 : vector<8x1xf32>
    %143 = vector.broadcast %142 : vector<8x1xf32> to vector<8x128xf32>
    %144 = arith.mulf %139, %143 : vector<8x128xf32>
    %145 = arith.mulf %144, %29 : vector<8x128xf32>
    %146 = arith.addf %145, %32 : vector<8x128xf32>
    %c1_i32 = arith.constant 1 : i32
    %147 = arith.index_cast %c1_i32 : i32 to index
    %c0_57 = arith.constant 0 : index
    %c0_58 = arith.constant 0 : index
    %148 = vector.load %arg17[%147, %c0_57, %c0_58] : memref<8x8x384xbf16, #tpu.memory_space<vmem>>, vector<1x8x384xbf16>
    %149 = vector.shape_cast %148 : vector<1x8x384xbf16> to vector<8x384xbf16>
    %150 = arith.extf %149 : vector<8x384xbf16> to vector<8x384xf32>
    %151 = arith.truncf %90 : vector<8x128xf32> to vector<8x128xbf16>
    %c0_59 = arith.constant 0 : index
    %c0_60 = arith.constant 0 : index
    %152 = vector.load %arg3[%c0_59, %c0_60] : memref<128x384xbf16, #tpu.memory_space<vmem>>, vector<128x384xbf16>
    %cst_61 = arith.constant dense<0.000000e+00> : vector<8x384xf32>
    %153 = tpu.matmul %151, %152, %cst_61 {dimension_numbers = #tpu.dot_dimension_numbers<[1], [0], [0], [1], [0, 0, 1, 1], [], []>} : vector<8x128xbf16>, vector<128x384xbf16>, vector<8x384xf32> -> vector<8x384xf32>
    %154 = vector.extract_strided_slice %150 {offsets = [0, 0], sizes = [8, 128], strides = [1, 1]} : vector<8x384xf32> to vector<8x128xf32>
    %155 = vector.extract_strided_slice %153 {offsets = [0, 0], sizes = [8, 128], strides = [1, 1]} : vector<8x384xf32> to vector<8x128xf32>
    %156 = arith.addf %154, %155 : vector<8x128xf32>
    %157 = arith.negf %156 : vector<8x128xf32>
    %158 = math.exp %157 : vector<8x128xf32>
    %cst_62 = arith.constant 1.000000e+00 : f32
    %159 = vector.broadcast %cst_62 : f32 to vector<8x128xf32>
    %160 = arith.addf %159, %158 : vector<8x128xf32>
    %161 = arith.divf %159, %160 : vector<8x128xf32>
    %162 = vector.extract_strided_slice %150 {offsets = [0, 128], sizes = [8, 128], strides = [1, 1]} : vector<8x384xf32> to vector<8x128xf32>
    %163 = vector.extract_strided_slice %153 {offsets = [0, 128], sizes = [8, 128], strides = [1, 1]} : vector<8x384xf32> to vector<8x128xf32>
    %164 = arith.addf %162, %163 : vector<8x128xf32>
    %165 = arith.negf %164 : vector<8x128xf32>
    %166 = math.exp %165 : vector<8x128xf32>
    %cst_63 = arith.constant 1.000000e+00 : f32
    %167 = vector.broadcast %cst_63 : f32 to vector<8x128xf32>
    %168 = arith.addf %167, %166 : vector<8x128xf32>
    %169 = arith.divf %167, %168 : vector<8x128xf32>
    %170 = vector.extract_strided_slice %150 {offsets = [0, 256], sizes = [8, 128], strides = [1, 1]} : vector<8x384xf32> to vector<8x128xf32>
    %171 = vector.extract_strided_slice %153 {offsets = [0, 256], sizes = [8, 128], strides = [1, 1]} : vector<8x384xf32> to vector<8x128xf32>
    %172 = arith.addf %171, %14 : vector<8x128xf32>
    %173 = arith.mulf %161, %172 : vector<8x128xf32>
    %174 = arith.addf %170, %173 : vector<8x128xf32>
    %175 = math.tanh %174 : vector<8x128xf32>
    %cst_64 = arith.constant 1.000000e+00 : f32
    %176 = vector.broadcast %cst_64 : f32 to vector<8x128xf32>
    %177 = arith.subf %176, %169 : vector<8x128xf32>
    %178 = arith.mulf %177, %175 : vector<8x128xf32>
    %179 = arith.mulf %169, %90 : vector<8x128xf32>
    %180 = arith.addf %178, %179 : vector<8x128xf32>
    %cst_65 = arith.constant dense<0.000000e+00> : vector<8xf32>
    %181 = vector.multi_reduction <add>, %180, %cst_65 [1] : vector<8x128xf32> to vector<8xf32>
    %182 = vector.shape_cast %181 : vector<8xf32> to vector<8x1xf32>
    %cst_66 = arith.constant 7.812500e-03 : f32
    %183 = vector.broadcast %cst_66 : f32 to vector<8x1xf32>
    %184 = arith.mulf %182, %183 : vector<8x1xf32>
    %185 = arith.mulf %180, %180 : vector<8x128xf32>
    %cst_67 = arith.constant dense<0.000000e+00> : vector<8xf32>
    %186 = vector.multi_reduction <add>, %185, %cst_67 [1] : vector<8x128xf32> to vector<8xf32>
    %187 = vector.shape_cast %186 : vector<8xf32> to vector<8x1xf32>
    %cst_68 = arith.constant 7.812500e-03 : f32
    %188 = vector.broadcast %cst_68 : f32 to vector<8x1xf32>
    %189 = arith.mulf %187, %188 : vector<8x1xf32>
    %190 = arith.mulf %184, %184 : vector<8x1xf32>
    %191 = arith.subf %189, %190 : vector<8x1xf32>
    %cst_69 = arith.constant 0.000000e+00 : f32
    %192 = vector.broadcast %cst_69 : f32 to vector<8x1xf32>
    %193 = arith.maximumf %191, %192 : vector<8x1xf32>
    %194 = vector.broadcast %184 : vector<8x1xf32> to vector<8x128xf32>
    %195 = arith.subf %180, %194 : vector<8x128xf32>
    %cst_70 = arith.constant 9.99999974E-6 : f32
    %196 = vector.broadcast %cst_70 : f32 to vector<8x1xf32>
    %197 = arith.addf %193, %196 : vector<8x1xf32>
    %198 = math.rsqrt %197 : vector<8x1xf32>
    %199 = vector.broadcast %198 : vector<8x1xf32> to vector<8x128xf32>
    %200 = arith.mulf %195, %199 : vector<8x128xf32>
    %201 = arith.mulf %200, %17 : vector<8x128xf32>
    %202 = arith.addf %201, %20 : vector<8x128xf32>
    %203 = arith.truncf %202 : vector<8x128xf32> to vector<8x128xbf16>
    %c0_71 = arith.constant 0 : index
    %c0_72 = arith.constant 0 : index
    %204 = vector.load %arg8[%c0_71, %c0_72] : memref<128x384xbf16, #tpu.memory_space<vmem>>, vector<128x384xbf16>
    %cst_73 = arith.constant dense<0.000000e+00> : vector<8x384xf32>
    %205 = tpu.matmul %203, %204, %cst_73 {dimension_numbers = #tpu.dot_dimension_numbers<[1], [0], [0], [1], [0, 0, 1, 1], [], []>} : vector<8x128xbf16>, vector<128x384xbf16>, vector<8x384xf32> -> vector<8x384xf32>
    %206 = arith.addf %205, %23 : vector<8x384xf32>
    %207 = arith.truncf %146 : vector<8x128xf32> to vector<8x128xbf16>
    %c0_74 = arith.constant 0 : index
    %c0_75 = arith.constant 0 : index
    %208 = vector.load %arg9[%c0_74, %c0_75] : memref<128x384xbf16, #tpu.memory_space<vmem>>, vector<128x384xbf16>
    %cst_76 = arith.constant dense<0.000000e+00> : vector<8x384xf32>
    %209 = tpu.matmul %207, %208, %cst_76 {dimension_numbers = #tpu.dot_dimension_numbers<[1], [0], [0], [1], [0, 0, 1, 1], [], []>} : vector<8x128xbf16>, vector<128x384xbf16>, vector<8x384xf32> -> vector<8x384xf32>
    %210 = vector.extract_strided_slice %206 {offsets = [0, 0], sizes = [8, 128], strides = [1, 1]} : vector<8x384xf32> to vector<8x128xf32>
    %211 = vector.extract_strided_slice %209 {offsets = [0, 0], sizes = [8, 128], strides = [1, 1]} : vector<8x384xf32> to vector<8x128xf32>
    %212 = arith.addf %210, %211 : vector<8x128xf32>
    %213 = arith.negf %212 : vector<8x128xf32>
    %214 = math.exp %213 : vector<8x128xf32>
    %cst_77 = arith.constant 1.000000e+00 : f32
    %215 = vector.broadcast %cst_77 : f32 to vector<8x128xf32>
    %216 = arith.addf %215, %214 : vector<8x128xf32>
    %217 = arith.divf %215, %216 : vector<8x128xf32>
    %218 = vector.extract_strided_slice %206 {offsets = [0, 128], sizes = [8, 128], strides = [1, 1]} : vector<8x384xf32> to vector<8x128xf32>
    %219 = vector.extract_strided_slice %209 {offsets = [0, 128], sizes = [8, 128], strides = [1, 1]} : vector<8x384xf32> to vector<8x128xf32>
    %220 = arith.addf %218, %219 : vector<8x128xf32>
    %221 = arith.negf %220 : vector<8x128xf32>
    %222 = math.exp %221 : vector<8x128xf32>
    %cst_78 = arith.constant 1.000000e+00 : f32
    %223 = vector.broadcast %cst_78 : f32 to vector<8x128xf32>
    %224 = arith.addf %223, %222 : vector<8x128xf32>
    %225 = arith.divf %223, %224 : vector<8x128xf32>
    %226 = vector.extract_strided_slice %206 {offsets = [0, 256], sizes = [8, 128], strides = [1, 1]} : vector<8x384xf32> to vector<8x128xf32>
    %227 = vector.extract_strided_slice %209 {offsets = [0, 256], sizes = [8, 128], strides = [1, 1]} : vector<8x384xf32> to vector<8x128xf32>
    %228 = arith.addf %227, %26 : vector<8x128xf32>
    %229 = arith.mulf %217, %228 : vector<8x128xf32>
    %230 = arith.addf %226, %229 : vector<8x128xf32>
    %231 = math.tanh %230 : vector<8x128xf32>
    %cst_79 = arith.constant 1.000000e+00 : f32
    %232 = vector.broadcast %cst_79 : f32 to vector<8x128xf32>
    %233 = arith.subf %232, %225 : vector<8x128xf32>
    %234 = arith.mulf %233, %231 : vector<8x128xf32>
    %235 = arith.mulf %225, %146 : vector<8x128xf32>
    %236 = arith.addf %234, %235 : vector<8x128xf32>
    %cst_80 = arith.constant dense<0.000000e+00> : vector<8xf32>
    %237 = vector.multi_reduction <add>, %236, %cst_80 [1] : vector<8x128xf32> to vector<8xf32>
    %238 = vector.shape_cast %237 : vector<8xf32> to vector<8x1xf32>
    %cst_81 = arith.constant 1.562500e-02 : f32
    %239 = vector.broadcast %cst_81 : f32 to vector<8x1xf32>
    %240 = arith.mulf %238, %239 : vector<8x1xf32>
    %241 = arith.mulf %236, %236 : vector<8x128xf32>
    %cst_82 = arith.constant dense<0.000000e+00> : vector<8xf32>
    %242 = vector.multi_reduction <add>, %241, %cst_82 [1] : vector<8x128xf32> to vector<8xf32>
    %243 = vector.shape_cast %242 : vector<8xf32> to vector<8x1xf32>
    %cst_83 = arith.constant 1.562500e-02 : f32
    %244 = vector.broadcast %cst_83 : f32 to vector<8x1xf32>
    %245 = arith.mulf %243, %244 : vector<8x1xf32>
    %246 = arith.mulf %240, %240 : vector<8x1xf32>
    %247 = arith.subf %245, %246 : vector<8x1xf32>
    %cst_84 = arith.constant 0.000000e+00 : f32
    %248 = vector.broadcast %cst_84 : f32 to vector<8x1xf32>
    %249 = arith.maximumf %247, %248 : vector<8x1xf32>
    %250 = vector.broadcast %240 : vector<8x1xf32> to vector<8x128xf32>
    %251 = arith.subf %236, %250 : vector<8x128xf32>
    %cst_85 = arith.constant 9.99999974E-6 : f32
    %252 = vector.broadcast %cst_85 : f32 to vector<8x1xf32>
    %253 = arith.addf %249, %252 : vector<8x1xf32>
    %254 = math.rsqrt %253 : vector<8x1xf32>
    %255 = vector.broadcast %254 : vector<8x1xf32> to vector<8x128xf32>
    %256 = arith.mulf %251, %255 : vector<8x128xf32>
    %257 = arith.mulf %256, %29 : vector<8x128xf32>
    %258 = arith.addf %257, %32 : vector<8x128xf32>
    %c2_i32 = arith.constant 2 : i32
    %259 = arith.index_cast %c2_i32 : i32 to index
    %c0_86 = arith.constant 0 : index
    %c0_87 = arith.constant 0 : index
    %260 = vector.load %arg17[%259, %c0_86, %c0_87] : memref<8x8x384xbf16, #tpu.memory_space<vmem>>, vector<1x8x384xbf16>
    %261 = vector.shape_cast %260 : vector<1x8x384xbf16> to vector<8x384xbf16>
    %262 = arith.extf %261 : vector<8x384xbf16> to vector<8x384xf32>
    %263 = arith.truncf %202 : vector<8x128xf32> to vector<8x128xbf16>
    %c0_88 = arith.constant 0 : index
    %c0_89 = arith.constant 0 : index
    %264 = vector.load %arg3[%c0_88, %c0_89] : memref<128x384xbf16, #tpu.memory_space<vmem>>, vector<128x384xbf16>
    %cst_90 = arith.constant dense<0.000000e+00> : vector<8x384xf32>
    %265 = tpu.matmul %263, %264, %cst_90 {dimension_numbers = #tpu.dot_dimension_numbers<[1], [0], [0], [1], [0, 0, 1, 1], [], []>} : vector<8x128xbf16>, vector<128x384xbf16>, vector<8x384xf32> -> vector<8x384xf32>
    %266 = vector.extract_strided_slice %262 {offsets = [0, 0], sizes = [8, 128], strides = [1, 1]} : vector<8x384xf32> to vector<8x128xf32>
    %267 = vector.extract_strided_slice %265 {offsets = [0, 0], sizes = [8, 128], strides = [1, 1]} : vector<8x384xf32> to vector<8x128xf32>
    %268 = arith.addf %266, %267 : vector<8x128xf32>
    %269 = arith.negf %268 : vector<8x128xf32>
    %270 = math.exp %269 : vector<8x128xf32>
    %cst_91 = arith.constant 1.000000e+00 : f32
    %271 = vector.broadcast %cst_91 : f32 to vector<8x128xf32>
    %272 = arith.addf %271, %270 : vector<8x128xf32>
    %273 = arith.divf %271, %272 : vector<8x128xf32>
    %274 = vector.extract_strided_slice %262 {offsets = [0, 128], sizes = [8, 128], strides = [1, 1]} : vector<8x384xf32> to vector<8x128xf32>
    %275 = vector.extract_strided_slice %265 {offsets = [0, 128], sizes = [8, 128], strides = [1, 1]} : vector<8x384xf32> to vector<8x128xf32>
    %276 = arith.addf %274, %275 : vector<8x128xf32>
    %277 = arith.negf %276 : vector<8x128xf32>
    %278 = math.exp %277 : vector<8x128xf32>
    %cst_92 = arith.constant 1.000000e+00 : f32
    %279 = vector.broadcast %cst_92 : f32 to vector<8x128xf32>
    %280 = arith.addf %279, %278 : vector<8x128xf32>
    %281 = arith.divf %279, %280 : vector<8x128xf32>
    %282 = vector.extract_strided_slice %262 {offsets = [0, 256], sizes = [8, 128], strides = [1, 1]} : vector<8x384xf32> to vector<8x128xf32>
    %283 = vector.extract_strided_slice %265 {offsets = [0, 256], sizes = [8, 128], strides = [1, 1]} : vector<8x384xf32> to vector<8x128xf32>
    %284 = arith.addf %283, %14 : vector<8x128xf32>
    %285 = arith.mulf %273, %284 : vector<8x128xf32>
    %286 = arith.addf %282, %285 : vector<8x128xf32>
    %287 = math.tanh %286 : vector<8x128xf32>
    %cst_93 = arith.constant 1.000000e+00 : f32
    %288 = vector.broadcast %cst_93 : f32 to vector<8x128xf32>
    %289 = arith.subf %288, %281 : vector<8x128xf32>
    %290 = arith.mulf %289, %287 : vector<8x128xf32>
    %291 = arith.mulf %281, %202 : vector<8x128xf32>
    %292 = arith.addf %290, %291 : vector<8x128xf32>
    %cst_94 = arith.constant dense<0.000000e+00> : vector<8xf32>
    %293 = vector.multi_reduction <add>, %292, %cst_94 [1] : vector<8x128xf32> to vector<8xf32>
    %294 = vector.shape_cast %293 : vector<8xf32> to vector<8x1xf32>
    %cst_95 = arith.constant 7.812500e-03 : f32
    %295 = vector.broadcast %cst_95 : f32 to vector<8x1xf32>
    %296 = arith.mulf %294, %295 : vector<8x1xf32>
    %297 = arith.mulf %292, %292 : vector<8x128xf32>
    %cst_96 = arith.constant dense<0.000000e+00> : vector<8xf32>
    %298 = vector.multi_reduction <add>, %297, %cst_96 [1] : vector<8x128xf32> to vector<8xf32>
    %299 = vector.shape_cast %298 : vector<8xf32> to vector<8x1xf32>
    %cst_97 = arith.constant 7.812500e-03 : f32
    %300 = vector.broadcast %cst_97 : f32 to vector<8x1xf32>
    %301 = arith.mulf %299, %300 : vector<8x1xf32>
    %302 = arith.mulf %296, %296 : vector<8x1xf32>
    %303 = arith.subf %301, %302 : vector<8x1xf32>
    %cst_98 = arith.constant 0.000000e+00 : f32
    %304 = vector.broadcast %cst_98 : f32 to vector<8x1xf32>
    %305 = arith.maximumf %303, %304 : vector<8x1xf32>
    %306 = vector.broadcast %296 : vector<8x1xf32> to vector<8x128xf32>
    %307 = arith.subf %292, %306 : vector<8x128xf32>
    %cst_99 = arith.constant 9.99999974E-6 : f32
    %308 = vector.broadcast %cst_99 : f32 to vector<8x1xf32>
    %309 = arith.addf %305, %308 : vector<8x1xf32>
    %310 = math.rsqrt %309 : vector<8x1xf32>
    %311 = vector.broadcast %310 : vector<8x1xf32> to vector<8x128xf32>
    %312 = arith.mulf %307, %311 : vector<8x128xf32>
    %313 = arith.mulf %312, %17 : vector<8x128xf32>
    %314 = arith.addf %313, %20 : vector<8x128xf32>
    %315 = arith.truncf %314 : vector<8x128xf32> to vector<8x128xbf16>
    %c0_100 = arith.constant 0 : index
    %c0_101 = arith.constant 0 : index
    %316 = vector.load %arg8[%c0_100, %c0_101] : memref<128x384xbf16, #tpu.memory_space<vmem>>, vector<128x384xbf16>
    %cst_102 = arith.constant dense<0.000000e+00> : vector<8x384xf32>
    %317 = tpu.matmul %315, %316, %cst_102 {dimension_numbers = #tpu.dot_dimension_numbers<[1], [0], [0], [1], [0, 0, 1, 1], [], []>} : vector<8x128xbf16>, vector<128x384xbf16>, vector<8x384xf32> -> vector<8x384xf32>
    %318 = arith.addf %317, %23 : vector<8x384xf32>
    %319 = arith.truncf %258 : vector<8x128xf32> to vector<8x128xbf16>
    %c0_103 = arith.constant 0 : index
    %c0_104 = arith.constant 0 : index
    %320 = vector.load %arg9[%c0_103, %c0_104] : memref<128x384xbf16, #tpu.memory_space<vmem>>, vector<128x384xbf16>
    %cst_105 = arith.constant dense<0.000000e+00> : vector<8x384xf32>
    %321 = tpu.matmul %319, %320, %cst_105 {dimension_numbers = #tpu.dot_dimension_numbers<[1], [0], [0], [1], [0, 0, 1, 1], [], []>} : vector<8x128xbf16>, vector<128x384xbf16>, vector<8x384xf32> -> vector<8x384xf32>
    %322 = vector.extract_strided_slice %318 {offsets = [0, 0], sizes = [8, 128], strides = [1, 1]} : vector<8x384xf32> to vector<8x128xf32>
    %323 = vector.extract_strided_slice %321 {offsets = [0, 0], sizes = [8, 128], strides = [1, 1]} : vector<8x384xf32> to vector<8x128xf32>
    %324 = arith.addf %322, %323 : vector<8x128xf32>
    %325 = arith.negf %324 : vector<8x128xf32>
    %326 = math.exp %325 : vector<8x128xf32>
    %cst_106 = arith.constant 1.000000e+00 : f32
    %327 = vector.broadcast %cst_106 : f32 to vector<8x128xf32>
    %328 = arith.addf %327, %326 : vector<8x128xf32>
    %329 = arith.divf %327, %328 : vector<8x128xf32>
    %330 = vector.extract_strided_slice %318 {offsets = [0, 128], sizes = [8, 128], strides = [1, 1]} : vector<8x384xf32> to vector<8x128xf32>
    %331 = vector.extract_strided_slice %321 {offsets = [0, 128], sizes = [8, 128], strides = [1, 1]} : vector<8x384xf32> to vector<8x128xf32>
    %332 = arith.addf %330, %331 : vector<8x128xf32>
    %333 = arith.negf %332 : vector<8x128xf32>
    %334 = math.exp %333 : vector<8x128xf32>
    %cst_107 = arith.constant 1.000000e+00 : f32
    %335 = vector.broadcast %cst_107 : f32 to vector<8x128xf32>
    %336 = arith.addf %335, %334 : vector<8x128xf32>
    %337 = arith.divf %335, %336 : vector<8x128xf32>
    %338 = vector.extract_strided_slice %318 {offsets = [0, 256], sizes = [8, 128], strides = [1, 1]} : vector<8x384xf32> to vector<8x128xf32>
    %339 = vector.extract_strided_slice %321 {offsets = [0, 256], sizes = [8, 128], strides = [1, 1]} : vector<8x384xf32> to vector<8x128xf32>
    %340 = arith.addf %339, %26 : vector<8x128xf32>
    %341 = arith.mulf %329, %340 : vector<8x128xf32>
    %342 = arith.addf %338, %341 : vector<8x128xf32>
    %343 = math.tanh %342 : vector<8x128xf32>
    %cst_108 = arith.constant 1.000000e+00 : f32
    %344 = vector.broadcast %cst_108 : f32 to vector<8x128xf32>
    %345 = arith.subf %344, %337 : vector<8x128xf32>
    %346 = arith.mulf %345, %343 : vector<8x128xf32>
    %347 = arith.mulf %337, %258 : vector<8x128xf32>
    %348 = arith.addf %346, %347 : vector<8x128xf32>
    %cst_109 = arith.constant dense<0.000000e+00> : vector<8xf32>
    %349 = vector.multi_reduction <add>, %348, %cst_109 [1] : vector<8x128xf32> to vector<8xf32>
    %350 = vector.shape_cast %349 : vector<8xf32> to vector<8x1xf32>
    %cst_110 = arith.constant 1.562500e-02 : f32
    %351 = vector.broadcast %cst_110 : f32 to vector<8x1xf32>
    %352 = arith.mulf %350, %351 : vector<8x1xf32>
    %353 = arith.mulf %348, %348 : vector<8x128xf32>
    %cst_111 = arith.constant dense<0.000000e+00> : vector<8xf32>
    %354 = vector.multi_reduction <add>, %353, %cst_111 [1] : vector<8x128xf32> to vector<8xf32>
    %355 = vector.shape_cast %354 : vector<8xf32> to vector<8x1xf32>
    %cst_112 = arith.constant 1.562500e-02 : f32
    %356 = vector.broadcast %cst_112 : f32 to vector<8x1xf32>
    %357 = arith.mulf %355, %356 : vector<8x1xf32>
    %358 = arith.mulf %352, %352 : vector<8x1xf32>
    %359 = arith.subf %357, %358 : vector<8x1xf32>
    %cst_113 = arith.constant 0.000000e+00 : f32
    %360 = vector.broadcast %cst_113 : f32 to vector<8x1xf32>
    %361 = arith.maximumf %359, %360 : vector<8x1xf32>
    %362 = vector.broadcast %352 : vector<8x1xf32> to vector<8x128xf32>
    %363 = arith.subf %348, %362 : vector<8x128xf32>
    %cst_114 = arith.constant 9.99999974E-6 : f32
    %364 = vector.broadcast %cst_114 : f32 to vector<8x1xf32>
    %365 = arith.addf %361, %364 : vector<8x1xf32>
    %366 = math.rsqrt %365 : vector<8x1xf32>
    %367 = vector.broadcast %366 : vector<8x1xf32> to vector<8x128xf32>
    %368 = arith.mulf %363, %367 : vector<8x128xf32>
    %369 = arith.mulf %368, %29 : vector<8x128xf32>
    %370 = arith.addf %369, %32 : vector<8x128xf32>
    %c3_i32 = arith.constant 3 : i32
    %371 = arith.index_cast %c3_i32 : i32 to index
    %c0_115 = arith.constant 0 : index
    %c0_116 = arith.constant 0 : index
    %372 = vector.load %arg17[%371, %c0_115, %c0_116] : memref<8x8x384xbf16, #tpu.memory_space<vmem>>, vector<1x8x384xbf16>
    %373 = vector.shape_cast %372 : vector<1x8x384xbf16> to vector<8x384xbf16>
    %374 = arith.extf %373 : vector<8x384xbf16> to vector<8x384xf32>
    %375 = arith.truncf %314 : vector<8x128xf32> to vector<8x128xbf16>
    %c0_117 = arith.constant 0 : index
    %c0_118 = arith.constant 0 : index
    %376 = vector.load %arg3[%c0_117, %c0_118] : memref<128x384xbf16, #tpu.memory_space<vmem>>, vector<128x384xbf16>
    %cst_119 = arith.constant dense<0.000000e+00> : vector<8x384xf32>
    %377 = tpu.matmul %375, %376, %cst_119 {dimension_numbers = #tpu.dot_dimension_numbers<[1], [0], [0], [1], [0, 0, 1, 1], [], []>} : vector<8x128xbf16>, vector<128x384xbf16>, vector<8x384xf32> -> vector<8x384xf32>
    %378 = vector.extract_strided_slice %374 {offsets = [0, 0], sizes = [8, 128], strides = [1, 1]} : vector<8x384xf32> to vector<8x128xf32>
    %379 = vector.extract_strided_slice %377 {offsets = [0, 0], sizes = [8, 128], strides = [1, 1]} : vector<8x384xf32> to vector<8x128xf32>
    %380 = arith.addf %378, %379 : vector<8x128xf32>
    %381 = arith.negf %380 : vector<8x128xf32>
    %382 = math.exp %381 : vector<8x128xf32>
    %cst_120 = arith.constant 1.000000e+00 : f32
    %383 = vector.broadcast %cst_120 : f32 to vector<8x128xf32>
    %384 = arith.addf %383, %382 : vector<8x128xf32>
    %385 = arith.divf %383, %384 : vector<8x128xf32>
    %386 = vector.extract_strided_slice %374 {offsets = [0, 128], sizes = [8, 128], strides = [1, 1]} : vector<8x384xf32> to vector<8x128xf32>
    %387 = vector.extract_strided_slice %377 {offsets = [0, 128], sizes = [8, 128], strides = [1, 1]} : vector<8x384xf32> to vector<8x128xf32>
    %388 = arith.addf %386, %387 : vector<8x128xf32>
    %389 = arith.negf %388 : vector<8x128xf32>
    %390 = math.exp %389 : vector<8x128xf32>
    %cst_121 = arith.constant 1.000000e+00 : f32
    %391 = vector.broadcast %cst_121 : f32 to vector<8x128xf32>
    %392 = arith.addf %391, %390 : vector<8x128xf32>
    %393 = arith.divf %391, %392 : vector<8x128xf32>
    %394 = vector.extract_strided_slice %374 {offsets = [0, 256], sizes = [8, 128], strides = [1, 1]} : vector<8x384xf32> to vector<8x128xf32>
    %395 = vector.extract_strided_slice %377 {offsets = [0, 256], sizes = [8, 128], strides = [1, 1]} : vector<8x384xf32> to vector<8x128xf32>
    %396 = arith.addf %395, %14 : vector<8x128xf32>
    %397 = arith.mulf %385, %396 : vector<8x128xf32>
    %398 = arith.addf %394, %397 : vector<8x128xf32>
    %399 = math.tanh %398 : vector<8x128xf32>
    %cst_122 = arith.constant 1.000000e+00 : f32
    %400 = vector.broadcast %cst_122 : f32 to vector<8x128xf32>
    %401 = arith.subf %400, %393 : vector<8x128xf32>
    %402 = arith.mulf %401, %399 : vector<8x128xf32>
    %403 = arith.mulf %393, %314 : vector<8x128xf32>
    %404 = arith.addf %402, %403 : vector<8x128xf32>
    %cst_123 = arith.constant dense<0.000000e+00> : vector<8xf32>
    %405 = vector.multi_reduction <add>, %404, %cst_123 [1] : vector<8x128xf32> to vector<8xf32>
    %406 = vector.shape_cast %405 : vector<8xf32> to vector<8x1xf32>
    %cst_124 = arith.constant 7.812500e-03 : f32
    %407 = vector.broadcast %cst_124 : f32 to vector<8x1xf32>
    %408 = arith.mulf %406, %407 : vector<8x1xf32>
    %409 = arith.mulf %404, %404 : vector<8x128xf32>
    %cst_125 = arith.constant dense<0.000000e+00> : vector<8xf32>
    %410 = vector.multi_reduction <add>, %409, %cst_125 [1] : vector<8x128xf32> to vector<8xf32>
    %411 = vector.shape_cast %410 : vector<8xf32> to vector<8x1xf32>
    %cst_126 = arith.constant 7.812500e-03 : f32
    %412 = vector.broadcast %cst_126 : f32 to vector<8x1xf32>
    %413 = arith.mulf %411, %412 : vector<8x1xf32>
    %414 = arith.mulf %408, %408 : vector<8x1xf32>
    %415 = arith.subf %413, %414 : vector<8x1xf32>
    %cst_127 = arith.constant 0.000000e+00 : f32
    %416 = vector.broadcast %cst_127 : f32 to vector<8x1xf32>
    %417 = arith.maximumf %415, %416 : vector<8x1xf32>
    %418 = vector.broadcast %408 : vector<8x1xf32> to vector<8x128xf32>
    %419 = arith.subf %404, %418 : vector<8x128xf32>
    %cst_128 = arith.constant 9.99999974E-6 : f32
    %420 = vector.broadcast %cst_128 : f32 to vector<8x1xf32>
    %421 = arith.addf %417, %420 : vector<8x1xf32>
    %422 = math.rsqrt %421 : vector<8x1xf32>
    %423 = vector.broadcast %422 : vector<8x1xf32> to vector<8x128xf32>
    %424 = arith.mulf %419, %423 : vector<8x128xf32>
    %425 = arith.mulf %424, %17 : vector<8x128xf32>
    %426 = arith.addf %425, %20 : vector<8x128xf32>
    %427 = arith.truncf %426 : vector<8x128xf32> to vector<8x128xbf16>
    %c0_129 = arith.constant 0 : index
    %c0_130 = arith.constant 0 : index
    %428 = vector.load %arg8[%c0_129, %c0_130] : memref<128x384xbf16, #tpu.memory_space<vmem>>, vector<128x384xbf16>
    %cst_131 = arith.constant dense<0.000000e+00> : vector<8x384xf32>
    %429 = tpu.matmul %427, %428, %cst_131 {dimension_numbers = #tpu.dot_dimension_numbers<[1], [0], [0], [1], [0, 0, 1, 1], [], []>} : vector<8x128xbf16>, vector<128x384xbf16>, vector<8x384xf32> -> vector<8x384xf32>
    %430 = arith.addf %429, %23 : vector<8x384xf32>
    %431 = arith.truncf %370 : vector<8x128xf32> to vector<8x128xbf16>
    %c0_132 = arith.constant 0 : index
    %c0_133 = arith.constant 0 : index
    %432 = vector.load %arg9[%c0_132, %c0_133] : memref<128x384xbf16, #tpu.memory_space<vmem>>, vector<128x384xbf16>
    %cst_134 = arith.constant dense<0.000000e+00> : vector<8x384xf32>
    %433 = tpu.matmul %431, %432, %cst_134 {dimension_numbers = #tpu.dot_dimension_numbers<[1], [0], [0], [1], [0, 0, 1, 1], [], []>} : vector<8x128xbf16>, vector<128x384xbf16>, vector<8x384xf32> -> vector<8x384xf32>
    %434 = vector.extract_strided_slice %430 {offsets = [0, 0], sizes = [8, 128], strides = [1, 1]} : vector<8x384xf32> to vector<8x128xf32>
    %435 = vector.extract_strided_slice %433 {offsets = [0, 0], sizes = [8, 128], strides = [1, 1]} : vector<8x384xf32> to vector<8x128xf32>
    %436 = arith.addf %434, %435 : vector<8x128xf32>
    %437 = arith.negf %436 : vector<8x128xf32>
    %438 = math.exp %437 : vector<8x128xf32>
    %cst_135 = arith.constant 1.000000e+00 : f32
    %439 = vector.broadcast %cst_135 : f32 to vector<8x128xf32>
    %440 = arith.addf %439, %438 : vector<8x128xf32>
    %441 = arith.divf %439, %440 : vector<8x128xf32>
    %442 = vector.extract_strided_slice %430 {offsets = [0, 128], sizes = [8, 128], strides = [1, 1]} : vector<8x384xf32> to vector<8x128xf32>
    %443 = vector.extract_strided_slice %433 {offsets = [0, 128], sizes = [8, 128], strides = [1, 1]} : vector<8x384xf32> to vector<8x128xf32>
    %444 = arith.addf %442, %443 : vector<8x128xf32>
    %445 = arith.negf %444 : vector<8x128xf32>
    %446 = math.exp %445 : vector<8x128xf32>
    %cst_136 = arith.constant 1.000000e+00 : f32
    %447 = vector.broadcast %cst_136 : f32 to vector<8x128xf32>
    %448 = arith.addf %447, %446 : vector<8x128xf32>
    %449 = arith.divf %447, %448 : vector<8x128xf32>
    %450 = vector.extract_strided_slice %430 {offsets = [0, 256], sizes = [8, 128], strides = [1, 1]} : vector<8x384xf32> to vector<8x128xf32>
    %451 = vector.extract_strided_slice %433 {offsets = [0, 256], sizes = [8, 128], strides = [1, 1]} : vector<8x384xf32> to vector<8x128xf32>
    %452 = arith.addf %451, %26 : vector<8x128xf32>
    %453 = arith.mulf %441, %452 : vector<8x128xf32>
    %454 = arith.addf %450, %453 : vector<8x128xf32>
    %455 = math.tanh %454 : vector<8x128xf32>
    %cst_137 = arith.constant 1.000000e+00 : f32
    %456 = vector.broadcast %cst_137 : f32 to vector<8x128xf32>
    %457 = arith.subf %456, %449 : vector<8x128xf32>
    %458 = arith.mulf %457, %455 : vector<8x128xf32>
    %459 = arith.mulf %449, %370 : vector<8x128xf32>
    %460 = arith.addf %458, %459 : vector<8x128xf32>
    %cst_138 = arith.constant dense<0.000000e+00> : vector<8xf32>
    %461 = vector.multi_reduction <add>, %460, %cst_138 [1] : vector<8x128xf32> to vector<8xf32>
    %462 = vector.shape_cast %461 : vector<8xf32> to vector<8x1xf32>
    %cst_139 = arith.constant 1.562500e-02 : f32
    %463 = vector.broadcast %cst_139 : f32 to vector<8x1xf32>
    %464 = arith.mulf %462, %463 : vector<8x1xf32>
    %465 = arith.mulf %460, %460 : vector<8x128xf32>
    %cst_140 = arith.constant dense<0.000000e+00> : vector<8xf32>
    %466 = vector.multi_reduction <add>, %465, %cst_140 [1] : vector<8x128xf32> to vector<8xf32>
    %467 = vector.shape_cast %466 : vector<8xf32> to vector<8x1xf32>
    %cst_141 = arith.constant 1.562500e-02 : f32
    %468 = vector.broadcast %cst_141 : f32 to vector<8x1xf32>
    %469 = arith.mulf %467, %468 : vector<8x1xf32>
    %470 = arith.mulf %464, %464 : vector<8x1xf32>
    %471 = arith.subf %469, %470 : vector<8x1xf32>
    %cst_142 = arith.constant 0.000000e+00 : f32
    %472 = vector.broadcast %cst_142 : f32 to vector<8x1xf32>
    %473 = arith.maximumf %471, %472 : vector<8x1xf32>
    %474 = vector.broadcast %464 : vector<8x1xf32> to vector<8x128xf32>
    %475 = arith.subf %460, %474 : vector<8x128xf32>
    %cst_143 = arith.constant 9.99999974E-6 : f32
    %476 = vector.broadcast %cst_143 : f32 to vector<8x1xf32>
    %477 = arith.addf %473, %476 : vector<8x1xf32>
    %478 = math.rsqrt %477 : vector<8x1xf32>
    %479 = vector.broadcast %478 : vector<8x1xf32> to vector<8x128xf32>
    %480 = arith.mulf %475, %479 : vector<8x128xf32>
    %481 = arith.mulf %480, %29 : vector<8x128xf32>
    %482 = arith.addf %481, %32 : vector<8x128xf32>
    %c4_i32 = arith.constant 4 : i32
    %483 = arith.index_cast %c4_i32 : i32 to index
    %c0_144 = arith.constant 0 : index
    %c0_145 = arith.constant 0 : index
    %484 = vector.load %arg17[%483, %c0_144, %c0_145] : memref<8x8x384xbf16, #tpu.memory_space<vmem>>, vector<1x8x384xbf16>
    %485 = vector.shape_cast %484 : vector<1x8x384xbf16> to vector<8x384xbf16>
    %486 = arith.extf %485 : vector<8x384xbf16> to vector<8x384xf32>
    %487 = arith.truncf %426 : vector<8x128xf32> to vector<8x128xbf16>
    %c0_146 = arith.constant 0 : index
    %c0_147 = arith.constant 0 : index
    %488 = vector.load %arg3[%c0_146, %c0_147] : memref<128x384xbf16, #tpu.memory_space<vmem>>, vector<128x384xbf16>
    %cst_148 = arith.constant dense<0.000000e+00> : vector<8x384xf32>
    %489 = tpu.matmul %487, %488, %cst_148 {dimension_numbers = #tpu.dot_dimension_numbers<[1], [0], [0], [1], [0, 0, 1, 1], [], []>} : vector<8x128xbf16>, vector<128x384xbf16>, vector<8x384xf32> -> vector<8x384xf32>
    %490 = vector.extract_strided_slice %486 {offsets = [0, 0], sizes = [8, 128], strides = [1, 1]} : vector<8x384xf32> to vector<8x128xf32>
    %491 = vector.extract_strided_slice %489 {offsets = [0, 0], sizes = [8, 128], strides = [1, 1]} : vector<8x384xf32> to vector<8x128xf32>
    %492 = arith.addf %490, %491 : vector<8x128xf32>
    %493 = arith.negf %492 : vector<8x128xf32>
    %494 = math.exp %493 : vector<8x128xf32>
    %cst_149 = arith.constant 1.000000e+00 : f32
    %495 = vector.broadcast %cst_149 : f32 to vector<8x128xf32>
    %496 = arith.addf %495, %494 : vector<8x128xf32>
    %497 = arith.divf %495, %496 : vector<8x128xf32>
    %498 = vector.extract_strided_slice %486 {offsets = [0, 128], sizes = [8, 128], strides = [1, 1]} : vector<8x384xf32> to vector<8x128xf32>
    %499 = vector.extract_strided_slice %489 {offsets = [0, 128], sizes = [8, 128], strides = [1, 1]} : vector<8x384xf32> to vector<8x128xf32>
    %500 = arith.addf %498, %499 : vector<8x128xf32>
    %501 = arith.negf %500 : vector<8x128xf32>
    %502 = math.exp %501 : vector<8x128xf32>
    %cst_150 = arith.constant 1.000000e+00 : f32
    %503 = vector.broadcast %cst_150 : f32 to vector<8x128xf32>
    %504 = arith.addf %503, %502 : vector<8x128xf32>
    %505 = arith.divf %503, %504 : vector<8x128xf32>
    %506 = vector.extract_strided_slice %486 {offsets = [0, 256], sizes = [8, 128], strides = [1, 1]} : vector<8x384xf32> to vector<8x128xf32>
    %507 = vector.extract_strided_slice %489 {offsets = [0, 256], sizes = [8, 128], strides = [1, 1]} : vector<8x384xf32> to vector<8x128xf32>
    %508 = arith.addf %507, %14 : vector<8x128xf32>
    %509 = arith.mulf %497, %508 : vector<8x128xf32>
    %510 = arith.addf %506, %509 : vector<8x128xf32>
    %511 = math.tanh %510 : vector<8x128xf32>
    %cst_151 = arith.constant 1.000000e+00 : f32
    %512 = vector.broadcast %cst_151 : f32 to vector<8x128xf32>
    %513 = arith.subf %512, %505 : vector<8x128xf32>
    %514 = arith.mulf %513, %511 : vector<8x128xf32>
    %515 = arith.mulf %505, %426 : vector<8x128xf32>
    %516 = arith.addf %514, %515 : vector<8x128xf32>
    %cst_152 = arith.constant dense<0.000000e+00> : vector<8xf32>
    %517 = vector.multi_reduction <add>, %516, %cst_152 [1] : vector<8x128xf32> to vector<8xf32>
    %518 = vector.shape_cast %517 : vector<8xf32> to vector<8x1xf32>
    %cst_153 = arith.constant 7.812500e-03 : f32
    %519 = vector.broadcast %cst_153 : f32 to vector<8x1xf32>
    %520 = arith.mulf %518, %519 : vector<8x1xf32>
    %521 = arith.mulf %516, %516 : vector<8x128xf32>
    %cst_154 = arith.constant dense<0.000000e+00> : vector<8xf32>
    %522 = vector.multi_reduction <add>, %521, %cst_154 [1] : vector<8x128xf32> to vector<8xf32>
    %523 = vector.shape_cast %522 : vector<8xf32> to vector<8x1xf32>
    %cst_155 = arith.constant 7.812500e-03 : f32
    %524 = vector.broadcast %cst_155 : f32 to vector<8x1xf32>
    %525 = arith.mulf %523, %524 : vector<8x1xf32>
    %526 = arith.mulf %520, %520 : vector<8x1xf32>
    %527 = arith.subf %525, %526 : vector<8x1xf32>
    %cst_156 = arith.constant 0.000000e+00 : f32
    %528 = vector.broadcast %cst_156 : f32 to vector<8x1xf32>
    %529 = arith.maximumf %527, %528 : vector<8x1xf32>
    %530 = vector.broadcast %520 : vector<8x1xf32> to vector<8x128xf32>
    %531 = arith.subf %516, %530 : vector<8x128xf32>
    %cst_157 = arith.constant 9.99999974E-6 : f32
    %532 = vector.broadcast %cst_157 : f32 to vector<8x1xf32>
    %533 = arith.addf %529, %532 : vector<8x1xf32>
    %534 = math.rsqrt %533 : vector<8x1xf32>
    %535 = vector.broadcast %534 : vector<8x1xf32> to vector<8x128xf32>
    %536 = arith.mulf %531, %535 : vector<8x128xf32>
    %537 = arith.mulf %536, %17 : vector<8x128xf32>
    %538 = arith.addf %537, %20 : vector<8x128xf32>
    %539 = arith.truncf %538 : vector<8x128xf32> to vector<8x128xbf16>
    %c0_158 = arith.constant 0 : index
    %c0_159 = arith.constant 0 : index
    %540 = vector.load %arg8[%c0_158, %c0_159] : memref<128x384xbf16, #tpu.memory_space<vmem>>, vector<128x384xbf16>
    %cst_160 = arith.constant dense<0.000000e+00> : vector<8x384xf32>
    %541 = tpu.matmul %539, %540, %cst_160 {dimension_numbers = #tpu.dot_dimension_numbers<[1], [0], [0], [1], [0, 0, 1, 1], [], []>} : vector<8x128xbf16>, vector<128x384xbf16>, vector<8x384xf32> -> vector<8x384xf32>
    %542 = arith.addf %541, %23 : vector<8x384xf32>
    %543 = arith.truncf %482 : vector<8x128xf32> to vector<8x128xbf16>
    %c0_161 = arith.constant 0 : index
    %c0_162 = arith.constant 0 : index
    %544 = vector.load %arg9[%c0_161, %c0_162] : memref<128x384xbf16, #tpu.memory_space<vmem>>, vector<128x384xbf16>
    %cst_163 = arith.constant dense<0.000000e+00> : vector<8x384xf32>
    %545 = tpu.matmul %543, %544, %cst_163 {dimension_numbers = #tpu.dot_dimension_numbers<[1], [0], [0], [1], [0, 0, 1, 1], [], []>} : vector<8x128xbf16>, vector<128x384xbf16>, vector<8x384xf32> -> vector<8x384xf32>
    %546 = vector.extract_strided_slice %542 {offsets = [0, 0], sizes = [8, 128], strides = [1, 1]} : vector<8x384xf32> to vector<8x128xf32>
    %547 = vector.extract_strided_slice %545 {offsets = [0, 0], sizes = [8, 128], strides = [1, 1]} : vector<8x384xf32> to vector<8x128xf32>
    %548 = arith.addf %546, %547 : vector<8x128xf32>
    %549 = arith.negf %548 : vector<8x128xf32>
    %550 = math.exp %549 : vector<8x128xf32>
    %cst_164 = arith.constant 1.000000e+00 : f32
    %551 = vector.broadcast %cst_164 : f32 to vector<8x128xf32>
    %552 = arith.addf %551, %550 : vector<8x128xf32>
    %553 = arith.divf %551, %552 : vector<8x128xf32>
    %554 = vector.extract_strided_slice %542 {offsets = [0, 128], sizes = [8, 128], strides = [1, 1]} : vector<8x384xf32> to vector<8x128xf32>
    %555 = vector.extract_strided_slice %545 {offsets = [0, 128], sizes = [8, 128], strides = [1, 1]} : vector<8x384xf32> to vector<8x128xf32>
    %556 = arith.addf %554, %555 : vector<8x128xf32>
    %557 = arith.negf %556 : vector<8x128xf32>
    %558 = math.exp %557 : vector<8x128xf32>
    %cst_165 = arith.constant 1.000000e+00 : f32
    %559 = vector.broadcast %cst_165 : f32 to vector<8x128xf32>
    %560 = arith.addf %559, %558 : vector<8x128xf32>
    %561 = arith.divf %559, %560 : vector<8x128xf32>
    %562 = vector.extract_strided_slice %542 {offsets = [0, 256], sizes = [8, 128], strides = [1, 1]} : vector<8x384xf32> to vector<8x128xf32>
    %563 = vector.extract_strided_slice %545 {offsets = [0, 256], sizes = [8, 128], strides = [1, 1]} : vector<8x384xf32> to vector<8x128xf32>
    %564 = arith.addf %563, %26 : vector<8x128xf32>
    %565 = arith.mulf %553, %564 : vector<8x128xf32>
    %566 = arith.addf %562, %565 : vector<8x128xf32>
    %567 = math.tanh %566 : vector<8x128xf32>
    %cst_166 = arith.constant 1.000000e+00 : f32
    %568 = vector.broadcast %cst_166 : f32 to vector<8x128xf32>
    %569 = arith.subf %568, %561 : vector<8x128xf32>
    %570 = arith.mulf %569, %567 : vector<8x128xf32>
    %571 = arith.mulf %561, %482 : vector<8x128xf32>
    %572 = arith.addf %570, %571 : vector<8x128xf32>
    %cst_167 = arith.constant dense<0.000000e+00> : vector<8xf32>
    %573 = vector.multi_reduction <add>, %572, %cst_167 [1] : vector<8x128xf32> to vector<8xf32>
    %574 = vector.shape_cast %573 : vector<8xf32> to vector<8x1xf32>
    %cst_168 = arith.constant 1.562500e-02 : f32
    %575 = vector.broadcast %cst_168 : f32 to vector<8x1xf32>
    %576 = arith.mulf %574, %575 : vector<8x1xf32>
    %577 = arith.mulf %572, %572 : vector<8x128xf32>
    %cst_169 = arith.constant dense<0.000000e+00> : vector<8xf32>
    %578 = vector.multi_reduction <add>, %577, %cst_169 [1] : vector<8x128xf32> to vector<8xf32>
    %579 = vector.shape_cast %578 : vector<8xf32> to vector<8x1xf32>
    %cst_170 = arith.constant 1.562500e-02 : f32
    %580 = vector.broadcast %cst_170 : f32 to vector<8x1xf32>
    %581 = arith.mulf %579, %580 : vector<8x1xf32>
    %582 = arith.mulf %576, %576 : vector<8x1xf32>
    %583 = arith.subf %581, %582 : vector<8x1xf32>
    %cst_171 = arith.constant 0.000000e+00 : f32
    %584 = vector.broadcast %cst_171 : f32 to vector<8x1xf32>
    %585 = arith.maximumf %583, %584 : vector<8x1xf32>
    %586 = vector.broadcast %576 : vector<8x1xf32> to vector<8x128xf32>
    %587 = arith.subf %572, %586 : vector<8x128xf32>
    %cst_172 = arith.constant 9.99999974E-6 : f32
    %588 = vector.broadcast %cst_172 : f32 to vector<8x1xf32>
    %589 = arith.addf %585, %588 : vector<8x1xf32>
    %590 = math.rsqrt %589 : vector<8x1xf32>
    %591 = vector.broadcast %590 : vector<8x1xf32> to vector<8x128xf32>
    %592 = arith.mulf %587, %591 : vector<8x128xf32>
    %593 = arith.mulf %592, %29 : vector<8x128xf32>
    %594 = arith.addf %593, %32 : vector<8x128xf32>
    %c5_i32 = arith.constant 5 : i32
    %595 = arith.index_cast %c5_i32 : i32 to index
    %c0_173 = arith.constant 0 : index
    %c0_174 = arith.constant 0 : index
    %596 = vector.load %arg17[%595, %c0_173, %c0_174] : memref<8x8x384xbf16, #tpu.memory_space<vmem>>, vector<1x8x384xbf16>
    %597 = vector.shape_cast %596 : vector<1x8x384xbf16> to vector<8x384xbf16>
    %598 = arith.extf %597 : vector<8x384xbf16> to vector<8x384xf32>
    %599 = arith.truncf %538 : vector<8x128xf32> to vector<8x128xbf16>
    %c0_175 = arith.constant 0 : index
    %c0_176 = arith.constant 0 : index
    %600 = vector.load %arg3[%c0_175, %c0_176] : memref<128x384xbf16, #tpu.memory_space<vmem>>, vector<128x384xbf16>
    %cst_177 = arith.constant dense<0.000000e+00> : vector<8x384xf32>
    %601 = tpu.matmul %599, %600, %cst_177 {dimension_numbers = #tpu.dot_dimension_numbers<[1], [0], [0], [1], [0, 0, 1, 1], [], []>} : vector<8x128xbf16>, vector<128x384xbf16>, vector<8x384xf32> -> vector<8x384xf32>
    %602 = vector.extract_strided_slice %598 {offsets = [0, 0], sizes = [8, 128], strides = [1, 1]} : vector<8x384xf32> to vector<8x128xf32>
    %603 = vector.extract_strided_slice %601 {offsets = [0, 0], sizes = [8, 128], strides = [1, 1]} : vector<8x384xf32> to vector<8x128xf32>
    %604 = arith.addf %602, %603 : vector<8x128xf32>
    %605 = arith.negf %604 : vector<8x128xf32>
    %606 = math.exp %605 : vector<8x128xf32>
    %cst_178 = arith.constant 1.000000e+00 : f32
    %607 = vector.broadcast %cst_178 : f32 to vector<8x128xf32>
    %608 = arith.addf %607, %606 : vector<8x128xf32>
    %609 = arith.divf %607, %608 : vector<8x128xf32>
    %610 = vector.extract_strided_slice %598 {offsets = [0, 128], sizes = [8, 128], strides = [1, 1]} : vector<8x384xf32> to vector<8x128xf32>
    %611 = vector.extract_strided_slice %601 {offsets = [0, 128], sizes = [8, 128], strides = [1, 1]} : vector<8x384xf32> to vector<8x128xf32>
    %612 = arith.addf %610, %611 : vector<8x128xf32>
    %613 = arith.negf %612 : vector<8x128xf32>
    %614 = math.exp %613 : vector<8x128xf32>
    %cst_179 = arith.constant 1.000000e+00 : f32
    %615 = vector.broadcast %cst_179 : f32 to vector<8x128xf32>
    %616 = arith.addf %615, %614 : vector<8x128xf32>
    %617 = arith.divf %615, %616 : vector<8x128xf32>
    %618 = vector.extract_strided_slice %598 {offsets = [0, 256], sizes = [8, 128], strides = [1, 1]} : vector<8x384xf32> to vector<8x128xf32>
    %619 = vector.extract_strided_slice %601 {offsets = [0, 256], sizes = [8, 128], strides = [1, 1]} : vector<8x384xf32> to vector<8x128xf32>
    %620 = arith.addf %619, %14 : vector<8x128xf32>
    %621 = arith.mulf %609, %620 : vector<8x128xf32>
    %622 = arith.addf %618, %621 : vector<8x128xf32>
    %623 = math.tanh %622 : vector<8x128xf32>
    %cst_180 = arith.constant 1.000000e+00 : f32
    %624 = vector.broadcast %cst_180 : f32 to vector<8x128xf32>
    %625 = arith.subf %624, %617 : vector<8x128xf32>
    %626 = arith.mulf %625, %623 : vector<8x128xf32>
    %627 = arith.mulf %617, %538 : vector<8x128xf32>
    %628 = arith.addf %626, %627 : vector<8x128xf32>
    %cst_181 = arith.constant dense<0.000000e+00> : vector<8xf32>
    %629 = vector.multi_reduction <add>, %628, %cst_181 [1] : vector<8x128xf32> to vector<8xf32>
    %630 = vector.shape_cast %629 : vector<8xf32> to vector<8x1xf32>
    %cst_182 = arith.constant 7.812500e-03 : f32
    %631 = vector.broadcast %cst_182 : f32 to vector<8x1xf32>
    %632 = arith.mulf %630, %631 : vector<8x1xf32>
    %633 = arith.mulf %628, %628 : vector<8x128xf32>
    %cst_183 = arith.constant dense<0.000000e+00> : vector<8xf32>
    %634 = vector.multi_reduction <add>, %633, %cst_183 [1] : vector<8x128xf32> to vector<8xf32>
    %635 = vector.shape_cast %634 : vector<8xf32> to vector<8x1xf32>
    %cst_184 = arith.constant 7.812500e-03 : f32
    %636 = vector.broadcast %cst_184 : f32 to vector<8x1xf32>
    %637 = arith.mulf %635, %636 : vector<8x1xf32>
    %638 = arith.mulf %632, %632 : vector<8x1xf32>
    %639 = arith.subf %637, %638 : vector<8x1xf32>
    %cst_185 = arith.constant 0.000000e+00 : f32
    %640 = vector.broadcast %cst_185 : f32 to vector<8x1xf32>
    %641 = arith.maximumf %639, %640 : vector<8x1xf32>
    %642 = vector.broadcast %632 : vector<8x1xf32> to vector<8x128xf32>
    %643 = arith.subf %628, %642 : vector<8x128xf32>
    %cst_186 = arith.constant 9.99999974E-6 : f32
    %644 = vector.broadcast %cst_186 : f32 to vector<8x1xf32>
    %645 = arith.addf %641, %644 : vector<8x1xf32>
    %646 = math.rsqrt %645 : vector<8x1xf32>
    %647 = vector.broadcast %646 : vector<8x1xf32> to vector<8x128xf32>
    %648 = arith.mulf %643, %647 : vector<8x128xf32>
    %649 = arith.mulf %648, %17 : vector<8x128xf32>
    %650 = arith.addf %649, %20 : vector<8x128xf32>
    %651 = arith.truncf %650 : vector<8x128xf32> to vector<8x128xbf16>
    %c0_187 = arith.constant 0 : index
    %c0_188 = arith.constant 0 : index
    %652 = vector.load %arg8[%c0_187, %c0_188] : memref<128x384xbf16, #tpu.memory_space<vmem>>, vector<128x384xbf16>
    %cst_189 = arith.constant dense<0.000000e+00> : vector<8x384xf32>
    %653 = tpu.matmul %651, %652, %cst_189 {dimension_numbers = #tpu.dot_dimension_numbers<[1], [0], [0], [1], [0, 0, 1, 1], [], []>} : vector<8x128xbf16>, vector<128x384xbf16>, vector<8x384xf32> -> vector<8x384xf32>
    %654 = arith.addf %653, %23 : vector<8x384xf32>
    %655 = arith.truncf %594 : vector<8x128xf32> to vector<8x128xbf16>
    %c0_190 = arith.constant 0 : index
    %c0_191 = arith.constant 0 : index
    %656 = vector.load %arg9[%c0_190, %c0_191] : memref<128x384xbf16, #tpu.memory_space<vmem>>, vector<128x384xbf16>
    %cst_192 = arith.constant dense<0.000000e+00> : vector<8x384xf32>
    %657 = tpu.matmul %655, %656, %cst_192 {dimension_numbers = #tpu.dot_dimension_numbers<[1], [0], [0], [1], [0, 0, 1, 1], [], []>} : vector<8x128xbf16>, vector<128x384xbf16>, vector<8x384xf32> -> vector<8x384xf32>
    %658 = vector.extract_strided_slice %654 {offsets = [0, 0], sizes = [8, 128], strides = [1, 1]} : vector<8x384xf32> to vector<8x128xf32>
    %659 = vector.extract_strided_slice %657 {offsets = [0, 0], sizes = [8, 128], strides = [1, 1]} : vector<8x384xf32> to vector<8x128xf32>
    %660 = arith.addf %658, %659 : vector<8x128xf32>
    %661 = arith.negf %660 : vector<8x128xf32>
    %662 = math.exp %661 : vector<8x128xf32>
    %cst_193 = arith.constant 1.000000e+00 : f32
    %663 = vector.broadcast %cst_193 : f32 to vector<8x128xf32>
    %664 = arith.addf %663, %662 : vector<8x128xf32>
    %665 = arith.divf %663, %664 : vector<8x128xf32>
    %666 = vector.extract_strided_slice %654 {offsets = [0, 128], sizes = [8, 128], strides = [1, 1]} : vector<8x384xf32> to vector<8x128xf32>
    %667 = vector.extract_strided_slice %657 {offsets = [0, 128], sizes = [8, 128], strides = [1, 1]} : vector<8x384xf32> to vector<8x128xf32>
    %668 = arith.addf %666, %667 : vector<8x128xf32>
    %669 = arith.negf %668 : vector<8x128xf32>
    %670 = math.exp %669 : vector<8x128xf32>
    %cst_194 = arith.constant 1.000000e+00 : f32
    %671 = vector.broadcast %cst_194 : f32 to vector<8x128xf32>
    %672 = arith.addf %671, %670 : vector<8x128xf32>
    %673 = arith.divf %671, %672 : vector<8x128xf32>
    %674 = vector.extract_strided_slice %654 {offsets = [0, 256], sizes = [8, 128], strides = [1, 1]} : vector<8x384xf32> to vector<8x128xf32>
    %675 = vector.extract_strided_slice %657 {offsets = [0, 256], sizes = [8, 128], strides = [1, 1]} : vector<8x384xf32> to vector<8x128xf32>
    %676 = arith.addf %675, %26 : vector<8x128xf32>
    %677 = arith.mulf %665, %676 : vector<8x128xf32>
    %678 = arith.addf %674, %677 : vector<8x128xf32>
    %679 = math.tanh %678 : vector<8x128xf32>
    %cst_195 = arith.constant 1.000000e+00 : f32
    %680 = vector.broadcast %cst_195 : f32 to vector<8x128xf32>
    %681 = arith.subf %680, %673 : vector<8x128xf32>
    %682 = arith.mulf %681, %679 : vector<8x128xf32>
    %683 = arith.mulf %673, %594 : vector<8x128xf32>
    %684 = arith.addf %682, %683 : vector<8x128xf32>
    %cst_196 = arith.constant dense<0.000000e+00> : vector<8xf32>
    %685 = vector.multi_reduction <add>, %684, %cst_196 [1] : vector<8x128xf32> to vector<8xf32>
    %686 = vector.shape_cast %685 : vector<8xf32> to vector<8x1xf32>
    %cst_197 = arith.constant 1.562500e-02 : f32
    %687 = vector.broadcast %cst_197 : f32 to vector<8x1xf32>
    %688 = arith.mulf %686, %687 : vector<8x1xf32>
    %689 = arith.mulf %684, %684 : vector<8x128xf32>
    %cst_198 = arith.constant dense<0.000000e+00> : vector<8xf32>
    %690 = vector.multi_reduction <add>, %689, %cst_198 [1] : vector<8x128xf32> to vector<8xf32>
    %691 = vector.shape_cast %690 : vector<8xf32> to vector<8x1xf32>
    %cst_199 = arith.constant 1.562500e-02 : f32
    %692 = vector.broadcast %cst_199 : f32 to vector<8x1xf32>
    %693 = arith.mulf %691, %692 : vector<8x1xf32>
    %694 = arith.mulf %688, %688 : vector<8x1xf32>
    %695 = arith.subf %693, %694 : vector<8x1xf32>
    %cst_200 = arith.constant 0.000000e+00 : f32
    %696 = vector.broadcast %cst_200 : f32 to vector<8x1xf32>
    %697 = arith.maximumf %695, %696 : vector<8x1xf32>
    %698 = vector.broadcast %688 : vector<8x1xf32> to vector<8x128xf32>
    %699 = arith.subf %684, %698 : vector<8x128xf32>
    %cst_201 = arith.constant 9.99999974E-6 : f32
    %700 = vector.broadcast %cst_201 : f32 to vector<8x1xf32>
    %701 = arith.addf %697, %700 : vector<8x1xf32>
    %702 = math.rsqrt %701 : vector<8x1xf32>
    %703 = vector.broadcast %702 : vector<8x1xf32> to vector<8x128xf32>
    %704 = arith.mulf %699, %703 : vector<8x128xf32>
    %705 = arith.mulf %704, %29 : vector<8x128xf32>
    %706 = arith.addf %705, %32 : vector<8x128xf32>
    %c6_i32 = arith.constant 6 : i32
    %707 = arith.index_cast %c6_i32 : i32 to index
    %c0_202 = arith.constant 0 : index
    %c0_203 = arith.constant 0 : index
    %708 = vector.load %arg17[%707, %c0_202, %c0_203] : memref<8x8x384xbf16, #tpu.memory_space<vmem>>, vector<1x8x384xbf16>
    %709 = vector.shape_cast %708 : vector<1x8x384xbf16> to vector<8x384xbf16>
    %710 = arith.extf %709 : vector<8x384xbf16> to vector<8x384xf32>
    %711 = arith.truncf %650 : vector<8x128xf32> to vector<8x128xbf16>
    %c0_204 = arith.constant 0 : index
    %c0_205 = arith.constant 0 : index
    %712 = vector.load %arg3[%c0_204, %c0_205] : memref<128x384xbf16, #tpu.memory_space<vmem>>, vector<128x384xbf16>
    %cst_206 = arith.constant dense<0.000000e+00> : vector<8x384xf32>
    %713 = tpu.matmul %711, %712, %cst_206 {dimension_numbers = #tpu.dot_dimension_numbers<[1], [0], [0], [1], [0, 0, 1, 1], [], []>} : vector<8x128xbf16>, vector<128x384xbf16>, vector<8x384xf32> -> vector<8x384xf32>
    %714 = vector.extract_strided_slice %710 {offsets = [0, 0], sizes = [8, 128], strides = [1, 1]} : vector<8x384xf32> to vector<8x128xf32>
    %715 = vector.extract_strided_slice %713 {offsets = [0, 0], sizes = [8, 128], strides = [1, 1]} : vector<8x384xf32> to vector<8x128xf32>
    %716 = arith.addf %714, %715 : vector<8x128xf32>
    %717 = arith.negf %716 : vector<8x128xf32>
    %718 = math.exp %717 : vector<8x128xf32>
    %cst_207 = arith.constant 1.000000e+00 : f32
    %719 = vector.broadcast %cst_207 : f32 to vector<8x128xf32>
    %720 = arith.addf %719, %718 : vector<8x128xf32>
    %721 = arith.divf %719, %720 : vector<8x128xf32>
    %722 = vector.extract_strided_slice %710 {offsets = [0, 128], sizes = [8, 128], strides = [1, 1]} : vector<8x384xf32> to vector<8x128xf32>
    %723 = vector.extract_strided_slice %713 {offsets = [0, 128], sizes = [8, 128], strides = [1, 1]} : vector<8x384xf32> to vector<8x128xf32>
    %724 = arith.addf %722, %723 : vector<8x128xf32>
    %725 = arith.negf %724 : vector<8x128xf32>
    %726 = math.exp %725 : vector<8x128xf32>
    %cst_208 = arith.constant 1.000000e+00 : f32
    %727 = vector.broadcast %cst_208 : f32 to vector<8x128xf32>
    %728 = arith.addf %727, %726 : vector<8x128xf32>
    %729 = arith.divf %727, %728 : vector<8x128xf32>
    %730 = vector.extract_strided_slice %710 {offsets = [0, 256], sizes = [8, 128], strides = [1, 1]} : vector<8x384xf32> to vector<8x128xf32>
    %731 = vector.extract_strided_slice %713 {offsets = [0, 256], sizes = [8, 128], strides = [1, 1]} : vector<8x384xf32> to vector<8x128xf32>
    %732 = arith.addf %731, %14 : vector<8x128xf32>
    %733 = arith.mulf %721, %732 : vector<8x128xf32>
    %734 = arith.addf %730, %733 : vector<8x128xf32>
    %735 = math.tanh %734 : vector<8x128xf32>
    %cst_209 = arith.constant 1.000000e+00 : f32
    %736 = vector.broadcast %cst_209 : f32 to vector<8x128xf32>
    %737 = arith.subf %736, %729 : vector<8x128xf32>
    %738 = arith.mulf %737, %735 : vector<8x128xf32>
    %739 = arith.mulf %729, %650 : vector<8x128xf32>
    %740 = arith.addf %738, %739 : vector<8x128xf32>
    %cst_210 = arith.constant dense<0.000000e+00> : vector<8xf32>
    %741 = vector.multi_reduction <add>, %740, %cst_210 [1] : vector<8x128xf32> to vector<8xf32>
    %742 = vector.shape_cast %741 : vector<8xf32> to vector<8x1xf32>
    %cst_211 = arith.constant 7.812500e-03 : f32
    %743 = vector.broadcast %cst_211 : f32 to vector<8x1xf32>
    %744 = arith.mulf %742, %743 : vector<8x1xf32>
    %745 = arith.mulf %740, %740 : vector<8x128xf32>
    %cst_212 = arith.constant dense<0.000000e+00> : vector<8xf32>
    %746 = vector.multi_reduction <add>, %745, %cst_212 [1] : vector<8x128xf32> to vector<8xf32>
    %747 = vector.shape_cast %746 : vector<8xf32> to vector<8x1xf32>
    %cst_213 = arith.constant 7.812500e-03 : f32
    %748 = vector.broadcast %cst_213 : f32 to vector<8x1xf32>
    %749 = arith.mulf %747, %748 : vector<8x1xf32>
    %750 = arith.mulf %744, %744 : vector<8x1xf32>
    %751 = arith.subf %749, %750 : vector<8x1xf32>
    %cst_214 = arith.constant 0.000000e+00 : f32
    %752 = vector.broadcast %cst_214 : f32 to vector<8x1xf32>
    %753 = arith.maximumf %751, %752 : vector<8x1xf32>
    %754 = vector.broadcast %744 : vector<8x1xf32> to vector<8x128xf32>
    %755 = arith.subf %740, %754 : vector<8x128xf32>
    %cst_215 = arith.constant 9.99999974E-6 : f32
    %756 = vector.broadcast %cst_215 : f32 to vector<8x1xf32>
    %757 = arith.addf %753, %756 : vector<8x1xf32>
    %758 = math.rsqrt %757 : vector<8x1xf32>
    %759 = vector.broadcast %758 : vector<8x1xf32> to vector<8x128xf32>
    %760 = arith.mulf %755, %759 : vector<8x128xf32>
    %761 = arith.mulf %760, %17 : vector<8x128xf32>
    %762 = arith.addf %761, %20 : vector<8x128xf32>
    %763 = arith.truncf %762 : vector<8x128xf32> to vector<8x128xbf16>
    %c0_216 = arith.constant 0 : index
    %c0_217 = arith.constant 0 : index
    %764 = vector.load %arg8[%c0_216, %c0_217] : memref<128x384xbf16, #tpu.memory_space<vmem>>, vector<128x384xbf16>
    %cst_218 = arith.constant dense<0.000000e+00> : vector<8x384xf32>
    %765 = tpu.matmul %763, %764, %cst_218 {dimension_numbers = #tpu.dot_dimension_numbers<[1], [0], [0], [1], [0, 0, 1, 1], [], []>} : vector<8x128xbf16>, vector<128x384xbf16>, vector<8x384xf32> -> vector<8x384xf32>
    %766 = arith.addf %765, %23 : vector<8x384xf32>
    %767 = arith.truncf %706 : vector<8x128xf32> to vector<8x128xbf16>
    %c0_219 = arith.constant 0 : index
    %c0_220 = arith.constant 0 : index
    %768 = vector.load %arg9[%c0_219, %c0_220] : memref<128x384xbf16, #tpu.memory_space<vmem>>, vector<128x384xbf16>
    %cst_221 = arith.constant dense<0.000000e+00> : vector<8x384xf32>
    %769 = tpu.matmul %767, %768, %cst_221 {dimension_numbers = #tpu.dot_dimension_numbers<[1], [0], [0], [1], [0, 0, 1, 1], [], []>} : vector<8x128xbf16>, vector<128x384xbf16>, vector<8x384xf32> -> vector<8x384xf32>
    %770 = vector.extract_strided_slice %766 {offsets = [0, 0], sizes = [8, 128], strides = [1, 1]} : vector<8x384xf32> to vector<8x128xf32>
    %771 = vector.extract_strided_slice %769 {offsets = [0, 0], sizes = [8, 128], strides = [1, 1]} : vector<8x384xf32> to vector<8x128xf32>
    %772 = arith.addf %770, %771 : vector<8x128xf32>
    %773 = arith.negf %772 : vector<8x128xf32>
    %774 = math.exp %773 : vector<8x128xf32>
    %cst_222 = arith.constant 1.000000e+00 : f32
    %775 = vector.broadcast %cst_222 : f32 to vector<8x128xf32>
    %776 = arith.addf %775, %774 : vector<8x128xf32>
    %777 = arith.divf %775, %776 : vector<8x128xf32>
    %778 = vector.extract_strided_slice %766 {offsets = [0, 128], sizes = [8, 128], strides = [1, 1]} : vector<8x384xf32> to vector<8x128xf32>
    %779 = vector.extract_strided_slice %769 {offsets = [0, 128], sizes = [8, 128], strides = [1, 1]} : vector<8x384xf32> to vector<8x128xf32>
    %780 = arith.addf %778, %779 : vector<8x128xf32>
    %781 = arith.negf %780 : vector<8x128xf32>
    %782 = math.exp %781 : vector<8x128xf32>
    %cst_223 = arith.constant 1.000000e+00 : f32
    %783 = vector.broadcast %cst_223 : f32 to vector<8x128xf32>
    %784 = arith.addf %783, %782 : vector<8x128xf32>
    %785 = arith.divf %783, %784 : vector<8x128xf32>
    %786 = vector.extract_strided_slice %766 {offsets = [0, 256], sizes = [8, 128], strides = [1, 1]} : vector<8x384xf32> to vector<8x128xf32>
    %787 = vector.extract_strided_slice %769 {offsets = [0, 256], sizes = [8, 128], strides = [1, 1]} : vector<8x384xf32> to vector<8x128xf32>
    %788 = arith.addf %787, %26 : vector<8x128xf32>
    %789 = arith.mulf %777, %788 : vector<8x128xf32>
    %790 = arith.addf %786, %789 : vector<8x128xf32>
    %791 = math.tanh %790 : vector<8x128xf32>
    %cst_224 = arith.constant 1.000000e+00 : f32
    %792 = vector.broadcast %cst_224 : f32 to vector<8x128xf32>
    %793 = arith.subf %792, %785 : vector<8x128xf32>
    %794 = arith.mulf %793, %791 : vector<8x128xf32>
    %795 = arith.mulf %785, %706 : vector<8x128xf32>
    %796 = arith.addf %794, %795 : vector<8x128xf32>
    %cst_225 = arith.constant dense<0.000000e+00> : vector<8xf32>
    %797 = vector.multi_reduction <add>, %796, %cst_225 [1] : vector<8x128xf32> to vector<8xf32>
    %798 = vector.shape_cast %797 : vector<8xf32> to vector<8x1xf32>
    %cst_226 = arith.constant 1.562500e-02 : f32
    %799 = vector.broadcast %cst_226 : f32 to vector<8x1xf32>
    %800 = arith.mulf %798, %799 : vector<8x1xf32>
    %801 = arith.mulf %796, %796 : vector<8x128xf32>
    %cst_227 = arith.constant dense<0.000000e+00> : vector<8xf32>
    %802 = vector.multi_reduction <add>, %801, %cst_227 [1] : vector<8x128xf32> to vector<8xf32>
    %803 = vector.shape_cast %802 : vector<8xf32> to vector<8x1xf32>
    %cst_228 = arith.constant 1.562500e-02 : f32
    %804 = vector.broadcast %cst_228 : f32 to vector<8x1xf32>
    %805 = arith.mulf %803, %804 : vector<8x1xf32>
    %806 = arith.mulf %800, %800 : vector<8x1xf32>
    %807 = arith.subf %805, %806 : vector<8x1xf32>
    %cst_229 = arith.constant 0.000000e+00 : f32
    %808 = vector.broadcast %cst_229 : f32 to vector<8x1xf32>
    %809 = arith.maximumf %807, %808 : vector<8x1xf32>
    %810 = vector.broadcast %800 : vector<8x1xf32> to vector<8x128xf32>
    %811 = arith.subf %796, %810 : vector<8x128xf32>
    %cst_230 = arith.constant 9.99999974E-6 : f32
    %812 = vector.broadcast %cst_230 : f32 to vector<8x1xf32>
    %813 = arith.addf %809, %812 : vector<8x1xf32>
    %814 = math.rsqrt %813 : vector<8x1xf32>
    %815 = vector.broadcast %814 : vector<8x1xf32> to vector<8x128xf32>
    %816 = arith.mulf %811, %815 : vector<8x128xf32>
    %817 = arith.mulf %816, %29 : vector<8x128xf32>
    %818 = arith.addf %817, %32 : vector<8x128xf32>
    %c7_i32 = arith.constant 7 : i32
    %819 = arith.index_cast %c7_i32 : i32 to index
    %c0_231 = arith.constant 0 : index
    %c0_232 = arith.constant 0 : index
    %820 = vector.load %arg17[%819, %c0_231, %c0_232] : memref<8x8x384xbf16, #tpu.memory_space<vmem>>, vector<1x8x384xbf16>
    %821 = vector.shape_cast %820 : vector<1x8x384xbf16> to vector<8x384xbf16>
    %822 = arith.extf %821 : vector<8x384xbf16> to vector<8x384xf32>
    %823 = arith.truncf %762 : vector<8x128xf32> to vector<8x128xbf16>
    %c0_233 = arith.constant 0 : index
    %c0_234 = arith.constant 0 : index
    %824 = vector.load %arg3[%c0_233, %c0_234] : memref<128x384xbf16, #tpu.memory_space<vmem>>, vector<128x384xbf16>
    %cst_235 = arith.constant dense<0.000000e+00> : vector<8x384xf32>
    %825 = tpu.matmul %823, %824, %cst_235 {dimension_numbers = #tpu.dot_dimension_numbers<[1], [0], [0], [1], [0, 0, 1, 1], [], []>} : vector<8x128xbf16>, vector<128x384xbf16>, vector<8x384xf32> -> vector<8x384xf32>
    %826 = vector.extract_strided_slice %822 {offsets = [0, 0], sizes = [8, 128], strides = [1, 1]} : vector<8x384xf32> to vector<8x128xf32>
    %827 = vector.extract_strided_slice %825 {offsets = [0, 0], sizes = [8, 128], strides = [1, 1]} : vector<8x384xf32> to vector<8x128xf32>
    %828 = arith.addf %826, %827 : vector<8x128xf32>
    %829 = arith.negf %828 : vector<8x128xf32>
    %830 = math.exp %829 : vector<8x128xf32>
    %cst_236 = arith.constant 1.000000e+00 : f32
    %831 = vector.broadcast %cst_236 : f32 to vector<8x128xf32>
    %832 = arith.addf %831, %830 : vector<8x128xf32>
    %833 = arith.divf %831, %832 : vector<8x128xf32>
    %834 = vector.extract_strided_slice %822 {offsets = [0, 128], sizes = [8, 128], strides = [1, 1]} : vector<8x384xf32> to vector<8x128xf32>
    %835 = vector.extract_strided_slice %825 {offsets = [0, 128], sizes = [8, 128], strides = [1, 1]} : vector<8x384xf32> to vector<8x128xf32>
    %836 = arith.addf %834, %835 : vector<8x128xf32>
    %837 = arith.negf %836 : vector<8x128xf32>
    %838 = math.exp %837 : vector<8x128xf32>
    %cst_237 = arith.constant 1.000000e+00 : f32
    %839 = vector.broadcast %cst_237 : f32 to vector<8x128xf32>
    %840 = arith.addf %839, %838 : vector<8x128xf32>
    %841 = arith.divf %839, %840 : vector<8x128xf32>
    %842 = vector.extract_strided_slice %822 {offsets = [0, 256], sizes = [8, 128], strides = [1, 1]} : vector<8x384xf32> to vector<8x128xf32>
    %843 = vector.extract_strided_slice %825 {offsets = [0, 256], sizes = [8, 128], strides = [1, 1]} : vector<8x384xf32> to vector<8x128xf32>
    %844 = arith.addf %843, %14 : vector<8x128xf32>
    %845 = arith.mulf %833, %844 : vector<8x128xf32>
    %846 = arith.addf %842, %845 : vector<8x128xf32>
    %847 = math.tanh %846 : vector<8x128xf32>
    %cst_238 = arith.constant 1.000000e+00 : f32
    %848 = vector.broadcast %cst_238 : f32 to vector<8x128xf32>
    %849 = arith.subf %848, %841 : vector<8x128xf32>
    %850 = arith.mulf %849, %847 : vector<8x128xf32>
    %851 = arith.mulf %841, %762 : vector<8x128xf32>
    %852 = arith.addf %850, %851 : vector<8x128xf32>
    %cst_239 = arith.constant dense<0.000000e+00> : vector<8xf32>
    %853 = vector.multi_reduction <add>, %852, %cst_239 [1] : vector<8x128xf32> to vector<8xf32>
    %854 = vector.shape_cast %853 : vector<8xf32> to vector<8x1xf32>
    %cst_240 = arith.constant 7.812500e-03 : f32
    %855 = vector.broadcast %cst_240 : f32 to vector<8x1xf32>
    %856 = arith.mulf %854, %855 : vector<8x1xf32>
    %857 = arith.mulf %852, %852 : vector<8x128xf32>
    %cst_241 = arith.constant dense<0.000000e+00> : vector<8xf32>
    %858 = vector.multi_reduction <add>, %857, %cst_241 [1] : vector<8x128xf32> to vector<8xf32>
    %859 = vector.shape_cast %858 : vector<8xf32> to vector<8x1xf32>
    %cst_242 = arith.constant 7.812500e-03 : f32
    %860 = vector.broadcast %cst_242 : f32 to vector<8x1xf32>
    %861 = arith.mulf %859, %860 : vector<8x1xf32>
    %862 = arith.mulf %856, %856 : vector<8x1xf32>
    %863 = arith.subf %861, %862 : vector<8x1xf32>
    %cst_243 = arith.constant 0.000000e+00 : f32
    %864 = vector.broadcast %cst_243 : f32 to vector<8x1xf32>
    %865 = arith.maximumf %863, %864 : vector<8x1xf32>
    %866 = vector.broadcast %856 : vector<8x1xf32> to vector<8x128xf32>
    %867 = arith.subf %852, %866 : vector<8x128xf32>
    %cst_244 = arith.constant 9.99999974E-6 : f32
    %868 = vector.broadcast %cst_244 : f32 to vector<8x1xf32>
    %869 = arith.addf %865, %868 : vector<8x1xf32>
    %870 = math.rsqrt %869 : vector<8x1xf32>
    %871 = vector.broadcast %870 : vector<8x1xf32> to vector<8x128xf32>
    %872 = arith.mulf %867, %871 : vector<8x128xf32>
    %873 = arith.mulf %872, %17 : vector<8x128xf32>
    %874 = arith.addf %873, %20 : vector<8x128xf32>
    %875 = arith.truncf %874 : vector<8x128xf32> to vector<8x128xbf16>
    %c0_245 = arith.constant 0 : index
    %c0_246 = arith.constant 0 : index
    %876 = vector.load %arg8[%c0_245, %c0_246] : memref<128x384xbf16, #tpu.memory_space<vmem>>, vector<128x384xbf16>
    %cst_247 = arith.constant dense<0.000000e+00> : vector<8x384xf32>
    %877 = tpu.matmul %875, %876, %cst_247 {dimension_numbers = #tpu.dot_dimension_numbers<[1], [0], [0], [1], [0, 0, 1, 1], [], []>} : vector<8x128xbf16>, vector<128x384xbf16>, vector<8x384xf32> -> vector<8x384xf32>
    %878 = arith.addf %877, %23 : vector<8x384xf32>
    %879 = arith.truncf %818 : vector<8x128xf32> to vector<8x128xbf16>
    %c0_248 = arith.constant 0 : index
    %c0_249 = arith.constant 0 : index
    %880 = vector.load %arg9[%c0_248, %c0_249] : memref<128x384xbf16, #tpu.memory_space<vmem>>, vector<128x384xbf16>
    %cst_250 = arith.constant dense<0.000000e+00> : vector<8x384xf32>
    %881 = tpu.matmul %879, %880, %cst_250 {dimension_numbers = #tpu.dot_dimension_numbers<[1], [0], [0], [1], [0, 0, 1, 1], [], []>} : vector<8x128xbf16>, vector<128x384xbf16>, vector<8x384xf32> -> vector<8x384xf32>
    %882 = vector.extract_strided_slice %878 {offsets = [0, 0], sizes = [8, 128], strides = [1, 1]} : vector<8x384xf32> to vector<8x128xf32>
    %883 = vector.extract_strided_slice %881 {offsets = [0, 0], sizes = [8, 128], strides = [1, 1]} : vector<8x384xf32> to vector<8x128xf32>
    %884 = arith.addf %882, %883 : vector<8x128xf32>
    %885 = arith.negf %884 : vector<8x128xf32>
    %886 = math.exp %885 : vector<8x128xf32>
    %cst_251 = arith.constant 1.000000e+00 : f32
    %887 = vector.broadcast %cst_251 : f32 to vector<8x128xf32>
    %888 = arith.addf %887, %886 : vector<8x128xf32>
    %889 = arith.divf %887, %888 : vector<8x128xf32>
    %890 = vector.extract_strided_slice %878 {offsets = [0, 128], sizes = [8, 128], strides = [1, 1]} : vector<8x384xf32> to vector<8x128xf32>
    %891 = vector.extract_strided_slice %881 {offsets = [0, 128], sizes = [8, 128], strides = [1, 1]} : vector<8x384xf32> to vector<8x128xf32>
    %892 = arith.addf %890, %891 : vector<8x128xf32>
    %893 = arith.negf %892 : vector<8x128xf32>
    %894 = math.exp %893 : vector<8x128xf32>
    %cst_252 = arith.constant 1.000000e+00 : f32
    %895 = vector.broadcast %cst_252 : f32 to vector<8x128xf32>
    %896 = arith.addf %895, %894 : vector<8x128xf32>
    %897 = arith.divf %895, %896 : vector<8x128xf32>
    %898 = vector.extract_strided_slice %878 {offsets = [0, 256], sizes = [8, 128], strides = [1, 1]} : vector<8x384xf32> to vector<8x128xf32>
    %899 = vector.extract_strided_slice %881 {offsets = [0, 256], sizes = [8, 128], strides = [1, 1]} : vector<8x384xf32> to vector<8x128xf32>
    %900 = arith.addf %899, %26 : vector<8x128xf32>
    %901 = arith.mulf %889, %900 : vector<8x128xf32>
    %902 = arith.addf %898, %901 : vector<8x128xf32>
    %903 = math.tanh %902 : vector<8x128xf32>
    %cst_253 = arith.constant 1.000000e+00 : f32
    %904 = vector.broadcast %cst_253 : f32 to vector<8x128xf32>
    %905 = arith.subf %904, %897 : vector<8x128xf32>
    %906 = arith.mulf %905, %903 : vector<8x128xf32>
    %907 = arith.mulf %897, %818 : vector<8x128xf32>
    %908 = arith.addf %906, %907 : vector<8x128xf32>
    %cst_254 = arith.constant dense<0.000000e+00> : vector<8xf32>
    %909 = vector.multi_reduction <add>, %908, %cst_254 [1] : vector<8x128xf32> to vector<8xf32>
    %910 = vector.shape_cast %909 : vector<8xf32> to vector<8x1xf32>
    %cst_255 = arith.constant 1.562500e-02 : f32
    %911 = vector.broadcast %cst_255 : f32 to vector<8x1xf32>
    %912 = arith.mulf %910, %911 : vector<8x1xf32>
    %913 = arith.mulf %908, %908 : vector<8x128xf32>
    %cst_256 = arith.constant dense<0.000000e+00> : vector<8xf32>
    %914 = vector.multi_reduction <add>, %913, %cst_256 [1] : vector<8x128xf32> to vector<8xf32>
    %915 = vector.shape_cast %914 : vector<8xf32> to vector<8x1xf32>
    %cst_257 = arith.constant 1.562500e-02 : f32
    %916 = vector.broadcast %cst_257 : f32 to vector<8x1xf32>
    %917 = arith.mulf %915, %916 : vector<8x1xf32>
    %918 = arith.mulf %912, %912 : vector<8x1xf32>
    %919 = arith.subf %917, %918 : vector<8x1xf32>
    %cst_258 = arith.constant 0.000000e+00 : f32
    %920 = vector.broadcast %cst_258 : f32 to vector<8x1xf32>
    %921 = arith.maximumf %919, %920 : vector<8x1xf32>
    %922 = vector.broadcast %912 : vector<8x1xf32> to vector<8x128xf32>
    %923 = arith.subf %908, %922 : vector<8x128xf32>
    %cst_259 = arith.constant 9.99999974E-6 : f32
    %924 = vector.broadcast %cst_259 : f32 to vector<8x1xf32>
    %925 = arith.addf %921, %924 : vector<8x1xf32>
    %926 = math.rsqrt %925 : vector<8x1xf32>
    %927 = vector.broadcast %926 : vector<8x1xf32> to vector<8x128xf32>
    %928 = arith.mulf %923, %927 : vector<8x128xf32>
    %929 = arith.mulf %928, %29 : vector<8x128xf32>
    %930 = arith.addf %929, %32 : vector<8x128xf32>
    %c8_i32 = arith.constant 8 : i32
    %c0_260 = arith.constant 0 : index
    %c0_261 = arith.constant 0 : index
    %931 = vector.load %arg18[%c0_260, %c0_261] : memref<8x128xf32, #tpu.memory_space<vmem>>, vector<8x128xf32>
    tpu.vector_store %arg18[%c0_260, %c0_261], %874 {strides = array<i32>} : memref<8x128xf32, #tpu.memory_space<vmem>>, vector<8x128xf32>,
    %c0_262 = arith.constant 0 : index
    %c0_263 = arith.constant 0 : index
    %932 = vector.load %arg19[%c0_262, %c0_263] : memref<8x128xf32, #tpu.memory_space<vmem>>, vector<8x128xf32>
    tpu.vector_store %arg19[%c0_262, %c0_263], %930 {strides = array<i32>} : memref<8x128xf32, #tpu.memory_space<vmem>>, vector<8x128xf32>,
    %c0_i32_264 = arith.constant 0 : i32
    %933 = arith.cmpi eq, %arg0, %c0_i32_264 : i32
    %934 = arith.extui %933 : i1 to i32
    %c0_i32_265 = arith.constant 0 : i32
    %935 = arith.cmpi ne, %934, %c0_i32_265 : i32
    scf.if %935 {
      %936 = arith.truncf %930 : vector<8x128xf32> to vector<8x128xbf16>
      %c0_266 = arith.constant 0 : index
      %c0_267 = arith.constant 0 : index
      %937 = vector.load %arg14[%c0_266, %c0_267] : memref<128x2xbf16, #tpu.memory_space<vmem>>, vector<128x2xbf16>
      %cst_268 = arith.constant dense<0.000000e+00> : vector<8x2xf32>
      %938 = tpu.matmul %936, %937, %cst_268 {dimension_numbers = #tpu.dot_dimension_numbers<[1], [0], [0], [1], [0, 0, 1, 1], [], []>} : vector<8x128xbf16>, vector<128x2xbf16>, vector<8x2xf32> -> vector<8x2xf32>
      %c0_269 = arith.constant 0 : index
      %c0_270 = arith.constant 0 : index
      %939 = vector.load %arg15[%c0_269, %c0_270] : memref<1x2xf32, #tpu.memory_space<vmem>>, vector<1x2xf32>
      %940 = vector.broadcast %939 : vector<1x2xf32> to vector<8x2xf32>
      %941 = arith.addf %938, %940 : vector<8x2xf32>
      %c0_271 = arith.constant 0 : index
      %c0_272 = arith.constant 0 : index
      %942 = vector.load %arg16[%c0_271, %c0_272] : memref<8x2xf32, #tpu.memory_space<vmem>>, vector<8x2xf32>
      tpu.vector_store %arg16[%c0_271, %c0_272], %941 {strides = array<i32>} : memref<8x2xf32, #tpu.memory_space<vmem>>, vector<8x2xf32>,
    } else {
    }
    return
  }
  func.func @transform_0(%arg0: i32) -> (i32, i32) {
    %c0_i32 = arith.constant 0 : i32
    %c0_i32_0 = arith.constant 0 : i32
    return %arg0, %c0_i32 : i32, i32
  }
  func.func @transform_1(%arg0: i32) -> (i32, i32) {
    %c0_i32 = arith.constant 0 : i32
    %c0_i32_0 = arith.constant 0 : i32
    %c0_i32_1 = arith.constant 0 : i32
    return %c0_i32, %c0_i32_0 : i32, i32
  }
  func.func @transform_2(%arg0: i32) -> (i32, i32) {
    %c0_i32 = arith.constant 0 : i32
    %c0_i32_0 = arith.constant 0 : i32
    %c0_i32_1 = arith.constant 0 : i32
    return %c0_i32, %c0_i32_0 : i32, i32
  }
  func.func @transform_3(%arg0: i32) -> (i32, i32) {
    %c0_i32 = arith.constant 0 : i32
    %c0_i32_0 = arith.constant 0 : i32
    %c0_i32_1 = arith.constant 0 : i32
    return %c0_i32, %c0_i32_0 : i32, i32
  }
  func.func @transform_4(%arg0: i32) -> (i32, i32) {
    %c0_i32 = arith.constant 0 : i32
    %c0_i32_0 = arith.constant 0 : i32
    %c0_i32_1 = arith.constant 0 : i32
    return %c0_i32, %c0_i32_0 : i32, i32
  }
  func.func @transform_5(%arg0: i32) -> (i32, i32) {
    %c0_i32 = arith.constant 0 : i32
    %c0_i32_0 = arith.constant 0 : i32
    %c0_i32_1 = arith.constant 0 : i32
    return %c0_i32, %c0_i32_0 : i32, i32
  }
  func.func @transform_6(%arg0: i32) -> (i32, i32) {
    %c0_i32 = arith.constant 0 : i32
    %c0_i32_0 = arith.constant 0 : i32
    %c0_i32_1 = arith.constant 0 : i32
    return %c0_i32, %c0_i32_0 : i32, i32
  }
  func.func @transform_7(%arg0: i32) -> (i32, i32) {
    %c0_i32 = arith.constant 0 : i32
    %c0_i32_0 = arith.constant 0 : i32
    %c0_i32_1 = arith.constant 0 : i32
    return %c0_i32, %c0_i32_0 : i32, i32
  }
  func.func @transform_8(%arg0: i32) -> (i32, i32) {
    %c0_i32 = arith.constant 0 : i32
    %c0_i32_0 = arith.constant 0 : i32
    %c0_i32_1 = arith.constant 0 : i32
    return %c0_i32, %c0_i32_0 : i32, i32
  }
  func.func @transform_9(%arg0: i32) -> (i32, i32) {
    %c0_i32 = arith.constant 0 : i32
    %c0_i32_0 = arith.constant 0 : i32
    %c0_i32_1 = arith.constant 0 : i32
    return %c0_i32, %c0_i32_0 : i32, i32
  }
  func.func @transform_10(%arg0: i32) -> (i32, i32) {
    %c0_i32 = arith.constant 0 : i32
    %c0_i32_0 = arith.constant 0 : i32
    %c0_i32_1 = arith.constant 0 : i32
    return %c0_i32, %c0_i32_0 : i32, i32
  }
  func.func @transform_11(%arg0: i32) -> (i32, i32) {
    %c0_i32 = arith.constant 0 : i32
    %c0_i32_0 = arith.constant 0 : i32
    %c0_i32_1 = arith.constant 0 : i32
    return %c0_i32, %c0_i32_0 : i32, i32
  }
  func.func @transform_12(%arg0: i32) -> (i32, i32) {
    %c0_i32 = arith.constant 0 : i32
    %c0_i32_0 = arith.constant 0 : i32
    %c0_i32_1 = arith.constant 0 : i32
    return %c0_i32, %c0_i32_0 : i32, i32
  }
  func.func @transform_13(%arg0: i32) -> (i32, i32) {
    %c0_i32 = arith.constant 0 : i32
    %c0_i32_0 = arith.constant 0 : i32
    %c0_i32_1 = arith.constant 0 : i32
    return %c0_i32, %c0_i32_0 : i32, i32
  }
  func.func @transform_14(%arg0: i32) -> (i32, i32) {
    %c0_i32 = arith.constant 0 : i32
    %c0_i32_0 = arith.constant 0 : i32
    %c0_i32_1 = arith.constant 0 : i32
    return %c0_i32, %c0_i32_0 : i32, i32
  }
  func.func @transform_15(%arg0: i32) -> (i32, i32) {
    %c0_i32 = arith.constant 0 : i32
    %c0_i32_0 = arith.constant 0 : i32
    %c0_i32_1 = arith.constant 0 : i32
    return %c0_i32, %c0_i32_0 : i32, i32
  }
}

</mosaic_0001>

<llo_original>
// kernel: tpu_custom_call.1
$region0: #{tpu_custom_call.1}
  #allocation0 [shape = 'u32[]', space=smem, size = 0x4, offset = 0x4, fixed_abs, tag = 'smem constant byte address 0x4 - core index']
  #allocation1 [shape = 'u32[144,128]{1,0:T(1,128)}', space=vmem, size = 0x12000, scoped, tag = 'internal scratch']
  #allocation2 [shape = 'bf16[8,8,384]{2,1,0:T(8,128)(2,1)}', space=vmem, size = 0xc000, scoped, tag = 'scratch operand']
  #allocation3 [shape = 'f32[8,128]{1,0:T(8,128)}', space=vmem, size = 0x1000, scoped, tag = 'scratch operand']
  #allocation4 [shape = 'f32[8,128]{1,0:T(8,128)}', space=vmem, size = 0x1000, scoped, tag = 'scratch operand']
  %s0 = inlined_call_operand.vmem [shape: bf16[64,16], index: 0, kind: input, shape index: {}]
  %s1 = inlined_call_operand.vmem [shape: bf16[16,384], index: 1, kind: input, shape index: {}]
  %s2 = inlined_call_operand.hbm [shape: bf16[128,384], index: 2, kind: input, shape index: {}]
  %s3 = inlined_call_operand.vmem [shape: f32[1,384], index: 3, kind: input, shape index: {}]
  %s4 = inlined_call_operand.vmem [shape: f32[1,128], index: 4, kind: input, shape index: {}]
  %s5 = inlined_call_operand.vmem [shape: f32[1,128], index: 5, kind: input, shape index: {}]
  %s6 = inlined_call_operand.vmem [shape: f32[1,128], index: 6, kind: input, shape index: {}]
  %s7 = inlined_call_operand.hbm [shape: bf16[128,384], index: 7, kind: input, shape index: {}]
  %s8 = inlined_call_operand.hbm [shape: bf16[128,384], index: 8, kind: input, shape index: {}]
  %s9 = inlined_call_operand.vmem [shape: f32[1,384], index: 9, kind: input, shape index: {}]
  %s10 = inlined_call_operand.vmem [shape: f32[1,128], index: 10, kind: input, shape index: {}]
  %s11 = inlined_call_operand.vmem [shape: f32[1,128], index: 11, kind: input, shape index: {}]
  %s12 = inlined_call_operand.vmem [shape: f32[1,128], index: 12, kind: input, shape index: {}]
  %s13 = inlined_call_operand.vmem [shape: bf16[128,2], index: 13, kind: input, shape index: {}]
  %s14 = inlined_call_operand.vmem [shape: f32[1,2], index: 14, kind: input, shape index: {}]
  %s15 = inlined_call_operand.vmem [shape: f32[8,2], index: 15, kind: output, shape index: {}]
  %s16 = sld [smem:[#allocation0]]
  $region90: #{tpu_custom_call.1} parent=0
    _
  %s18 = ssub.s32 1, %s16
  %s19 = scalar_select 0, %s18, %s16
  $region1: #{tpu_custom_call.1} parent=0
    #allocation5 [shape = 'u8[98304]{0}', space=vmem, size = 0x18000, scoped, tag = 'input window, operand 2, single buffered']
    #allocation6 [shape = 's32[1]{0}', space=sflag, size = 0x4, scoped, tag = 'scoped memory for tpu_custom_call.1']
    #allocation7 [shape = 'u8[98304]{0}', space=vmem, size = 0x18000, scoped, tag = 'input window, operand 7, single buffered']
    #allocation8 [shape = 's32[1]{0}', space=sflag, size = 0x4, scoped, tag = 'scoped memory for tpu_custom_call.1']
    #allocation9 [shape = 'u8[98304]{0}', space=vmem, size = 0x18000, scoped, tag = 'input window, operand 8, single buffered']
    %20 = vsyncpa [#allocation6], 0
    %21 = vsyncpa [#allocation8], 0
    // Predicated region
    $region2: #{tpu_custom_call.1} parent=1 // pred_check
      _
    $region3: #{tpu_custom_call.1} parent=1 // pred_check_branch
      %23 = sbr.rel (0) target = $region5
    $region4: #{tpu_custom_call.1} parent=1 // pred_region
      _
    $region5: #{tpu_custom_call.1} parent=1 // pred_fallthru
      _
    // Predicated region
    $region6: #{tpu_custom_call.1} parent=1 // pred_check
      _
    $region7: #{tpu_custom_call.1} parent=1 // pred_check_branch
      %25 = sbr.rel (0) target = $region9
    $region8: #{tpu_custom_call.1} parent=1 // pred_region
      _
    $region9: #{tpu_custom_call.1} parent=1 // pred_fallthru
      _
    // Predicated region
    $region10: #{tpu_custom_call.1} parent=1 // pred_check
      _
    $region11: #{tpu_custom_call.1} parent=1 // pred_check_branch
      %27 = sbr.rel (0) target = $region13
    $region12: #{tpu_custom_call.1} parent=1 // pred_region
      %s29 = ssub.s32 3072, 3072
      %30 = vsyncadd [#allocation6], %s29
      %s31 = sshll.u32 [#allocation5], 4
      %s32 = int_to_ptr.vmem [resolvable:$true] %s31
      %37 = dma.hbm_to_vmem [thread:$0]  %s2, 3072, %s32, [#allocation6], 192, 192, 12
    $region13: #{tpu_custom_call.1} parent=1 // pred_fallthru
      _
    // Predicated region
    $region14: #{tpu_custom_call.1} parent=1 // pred_check
      _
    $region15: #{tpu_custom_call.1} parent=1 // pred_check_branch
      %39 = sbr.rel (0) target = $region17
    $region16: #{tpu_custom_call.1} parent=1 // pred_region
      _
    $region17: #{tpu_custom_call.1} parent=1 // pred_fallthru
      _
    // Predicated region
    $region18: #{tpu_custom_call.1} parent=1 // pred_check
      _
    $region19: #{tpu_custom_call.1} parent=1 // pred_check_branch
      %41 = sbr.rel (0) target = $region21
    $region20: #{tpu_custom_call.1} parent=1 // pred_region
      _
    $region21: #{tpu_custom_call.1} parent=1 // pred_fallthru
      _
    // Predicated region
    $region22: #{tpu_custom_call.1} parent=1 // pred_check
      _
    $region23: #{tpu_custom_call.1} parent=1 // pred_check_branch
      %43 = sbr.rel (0) target = $region25
    $region24: #{tpu_custom_call.1} parent=1 // pred_region
      _
    $region25: #{tpu_custom_call.1} parent=1 // pred_fallthru
      _
    // Predicated region
    $region26: #{tpu_custom_call.1} parent=1 // pred_check
      _
    $region27: #{tpu_custom_call.1} parent=1 // pred_check_branch
      %45 = sbr.rel (0) target = $region29
    $region28: #{tpu_custom_call.1} parent=1 // pred_region
      _
    $region29: #{tpu_custom_call.1} parent=1 // pred_fallthru
      _
    // Predicated region
    $region30: #{tpu_custom_call.1} parent=1 // pred_check
      _
    $region31: #{tpu_custom_call.1} parent=1 // pred_check_branch
      %47 = sbr.rel (0) target = $region33
    $region32: #{tpu_custom_call.1} parent=1 // pred_region
      %s49 = ssub.s32 3072, 3072
      %50 = vsyncadd [#allocation8], %s49
      %s51 = sshll.u32 [#allocation7], 4
      %s52 = int_to_ptr.vmem [resolvable:$true] %s51
      %57 = dma.hbm_to_vmem [thread:$0]  %s7, 3072, %s52, [#allocation8], 192, 192, 12
    $region33: #{tpu_custom_call.1} parent=1 // pred_fallthru
      _
    // Predicated region
    $region34: #{tpu_custom_call.1} parent=1 // pred_check
      _
    $region35: #{tpu_custom_call.1} parent=1 // pred_check_branch
      %59 = sbr.rel (0) target = $region37
    $region36: #{tpu_custom_call.1} parent=1 // pred_region
      %s61 = ssub.s32 3072, 3072
      %62 = vsyncadd [#allocation8], %s61
      %s63 = sshll.u32 [#allocation9], 4
      %s64 = int_to_ptr.vmem [resolvable:$true] %s63
      %69 = dma.hbm_to_vmem [thread:$0]  %s8, 3072, %s64, [#allocation8], 192, 192, 12
    $region37: #{tpu_custom_call.1} parent=1 // pred_fallthru
      _
    // Predicated region
    $region38: #{tpu_custom_call.1} parent=1 // pred_check
      _
    $region39: #{tpu_custom_call.1} parent=1 // pred_check_branch
      %71 = sbr.rel (0) target = $region41
    $region40: #{tpu_custom_call.1} parent=1 // pred_region
      _
    $region41: #{tpu_custom_call.1} parent=1 // pred_fallthru
      _
    // Predicated region
    $region42: #{tpu_custom_call.1} parent=1 // pred_check
      _
    $region43: #{tpu_custom_call.1} parent=1 // pred_check_branch
      %73 = sbr.rel (0) target = $region45
    $region44: #{tpu_custom_call.1} parent=1 // pred_region
      _
    $region45: #{tpu_custom_call.1} parent=1 // pred_fallthru
      _
    // Predicated region
    $region46: #{tpu_custom_call.1} parent=1 // pred_check
      _
    $region47: #{tpu_custom_call.1} parent=1 // pred_check_branch
      %75 = sbr.rel (0) target = $region49
    $region48: #{tpu_custom_call.1} parent=1 // pred_region
      _
    $region49: #{tpu_custom_call.1} parent=1 // pred_fallthru
      _
    // Predicated region
    $region50: #{tpu_custom_call.1} parent=1 // pred_check
      _
    $region51: #{tpu_custom_call.1} parent=1 // pred_check_branch
      %77 = sbr.rel (0) target = $region53
    $region52: #{tpu_custom_call.1} parent=1 // pred_region
      _
    $region53: #{tpu_custom_call.1} parent=1 // pred_fallthru
      _
    // Predicated region
    $region54: #{tpu_custom_call.1} parent=1 // pred_check
      _
    $region55: #{tpu_custom_call.1} parent=1 // pred_check_branch
      %79 = sbr.rel (0) target = $region57
    $region56: #{tpu_custom_call.1} parent=1 // pred_region
      _
    $region57: #{tpu_custom_call.1} parent=1 // pred_fallthru
      _
    // Predicated region
    $region58: #{tpu_custom_call.1} parent=1 // pred_check
      _
    $region59: #{tpu_custom_call.1} parent=1 // pred_check_branch
      %81 = sbr.rel (0) target = $region61
    $region60: #{tpu_custom_call.1} parent=1 // pred_region
      _
    $region61: #{tpu_custom_call.1} parent=1 // pred_fallthru
      _
    // Predicated region
    $region62: #{tpu_custom_call.1} parent=1 // pred_check
      _
    $region63: #{tpu_custom_call.1} parent=1 // pred_check_branch
      %83 = sbr.rel (0) target = $region65
    $region64: #{tpu_custom_call.1} parent=1 // pred_region
      %84 = dma.done [#allocation6], 3072
    $region65: #{tpu_custom_call.1} parent=1 // pred_fallthru
      _
    // Predicated region
    $region66: #{tpu_custom_call.1} parent=1 // pred_check
      _
    $region67: #{tpu_custom_call.1} parent=1 // pred_check_branch
      %86 = sbr.rel (0) target = $region69
    $region68: #{tpu_custom_call.1} parent=1 // pred_region
      %87 = dma.done [#allocation8], 3072
    $region69: #{tpu_custom_call.1} parent=1 // pred_fallthru
      _
    // Predicated region
    $region70: #{tpu_custom_call.1} parent=1 // pred_check
      _
    $region71: #{tpu_custom_call.1} parent=1 // pred_check_branch
      %89 = sbr.rel (0) target = $region73
    $region72: #{tpu_custom_call.1} parent=1 // pred_region
      %90 = dma.done [#allocation8], 3072
    $region73: #{tpu_custom_call.1} parent=1 // pred_fallthru
      _
    %p92 = scmp.eq.s32.totalorder 0, 0
    // Predicated region
    $region74: #{tpu_custom_call.1} parent=1 // pred_check
      %p93 = pneg %p92
    $region75: #{tpu_custom_call.1} parent=1 // pred_check_branch
      %95 = sbr.rel (%p93) target = $region77
    $region76: #{tpu_custom_call.1} parent=1 // pred_region
      %96 = vst [vmem:[#allocation3] sm:$0xff] 0.0
      %97 = vst [vmem:[#allocation4] sm:$0xff] 0.0
    $region77: #{tpu_custom_call.1} parent=1 // pred_fallthru
      _
    %v98 = vld [vmem:[%s0] sm:$0xf]
    %v99 = vld [vmem:[%s0 + $0x4] sm:$0xf]
    %v100 = vld [vmem:[%s0 + $0x8] sm:$0xf]
    %v101 = vld [vmem:[%s0 + $0xc] sm:$0xf]
    %v102 = vld [vmem:[%s0 + $0x10] sm:$0xf]
    %v103 = vld [vmem:[%s0 + $0x14] sm:$0xf]
    %v104 = vld [vmem:[%s0 + $0x18] sm:$0xf]
    %v105 = vld [vmem:[%s0 + $0x1c] sm:$0xf]
    %v106 = vld [vmem:[%s1] sm:$0xff]
    %v107 = vld [vmem:[%s1 + $0x8] sm:$0xf]
    %v108 = vld [vmem:[%s1 + $0xc] sm:$0xff]
    %v109 = vld [vmem:[%s1 + $0x14] sm:$0xf]
    %v110 = vld [vmem:[%s3] sm:$0x7]
    %v112 = vlaneseq
    %v113 = vshrl.u32 %v112, 7
    %v114 = vsub.s32 0, %v113
    %v115 = vrot.slane %v110, %v114
    %v116 = vlaneseq
    %v117 = vshrl.u32 %v116, 7
    %v118 = vsub.s32 1, %v117
    %v119 = vrot.slane %v110, %v118
    %v120 = vlaneseq
    %v121 = vshrl.u32 %v120, 7
    %v122 = vsub.s32 2, %v121
    %v123 = vrot.slane %v110, %v122
    %v135 = vunpack.c.l.b16 %v98
    %v136 = vunpack.c.l.b16 %v99
    %v137 = vunpack.c.l.b16 %v100
    %v138 = vunpack.c.l.b16 %v101
    %v139 = vunpack.c.l.b16 %v102
    %v140 = vunpack.c.l.b16 %v103
    %v141 = vunpack.c.l.b16 %v104
    %v142 = vunpack.c.l.b16 %v105
    %v143 = vpack.c.b16 %v136, %v135
    %v144 = vpack.c.b16 %v138, %v137
    %v145 = vpack.c.b16 %v140, %v139
    %v146 = vpack.c.b16 %v142, %v141
    %v151 = vunpack.c.l.b16 %v106
    %v152 = vunpack.c.h.b16 %v106
    %v153 = vunpack.c.l.b16 %v107
    %v154 = vunpack.c.l.b16 %v108
    %v155 = vunpack.c.h.b16 %v108
    %v156 = vunpack.c.l.b16 %v109
    %v157 = vpack.c.b16 %v154, %v151
    %v158 = vpack.c.b16 %v155, %v152
    %v159 = vpack.c.b16 %v156, %v153
    %vm163 = vcmask 130048
    %v165 = vsel %vm163, %v143, 0
    %v168 = vsel %vm163, %v144, 0
    %v171 = vsel %vm163, %v145, 0
    %v174 = vsel %vm163, %v146, 0
    %176 = vmatprep.subr.bf16.mxu0 %v158
    %177 = vmatpush1.bf16.msra.mxu0 %v157
    %178 = vmatprep.subr.bf16.mxu0 0
    %179 = vmatpush1.bf16.msra.mxu0 0
    %180 = vmatprep.subr.bf16.mxu0 0
    %181 = vmatpush1.bf16.msra.mxu0 0
    %182 = vmatprep.subr.bf16.mxu0 0
    %183 = vmatpush1.bf16.msra.mxu0 0
    %184 = vmatprep.subr.bf16.mxu0 0
    %185 = vmatpush1.bf16.msra.mxu0 0
    %186 = vmatprep.subr.bf16.mxu0 0
    %187 = vmatpush1.bf16.msra.mxu0 0
    %188 = vmatprep.subr.bf16.mxu0 0
    %189 = vmatpush1.bf16.msra.mxu0 0
    %190 = vmatprep.subr.bf16.mxu0 0
    %191 = vmatpush1.bf16.msra.mxu0 0
    %192 = vmatprep.subr.bf16.mxu0 0
    %193 = vmatpush1.bf16.msra.mxu0 0
    %194 = vmatprep.subr.bf16.mxu0 0
    %195 = vmatpush1.bf16.msra.mxu0 0
    %196 = vmatprep.subr.bf16.mxu0 0
    %197 = vmatpush1.bf16.msra.mxu0 0
    %198 = vmatprep.subr.bf16.mxu0 0
    %199 = vmatpush1.bf16.msra.mxu0 0
    %200 = vmatprep.subr.bf16.mxu0 0
    %201 = vmatpush1.bf16.msra.mxu0 0
    %202 = vmatprep.subr.bf16.mxu0 0
    %203 = vmatpush1.bf16.msra.mxu0 0
    %204 = vmatprep.subr.bf16.mxu0 0
    %205 = vmatpush1.bf16.msra.mxu0 0
    %206 = vmatprep.subr.bf16.mxu0 0
    %207 = vmatpush1.bf16.msra.mxu0 0
    %208 = vmatprep.mubr.bf16.mxu0 0
    %209 = vmatmul.mubr.bf16.gmra.mrb[0].mxu0 %v165
    %v210 = vpop.f32.mrb[0].mxu0
    %v211 = vadd.f32 %v115, %v210
    %v212 = vpop.f32.mrb[0].mxu0
    %v213 = vadd.f32 %v119, %v212
    %v214 = vpop.f32.mrb[0].mxu0
    %v215 = vadd.f32 %v115, %v214
    %v216 = vpop.f32.mrb[0].mxu0
    %v217 = vadd.f32 %v119, %v216
    %218 = vmatprep.mubr.bf16.mxu0 0
    %219 = vmatmul.mubr.bf16.gmra.mrb[0].mxu0 %v168
    %v220 = vpop.f32.mrb[0].mxu0
    %v221 = vadd.f32 %v115, %v220
    %v222 = vpop.f32.mrb[0].mxu0
    %v223 = vadd.f32 %v119, %v222
    %v224 = vpop.f32.mrb[0].mxu0
    %v225 = vadd.f32 %v115, %v224
    %v226 = vpop.f32.mrb[0].mxu0
    %v227 = vadd.f32 %v119, %v226
    %228 = vmatprep.mubr.bf16.mxu0 0
    %229 = vmatmul.mubr.bf16.gmra.mrb[0].mxu0 %v171
    %v230 = vpop.f32.mrb[0].mxu0
    %v231 = vadd.f32 %v115, %v230
    %v232 = vpop.f32.mrb[0].mxu0
    %v233 = vadd.f32 %v119, %v232
    %v234 = vpop.f32.mrb[0].mxu0
    %v235 = vadd.f32 %v115, %v234
    %v236 = vpop.f32.mrb[0].mxu0
    %v237 = vadd.f32 %v119, %v236
    %238 = vmatprep.mubr.bf16.mxu0 0
    %239 = vmatmul.mubr.bf16.gmra.mrb[0].mxu0 %v174
    %v240 = vpop.f32.mrb[0].mxu0
    %v241 = vadd.f32 %v115, %v240
    %v242 = vpop.f32.mrb[0].mxu0
    %v243 = vadd.f32 %v119, %v242
    %v244 = vpop.f32.mrb[0].mxu0
    %v245 = vadd.f32 %v115, %v244
    %v246 = vpop.f32.mrb[0].mxu0
    %v247 = vadd.f32 %v119, %v246
    %248 = vdwg.mxu0
    %249 = vmatprep.subr.bf16.mxu0 0
    %250 = vmatpush1.bf16.msra.mxu0 %v159
    %251 = vmatprep.subr.bf16.mxu0 0
    %252 = vmatpush1.bf16.msra.mxu0 0
    %253 = vmatprep.subr.bf16.mxu0 0
    %254 = vmatpush1.bf16.msra.mxu0 0
    %255 = vmatprep.subr.bf16.mxu0 0
    %256 = vmatpush1.bf16.msra.mxu0 0
    %257 = vmatprep.subr.bf16.mxu0 0
    %258 = vmatpush1.bf16.msra.mxu0 0
    %259 = vmatprep.subr.bf16.mxu0 0
    %260 = vmatpush1.bf16.msra.mxu0 0
    %261 = vmatprep.subr.bf16.mxu0 0
    %262 = vmatpush1.bf16.msra.mxu0 0
    %263 = vmatprep.subr.bf16.mxu0 0
    %264 = vmatpush1.bf16.msra.mxu0 0
    %265 = vmatprep.subr.bf16.mxu0 0
    %266 = vmatpush1.bf16.msra.mxu0 0
    %267 = vmatprep.subr.bf16.mxu0 0
    %268 = vmatpush1.bf16.msra.mxu0 0
    %269 = vmatprep.subr.bf16.mxu0 0
    %270 = vmatpush1.bf16.msra.mxu0 0
    %271 = vmatprep.subr.bf16.mxu0 0
    %272 = vmatpush1.bf16.msra.mxu0 0
    %273 = vmatprep.subr.bf16.mxu0 0
    %274 = vmatpush1.bf16.msra.mxu0 0
    %275 = vmatprep.subr.bf16.mxu0 0
    %276 = vmatpush1.bf16.msra.mxu0 0
    %277 = vmatprep.subr.bf16.mxu0 0
    %278 = vmatpush1.bf16.msra.mxu0 0
    %279 = vmatprep.subr.bf16.mxu0 0
    %280 = vmatpush1.bf16.msra.mxu0 0
    %281 = vmatprep.mubr.bf16.mxu0 0
    %282 = vmatmul.mubr.bf16.gmra.mrb[0].mxu0 %v165
    %v283 = vpop.f32.mrb[0].mxu0
    %v284 = vadd.f32 %v123, %v283
    %v285 = vpop.f32.mrb[0].mxu0
    %v286 = vpop.f32.mrb[0].mxu0
    %v287 = vadd.f32 %v123, %v286
    %v288 = vpop.f32.mrb[0].mxu0
    %289 = vmatprep.mubr.bf16.mxu0 0
    %290 = vmatmul.mubr.bf16.gmra.mrb[0].mxu0 %v168
    %v291 = vpop.f32.mrb[0].mxu0
    %v292 = vadd.f32 %v123, %v291
    %v293 = vpop.f32.mrb[0].mxu0
    %v294 = vpop.f32.mrb[0].mxu0
    %v295 = vadd.f32 %v123, %v294
    %v296 = vpop.f32.mrb[0].mxu0
    %297 = vmatprep.mubr.bf16.mxu0 0
    %298 = vmatmul.mubr.bf16.gmra.mrb[0].mxu0 %v171
    %v299 = vpop.f32.mrb[0].mxu0
    %v300 = vadd.f32 %v123, %v299
    %v301 = vpop.f32.mrb[0].mxu0
    %v302 = vpop.f32.mrb[0].mxu0
    %v303 = vadd.f32 %v123, %v302
    %v304 = vpop.f32.mrb[0].mxu0
    %305 = vmatprep.mubr.bf16.mxu0 0
    %306 = vmatmul.mubr.bf16.gmra.mrb[0].mxu0 %v174
    %v307 = vpop.f32.mrb[0].mxu0
    %v308 = vadd.f32 %v123, %v307
    %v309 = vpop.f32.mrb[0].mxu0
    %v310 = vpop.f32.mrb[0].mxu0
    %v311 = vadd.f32 %v123, %v310
    %v312 = vpop.f32.mrb[0].mxu0
    %313 = vdwg.mxu0
    %v314 = vpack.c.bf16 %v211, %v211
    %v315 = vpack.c.bf16 %v213, %v213
    %v316 = vpack.c.bf16 %v284, %v284
    %v317 = vpack.c.bf16 %v215, %v215
    %v318 = vpack.c.bf16 %v217, %v217
    %v319 = vpack.c.bf16 %v287, %v287
    %v320 = vpack.c.bf16 %v221, %v221
    %v321 = vpack.c.bf16 %v223, %v223
    %v322 = vpack.c.bf16 %v292, %v292
    %v323 = vpack.c.bf16 %v225, %v225
    %v324 = vpack.c.bf16 %v227, %v227
    %v325 = vpack.c.bf16 %v295, %v295
    %v326 = vpack.c.bf16 %v231, %v231
    %v327 = vpack.c.bf16 %v233, %v233
    %v328 = vpack.c.bf16 %v300, %v300
    %v329 = vpack.c.bf16 %v235, %v235
    %v330 = vpack.c.bf16 %v237, %v237
    %v331 = vpack.c.bf16 %v303, %v303
    %v332 = vpack.c.bf16 %v241, %v241
    %v333 = vpack.c.bf16 %v243, %v243
    %v334 = vpack.c.bf16 %v308, %v308
    %v335 = vpack.c.bf16 %v245, %v245
    %v336 = vpack.c.bf16 %v247, %v247
    %v337 = vpack.c.bf16 %v311, %v311
    %v362 = vunpack.c.l.b16 %v314
    %v363 = vunpack.c.l.b16 %v315
    %v364 = vunpack.c.l.b16 %v316
    %v365 = vunpack.c.l.b16 %v317
    %v366 = vunpack.c.l.b16 %v318
    %v367 = vunpack.c.l.b16 %v319
    %v368 = vunpack.c.l.b16 %v320
    %v369 = vunpack.c.l.b16 %v321
    %v370 = vunpack.c.l.b16 %v322
    %v371 = vunpack.c.l.b16 %v323
    %v372 = vunpack.c.l.b16 %v324
    %v373 = vunpack.c.l.b16 %v325
    %v374 = vunpack.c.l.b16 %v326
    %v375 = vunpack.c.l.b16 %v327
    %v376 = vunpack.c.l.b16 %v328
    %v377 = vunpack.c.l.b16 %v329
    %v378 = vunpack.c.l.b16 %v330
    %v379 = vunpack.c.l.b16 %v331
    %v380 = vunpack.c.l.b16 %v332
    %v381 = vunpack.c.l.b16 %v333
    %v382 = vunpack.c.l.b16 %v334
    %v383 = vunpack.c.l.b16 %v335
    %v384 = vunpack.c.l.b16 %v336
    %v385 = vunpack.c.l.b16 %v337
    %v386 = vpack.c.b16 %v363, %v362
    %v387 = vpack.c.b16 %v364, %v364
    %v388 = vpack.c.b16 %v366, %v365
    %v389 = vpack.c.b16 %v367, %v367
    %v390 = vpack.c.b16 %v369, %v368
    %v391 = vpack.c.b16 %v370, %v370
    %v392 = vpack.c.b16 %v372, %v371
    %v393 = vpack.c.b16 %v373, %v373
    %v394 = vpack.c.b16 %v375, %v374
    %v395 = vpack.c.b16 %v376, %v376
    %v396 = vpack.c.b16 %v378, %v377
    %v397 = vpack.c.b16 %v379, %v379
    %v398 = vpack.c.b16 %v381, %v380
    %v399 = vpack.c.b16 %v382, %v382
    %v400 = vpack.c.b16 %v384, %v383
    %v401 = vpack.c.b16 %v385, %v385
    %418 = vst [vmem:[#allocation2] sm:$0xff] %v386
    %419 = vst [vmem:[#allocation2 + $0x8] sm:$0xf] %v387
    %420 = vst [vmem:[#allocation2 + $0xc] sm:$0xff] %v388
    %421 = vst [vmem:[#allocation2 + $0x14] sm:$0xf] %v389
    %422 = vst [vmem:[#allocation2 + $0x18] sm:$0xff] %v390
    %423 = vst [vmem:[#allocation2 + $0x20] sm:$0xf] %v391
    %424 = vst [vmem:[#allocation2 + $0x24] sm:$0xff] %v392
    %425 = vst [vmem:[#allocation2 + $0x2c] sm:$0xf] %v393
    %426 = vst [vmem:[#allocation2 + $0x30] sm:$0xff] %v394
    %427 = vst [vmem:[#allocation2 + $0x38] sm:$0xf] %v395
    %428 = vst [vmem:[#allocation2 + $0x3c] sm:$0xff] %v396
    %429 = vst [vmem:[#allocation2 + $0x44] sm:$0xf] %v397
    %430 = vst [vmem:[#allocation2 + $0x48] sm:$0xff] %v398
    %431 = vst [vmem:[#allocation2 + $0x50] sm:$0xf] %v399
    %432 = vst [vmem:[#allocation2 + $0x54] sm:$0xff] %v400
    %433 = vst [vmem:[#allocation2 + $0x5c] sm:$0xf] %v401
    %v434 = vld [vmem:[%s4] sm:$0x1]
    %v436 = vlaneseq
    %v437 = vshrl.u32 %v436, 7
    %v438 = vsub.s32 0, %v437
    %v439 = vrot.slane %v434, %v438
    %v441 = vld [vmem:[%s5] sm:$0x1]
    %v443 = vlaneseq
    %v444 = vshrl.u32 %v443, 7
    %v445 = vsub.s32 0, %v444
    %v446 = vrot.slane %v441, %v445
    %v448 = vld [vmem:[%s6] sm:$0x1]
    %v450 = vlaneseq
    %v451 = vshrl.u32 %v450, 7
    %v452 = vsub.s32 0, %v451
    %v453 = vrot.slane %v448, %v452
    %v455 = vld [vmem:[%s9] sm:$0x7]
    %v457 = vlaneseq
    %v458 = vshrl.u32 %v457, 7
    %v459 = vsub.s32 0, %v458
    %v460 = vrot.slane %v455, %v459
    %v461 = vlaneseq
    %v462 = vshrl.u32 %v461, 7
    %v463 = vsub.s32 1, %v462
    %v464 = vrot.slane %v455, %v463
    %v465 = vlaneseq
    %v466 = vshrl.u32 %v465, 7
    %v467 = vsub.s32 2, %v466
    %v468 = vrot.slane %v455, %v467
    %v472 = vld [vmem:[%s10] sm:$0x1]
    %v474 = vlaneseq
    %v475 = vshrl.u32 %v474, 7
    %v476 = vsub.s32 0, %v475
    %v477 = vrot.slane %v472, %v476
    %v479 = vld [vmem:[%s11] sm:$0x1]
    %v481 = vlaneseq
    %v482 = vshrl.u32 %v481, 7
    %v483 = vsub.s32 0, %v482
    %v484 = vrot.slane %v479, %v483
    %v486 = vld [vmem:[%s12] sm:$0x1]
    %v488 = vlaneseq
    %v489 = vshrl.u32 %v488, 7
    %v490 = vsub.s32 0, %v489
    %v491 = vrot.slane %v486, %v490
    %v493 = vld [vmem:[#allocation3] sm:$0xff]
    %v494 = vld [vmem:[#allocation4] sm:$0xff]
    %v495 = vld [vmem:[#allocation2] sm:$0xff]
    %v496 = vld [vmem:[#allocation2 + $0x8] sm:$0xf]
    %v497 = vunpack.c.l.bf16 %v495
    %v498 = vunpack.c.h.bf16 %v495
    %v499 = vunpack.c.l.bf16 %v496
    %v500 = vpack.c.bf16 %v493, %v493
    %v501 = vld [vmem:[#allocation5] sm:$0xff]
    %v502 = vld [vmem:[#allocation5 + $0x8] sm:$0xf]
    %v503 = vld [vmem:[#allocation5 + $0xc] sm:$0xff]
    %v504 = vld [vmem:[#allocation5 + $0x14] sm:$0xf]
    %v505 = vld [vmem:[#allocation5 + $0x18] sm:$0xff]
    %v506 = vld [vmem:[#allocation5 + $0x20] sm:$0xf]
    %v507 = vld [vmem:[#allocation5 + $0x24] sm:$0xff]
    %v508 = vld [vmem:[#allocation5 + $0x2c] sm:$0xf]
    %v509 = vld [vmem:[#allocation5 + $0x30] sm:$0xff]
    %v510 = vld [vmem:[#allocation5 + $0x38] sm:$0xf]
    %v511 = vld [vmem:[#allocation5 + $0x3c] sm:$0xff]
    %v512 = vld [vmem:[#allocation5 + $0x44] sm:$0xf]
    %v513 = vld [vmem:[#allocation5 + $0x48] sm:$0xff]
    %v514 = vld [vmem:[#allocation5 + $0x50] sm:$0xf]
    %v515 = vld [vmem:[#allocation5 + $0x54] sm:$0xff]
    %v516 = vld [vmem:[#allocation5 + $0x5c] sm:$0xf]
    %v517 = vld [vmem:[#allocation5 + $0x60] sm:$0xff]
    %v518 = vld [vmem:[#allocation5 + $0x68] sm:$0xf]
    %v519 = vld [vmem:[#allocation5 + $0x6c] sm:$0xff]
    %v520 = vld [vmem:[#allocation5 + $0x74] sm:$0xf]
    %v521 = vld [vmem:[#allocation5 + $0x78] sm:$0xff]
    %v522 = vld [vmem:[#allocation5 + $0x80] sm:$0xf]
    %v523 = vld [vmem:[#allocation5 + $0x84] sm:$0xff]
    %v524 = vld [vmem:[#allocation5 + $0x8c] sm:$0xf]
    %v525 = vld [vmem:[#allocation5 + $0x90] sm:$0xff]
    %v526 = vld [vmem:[#allocation5 + $0x98] sm:$0xf]
    %v527 = vld [vmem:[#allocation5 + $0x9c] sm:$0xff]
    %v528 = vld [vmem:[#allocation5 + $0xa4] sm:$0xf]
    %v529 = vld [vmem:[#allocation5 + $0xa8] sm:$0xff]
    %v530 = vld [vmem:[#allocation5 + $0xb0] sm:$0xf]
    %v531 = vld [vmem:[#allocation5 + $0xb4] sm:$0xff]
    %v532 = vld [vmem:[#allocation5 + $0xbc] sm:$0xf]
    %v565 = vunpack.c.l.b16 %v501
    %v566 = vunpack.c.h.b16 %v501
    %v567 = vunpack.c.l.b16 %v502
    %v568 = vunpack.c.l.b16 %v503
    %v569 = vunpack.c.h.b16 %v503
    %v570 = vunpack.c.l.b16 %v504
    %v571 = vunpack.c.l.b16 %v505
    %v572 = vunpack.c.h.b16 %v505
    %v573 = vunpack.c.l.b16 %v506
    %v574 = vunpack.c.l.b16 %v507
    %v575 = vunpack.c.h.b16 %v507
    %v576 = vunpack.c.l.b16 %v508
    %v577 = vunpack.c.l.b16 %v509
    %v578 = vunpack.c.h.b16 %v509
    %v579 = vunpack.c.l.b16 %v510
    %v580 = vunpack.c.l.b16 %v511
    %v581 = vunpack.c.h.b16 %v511
    %v582 = vunpack.c.l.b16 %v512
    %v583 = vunpack.c.l.b16 %v513
    %v584 = vunpack.c.h.b16 %v513
    %v585 = vunpack.c.l.b16 %v514
    %v586 = vunpack.c.l.b16 %v515
    %v587 = vunpack.c.h.b16 %v515
    %v588 = vunpack.c.l.b16 %v516
    %v589 = vunpack.c.l.b16 %v517
    %v590 = vunpack.c.h.b16 %v517
    %v591 = vunpack.c.l.b16 %v518
    %v592 = vunpack.c.l.b16 %v519
    %v593 = vunpack.c.h.b16 %v519
    %v594 = vunpack.c.l.b16 %v520
    %v595 = vunpack.c.l.b16 %v521
    %v596 = vunpack.c.h.b16 %v521
    %v597 = vunpack.c.l.b16 %v522
    %v598 = vunpack.c.l.b16 %v523
    %v599 = vunpack.c.h.b16 %v523
    %v600 = vunpack.c.l.b16 %v524
    %v601 = vunpack.c.l.b16 %v525
    %v602 = vunpack.c.h.b16 %v525
    %v603 = vunpack.c.l.b16 %v526
    %v604 = vunpack.c.l.b16 %v527
    %v605 = vunpack.c.h.b16 %v527
    %v606 = vunpack.c.l.b16 %v528
    %v607 = vunpack.c.l.b16 %v529
    %v608 = vunpack.c.h.b16 %v529
    %v609 = vunpack.c.l.b16 %v530
    %v610 = vunpack.c.l.b16 %v531
    %v611 = vunpack.c.h.b16 %v531
    %v612 = vunpack.c.l.b16 %v532
    %v613 = vpack.c.b16 %v568, %v565
    %v614 = vpack.c.b16 %v569, %v566
    %v615 = vpack.c.b16 %v570, %v567
    %v616 = vpack.c.b16 %v574, %v571
    %v617 = vpack.c.b16 %v575, %v572
    %v618 = vpack.c.b16 %v576, %v573
    %v619 = vpack.c.b16 %v580, %v577
    %v620 = vpack.c.b16 %v581, %v578
    %v621 = vpack.c.b16 %v582, %v579
    %v622 = vpack.c.b16 %v586, %v583
    %v623 = vpack.c.b16 %v587, %v584
    %v624 = vpack.c.b16 %v588, %v585
    %v625 = vpack.c.b16 %v592, %v589
    %v626 = vpack.c.b16 %v593, %v590
    %v627 = vpack.c.b16 %v594, %v591
    %v628 = vpack.c.b16 %v598, %v595
    %v629 = vpack.c.b16 %v599, %v596
    %v630 = vpack.c.b16 %v600, %v597
    %v631 = vpack.c.b16 %v604, %v601
    %v632 = vpack.c.b16 %v605, %v602
    %v633 = vpack.c.b16 %v606, %v603
    %v634 = vpack.c.b16 %v610, %v607
    %v635 = vpack.c.b16 %v611, %v608
    %v636 = vpack.c.b16 %v612, %v609
    %661 = vmatprep.subr.bf16.mxu0 %v614
    %662 = vmatpush1.bf16.msra.mxu0 %v613
    %663 = vmatprep.subr.bf16.mxu0 %v617
    %664 = vmatpush1.bf16.msra.mxu0 %v616
    %665 = vmatprep.subr.bf16.mxu0 %v620
    %666 = vmatpush1.bf16.msra.mxu0 %v619
    %667 = vmatprep.subr.bf16.mxu0 %v623
    %668 = vmatpush1.bf16.msra.mxu0 %v622
    %669 = vmatprep.subr.bf16.mxu0 %v626
    %670 = vmatpush1.bf16.msra.mxu0 %v625
    %671 = vmatprep.subr.bf16.mxu0 %v629
    %672 = vmatpush1.bf16.msra.mxu0 %v628
    %673 = vmatprep.subr.bf16.mxu0 %v632
    %674 = vmatpush1.bf16.msra.mxu0 %v631
    %675 = vmatprep.subr.bf16.mxu0 %v635
    %676 = vmatpush1.bf16.msra.mxu0 %v634
    %677 = vmatprep.subr.bf16.mxu0 0
    %678 = vmatpush1.bf16.msra.mxu0 0
    %679 = vmatprep.subr.bf16.mxu0 0
    %680 = vmatpush1.bf16.msra.mxu0 0
    %681 = vmatprep.subr.bf16.mxu0 0
    %682 = vmatpush1.bf16.msra.mxu0 0
    %683 = vmatprep.subr.bf16.mxu0 0
    %684 = vmatpush1.bf16.msra.mxu0 0
    %685 = vmatprep.subr.bf16.mxu0 0
    %686 = vmatpush1.bf16.msra.mxu0 0
    %687 = vmatprep.subr.bf16.mxu0 0
    %688 = vmatpush1.bf16.msra.mxu0 0
    %689 = vmatprep.subr.bf16.mxu0 0
    %690 = vmatpush1.bf16.msra.mxu0 0
    %691 = vmatprep.subr.bf16.mxu0 0
    %692 = vmatpush1.bf16.msra.mxu0 0
    %693 = vmatprep.mubr.bf16.mxu0 0
    %694 = vmatmul.mubr.bf16.gmra.mrb[0].mxu0 %v500
    %v695 = vpop.f32.mrb[0].mxu0
    %v696 = vadd.f32 0.0, %v695
    %v697 = vpop.f32.mrb[0].mxu0
    %v698 = vadd.f32 0.0, %v697
    %v699 = vpop.f32.mrb[0].mxu0
    %v700 = vpop.f32.mrb[0].mxu0
    %701 = vdwg.mxu0
    %702 = vmatprep.subr.bf16.mxu0 0
    %703 = vmatpush1.bf16.msra.mxu0 %v615
    %704 = vmatprep.subr.bf16.mxu0 0
    %705 = vmatpush1.bf16.msra.mxu0 %v618
    %706 = vmatprep.subr.bf16.mxu0 0
    %707 = vmatpush1.bf16.msra.mxu0 %v621
    %708 = vmatprep.subr.bf16.mxu0 0
    %709 = vmatpush1.bf16.msra.mxu0 %v624
    %710 = vmatprep.subr.bf16.mxu0 0
    %711 = vmatpush1.bf16.msra.mxu0 %v627
    %712 = vmatprep.subr.bf16.mxu0 0
    %713 = vmatpush1.bf16.msra.mxu0 %v630
    %714 = vmatprep.subr.bf16.mxu0 0
    %715 = vmatpush1.bf16.msra.mxu0 %v633
    %716 = vmatprep.subr.bf16.mxu0 0
    %717 = vmatpush1.bf16.msra.mxu0 %v636
    %718 = vmatprep.subr.bf16.mxu0 0
    %719 = vmatpush1.bf16.msra.mxu0 0
    %720 = vmatprep.subr.bf16.mxu0 0
    %721 = vmatpush1.bf16.msra.mxu0 0
    %722 = vmatprep.subr.bf16.mxu0 0
    %723 = vmatpush1.bf16.msra.mxu0 0
    %724 = vmatprep.subr.bf16.mxu0 0
    %725 = vmatpush1.bf16.msra.mxu0 0
    %726 = vmatprep.subr.bf16.mxu0 0
    %727 = vmatpush1.bf16.msra.mxu0 0
    %728 = vmatprep.subr.bf16.mxu0 0
    %729 = vmatpush1.bf16.msra.mxu0 0
    %730 = vmatprep.subr.bf16.mxu0 0
    %731 = vmatpush1.bf16.msra.mxu0 0
    %732 = vmatprep.subr.bf16.mxu0 0
    %733 = vmatpush1.bf16.msra.mxu0 0
    %734 = vmatprep.mubr.bf16.mxu0 0
    %735 = vmatmul.mubr.bf16.gmra.mrb[0].mxu0 %v500
    %v736 = vpop.f32.mrb[0].mxu0
    %v737 = vadd.f32 0.0, %v736
    %v738 = vpop.f32.mrb[0].mxu0
    %v739 = vpop.f32.mrb[0].mxu0
    %v740 = vpop.f32.mrb[0].mxu0
    %741 = vdwg.mxu0
    %v742 = vadd.f32 %v497, %v696
    %v743 = vxor.u32 %v742, 2147483648
    %v744 = vmul.f32 %v743, 1.442695
    %v745 = vpow.pop %v744
    %v746 = vadd.f32 %v745, 1.0
    %v747 = vrcp.pop %v746
    %v748 = vmul.f32 1.0, %v747
    %v749 = vadd.f32 %v498, %v698
    %v750 = vxor.u32 %v749, 2147483648
    %v751 = vmul.f32 %v750, 1.442695
    %v752 = vpow.pop %v751
    %v753 = vadd.f32 %v752, 1.0
    %v754 = vrcp.pop %v753
    %v755 = vmul.f32 1.0, %v754
    %v756 = vadd.f32 %v737, %v439
    %v757 = vmul.f32 %v748, %v756
    %v758 = vadd.f32 %v499, %v757
    %v759 = vtanh.pop %v758
    %v760 = vsub.f32 1.0, %v755
    %v761 = vmul.f32 %v760, %v759
    %v762 = vmul.f32 %v755, %v493
    %v763 = vadd.f32 %v761, %v762
    %764 = vadd.xlane.f32.xlu0 %v763
    %v765 = vpop.xlane.xlu0 %764
    %v766 = vmul.f32 %v765, 0.0078125
    %v767 = vmul.f32 %v763, %v763
    %768 = vadd.xlane.f32.xlu0 %v767
    %v769 = vpop.xlane.xlu0 %768
    %v770 = vmul.f32 %v769, 0.0078125
    %v771 = vmul.f32 %v766, %v766
    %v772 = vsub.f32 %v770, %v771
    %v773 = vmax.f32 %v772, 0.0
    %v774 = vsub.f32 %v763, %v766
    %v775 = vadd.f32 %v773, 1e-05
    %v776 = vrsqrt.pop %v775
    %v777 = vmul.f32 %v774, %v776
    %v778 = vmul.f32 %v777, %v446
    %v779 = vadd.f32 %v778, %v453
    %v780 = vpack.c.bf16 %v779, %v779
    %v781 = vld [vmem:[#allocation7] sm:$0xff]
    %v782 = vld [vmem:[#allocation7 + $0x8] sm:$0xf]
    %v783 = vld [vmem:[#allocation7 + $0xc] sm:$0xff]
    %v784 = vld [vmem:[#allocation7 + $0x14] sm:$0xf]
    %v785 = vld [vmem:[#allocation7 + $0x18] sm:$0xff]
    %v786 = vld [vmem:[#allocation7 + $0x20] sm:$0xf]
    %v787 = vld [vmem:[#allocation7 + $0x24] sm:$0xff]
    %v788 = vld [vmem:[#allocation7 + $0x2c] sm:$0xf]
    %v789 = vld [vmem:[#allocation7 + $0x30] sm:$0xff]
    %v790 = vld [vmem:[#allocation7 + $0x38] sm:$0xf]
    %v791 = vld [vmem:[#allocation7 + $0x3c] sm:$0xff]
    %v792 = vld [vmem:[#allocation7 + $0x44] sm:$0xf]
    %v793 = vld [vmem:[#allocation7 + $0x48] sm:$0xff]
    %v794 = vld [vmem:[#allocation7 + $0x50] sm:$0xf]
    %v795 = vld [vmem:[#allocation7 + $0x54] sm:$0xff]
    %v796 = vld [vmem:[#allocation7 + $0x5c] sm:$0xf]
    %v797 = vld [vmem:[#allocation7 + $0x60] sm:$0xff]
    %v798 = vld [vmem:[#allocation7 + $0x68] sm:$0xf]
    %v799 = vld [vmem:[#allocation7 + $0x6c] sm:$0xff]
    %v800 = vld [vmem:[#allocation7 + $0x74] sm:$0xf]
    %v801 = vld [vmem:[#allocation7 + $0x78] sm:$0xff]
    %v802 = vld [vmem:[#allocation7 + $0x80] sm:$0xf]
    %v803 = vld [vmem:[#allocation7 + $0x84] sm:$0xff]
    %v804 = vld [vmem:[#allocation7 + $0x8c] sm:$0xf]
    %v805 = vld [vmem:[#allocation7 + $0x90] sm:$0xff]
    %v806 = vld [vmem:[#allocation7 + $0x98] sm:$0xf]
    %v807 = vld [vmem:[#allocation7 + $0x9c] sm:$0xff]
    %v808 = vld [vmem:[#allocation7 + $0xa4] sm:$0xf]
    %v809 = vld [vmem:[#allocation7 + $0xa8] sm:$0xff]
    %v810 = vld [vmem:[#allocation7 + $0xb0] sm:$0xf]
    %v811 = vld [vmem:[#allocation7 + $0xb4] sm:$0xff]
    %v812 = vld [vmem:[#allocation7 + $0xbc] sm:$0xf]
    %v845 = vunpack.c.l.b16 %v781
    %v846 = vunpack.c.h.b16 %v781
    %v847 = vunpack.c.l.b16 %v782
    %v848 = vunpack.c.l.b16 %v783
    %v849 = vunpack.c.h.b16 %v783
    %v850 = vunpack.c.l.b16 %v784
    %v851 = vunpack.c.l.b16 %v785
    %v852 = vunpack.c.h.b16 %v785
    %v853 = vunpack.c.l.b16 %v786
    %v854 = vunpack.c.l.b16 %v787
    %v855 = vunpack.c.h.b16 %v787
    %v856 = vunpack.c.l.b16 %v788
    %v857 = vunpack.c.l.b16 %v789
    %v858 = vunpack.c.h.b16 %v789
    %v859 = vunpack.c.l.b16 %v790
    %v860 = vunpack.c.l.b16 %v791
    %v861 = vunpack.c.h.b16 %v791
    %v862 = vunpack.c.l.b16 %v792
    %v863 = vunpack.c.l.b16 %v793
    %v864 = vunpack.c.h.b16 %v793
    %v865 = vunpack.c.l.b16 %v794
    %v866 = vunpack.c.l.b16 %v795
    %v867 = vunpack.c.h.b16 %v795
    %v868 = vunpack.c.l.b16 %v796
    %v869 = vunpack.c.l.b16 %v797
    %v870 = vunpack.c.h.b16 %v797
    %v871 = vunpack.c.l.b16 %v798
    %v872 = vunpack.c.l.b16 %v799
    %v873 = vunpack.c.h.b16 %v799
    %v874 = vunpack.c.l.b16 %v800
    %v875 = vunpack.c.l.b16 %v801
    %v876 = vunpack.c.h.b16 %v801
    %v877 = vunpack.c.l.b16 %v802
    %v878 = vunpack.c.l.b16 %v803
    %v879 = vunpack.c.h.b16 %v803
    %v880 = vunpack.c.l.b16 %v804
    %v881 = vunpack.c.l.b16 %v805
    %v882 = vunpack.c.h.b16 %v805
    %v883 = vunpack.c.l.b16 %v806
    %v884 = vunpack.c.l.b16 %v807
    %v885 = vunpack.c.h.b16 %v807
    %v886 = vunpack.c.l.b16 %v808
    %v887 = vunpack.c.l.b16 %v809
    %v888 = vunpack.c.h.b16 %v809
    %v889 = vunpack.c.l.b16 %v810
    %v890 = vunpack.c.l.b16 %v811
    %v891 = vunpack.c.h.b16 %v811
    %v892 = vunpack.c.l.b16 %v812
    %v893 = vpack.c.b16 %v848, %v845
    %v894 = vpack.c.b16 %v849, %v846
    %v895 = vpack.c.b16 %v850, %v847
    %v896 = vpack.c.b16 %v854, %v851
    %v897 = vpack.c.b16 %v855, %v852
    %v898 = vpack.c.b16 %v856, %v853
    %v899 = vpack.c.b16 %v860, %v857
    %v900 = vpack.c.b16 %v861, %v858
    %v901 = vpack.c.b16 %v862, %v859
    %v902 = vpack.c.b16 %v866, %v863
    %v903 = vpack.c.b16 %v867, %v864
    %v904 = vpack.c.b16 %v868, %v865
    %v905 = vpack.c.b16 %v872, %v869
    %v906 = vpack.c.b16 %v873, %v870
    %v907 = vpack.c.b16 %v874, %v871
    %v908 = vpack.c.b16 %v878, %v875
    %v909 = vpack.c.b16 %v879, %v876
    %v910 = vpack.c.b16 %v880, %v877
    %v911 = vpack.c.b16 %v884, %v881
    %v912 = vpack.c.b16 %v885, %v882
    %v913 = vpack.c.b16 %v886, %v883
    %v914 = vpack.c.b16 %v890, %v887
    %v915 = vpack.c.b16 %v891, %v888
    %v916 = vpack.c.b16 %v892, %v889
    %941 = vmatprep.subr.bf16.mxu0 %v894
    %942 = vmatpush1.bf16.msra.mxu0 %v893
    %943 = vmatprep.subr.bf16.mxu0 %v897
    %944 = vmatpush1.bf16.msra.mxu0 %v896
    %945 = vmatprep.subr.bf16.mxu0 %v900
    %946 = vmatpush1.bf16.msra.mxu0 %v899
    %947 = vmatprep.subr.bf16.mxu0 %v903
    %948 = vmatpush1.bf16.msra.mxu0 %v902
    %949 = vmatprep.subr.bf16.mxu0 %v906
    %950 = vmatpush1.bf16.msra.mxu0 %v905
    %951 = vmatprep.subr.bf16.mxu0 %v909
    %952 = vmatpush1.bf16.msra.mxu0 %v908
    %953 = vmatprep.subr.bf16.mxu0 %v912
    %954 = vmatpush1.bf16.msra.mxu0 %v911
    %955 = vmatprep.subr.bf16.mxu0 %v915
    %956 = vmatpush1.bf16.msra.mxu0 %v914
    %957 = vmatprep.subr.bf16.mxu0 0
    %958 = vmatpush1.bf16.msra.mxu0 0
    %959 = vmatprep.subr.bf16.mxu0 0
    %960 = vmatpush1.bf16.msra.mxu0 0
    %961 = vmatprep.subr.bf16.mxu0 0
    %962 = vmatpush1.bf16.msra.mxu0 0
    %963 = vmatprep.subr.bf16.mxu0 0
    %964 = vmatpush1.bf16.msra.mxu0 0
    %965 = vmatprep.subr.bf16.mxu0 0
    %966 = vmatpush1.bf16.msra.mxu0 0
    %967 = vmatprep.subr.bf16.mxu0 0
    %968 = vmatpush1.bf16.msra.mxu0 0
    %969 = vmatprep.subr.bf16.mxu0 0
    %970 = vmatpush1.bf16.msra.mxu0 0
    %971 = vmatprep.subr.bf16.mxu0 0
    %972 = vmatpush1.bf16.msra.mxu0 0
    %973 = vmatprep.mubr.bf16.mxu0 0
    %974 = vmatmul.mubr.bf16.gmra.mrb[0].mxu0 %v780
    %v975 = vpop.f32.mrb[0].mxu0
    %v976 = vadd.f32 %v460, %v975
    %v977 = vpop.f32.mrb[0].mxu0
    %v978 = vadd.f32 %v464, %v977
    %v979 = vpop.f32.mrb[0].mxu0
    %v980 = vpop.f32.mrb[0].mxu0
    %981 = vdwg.mxu0
    %982 = vmatprep.subr.bf16.mxu0 0
    %983 = vmatpush1.bf16.msra.mxu0 %v895
    %984 = vmatprep.subr.bf16.mxu0 0
    %985 = vmatpush1.bf16.msra.mxu0 %v898
    %986 = vmatprep.subr.bf16.mxu0 0
    %987 = vmatpush1.bf16.msra.mxu0 %v901
    %988 = vmatprep.subr.bf16.mxu0 0
    %989 = vmatpush1.bf16.msra.mxu0 %v904
    %990 = vmatprep.subr.bf16.mxu0 0
    %991 = vmatpush1.bf16.msra.mxu0 %v907
    %992 = vmatprep.subr.bf16.mxu0 0
    %993 = vmatpush1.bf16.msra.mxu0 %v910
    %994 = vmatprep.subr.bf16.mxu0 0
    %995 = vmatpush1.bf16.msra.mxu0 %v913
    %996 = vmatprep.subr.bf16.mxu0 0
    %997 = vmatpush1.bf16.msra.mxu0 %v916
    %998 = vmatprep.subr.bf16.mxu0 0
    %999 = vmatpush1.bf16.msra.mxu0 0
    %1000 = vmatprep.subr.bf16.mxu0 0
    %1001 = vmatpush1.bf16.msra.mxu0 0
    %1002 = vmatprep.subr.bf16.mxu0 0
    %1003 = vmatpush1.bf16.msra.mxu0 0
    %1004 = vmatprep.subr.bf16.mxu0 0
    %1005 = vmatpush1.bf16.msra.mxu0 0
    %1006 = vmatprep.subr.bf16.mxu0 0
    %1007 = vmatpush1.bf16.msra.mxu0 0
    %1008 = vmatprep.subr.bf16.mxu0 0
    %1009 = vmatpush1.bf16.msra.mxu0 0
    %1010 = vmatprep.subr.bf16.mxu0 0
    %1011 = vmatpush1.bf16.msra.mxu0 0
    %1012 = vmatprep.subr.bf16.mxu0 0
    %1013 = vmatpush1.bf16.msra.mxu0 0
    %1014 = vmatprep.mubr.bf16.mxu0 0
    %1015 = vmatmul.mubr.bf16.gmra.mrb[0].mxu0 %v780
    %v1016 = vpop.f32.mrb[0].mxu0
    %v1017 = vadd.f32 %v468, %v1016
    %v1018 = vpop.f32.mrb[0].mxu0
    %v1019 = vpop.f32.mrb[0].mxu0
    %v1020 = vpop.f32.mrb[0].mxu0
    %1021 = vdwg.mxu0
    %v1022 = vpack.c.bf16 %v494, %v494
    %v1023 = vld [vmem:[#allocation9] sm:$0xff]
    %v1024 = vld [vmem:[#allocation9 + $0x8] sm:$0xf]
    %v1025 = vld [vmem:[#allocation9 + $0xc] sm:$0xff]
    %v1026 = vld [vmem:[#allocation9 + $0x14] sm:$0xf]
    %v1027 = vld [vmem:[#allocation9 + $0x18] sm:$0xff]
    %v1028 = vld [vmem:[#allocation9 + $0x20] sm:$0xf]
    %v1029 = vld [vmem:[#allocation9 + $0x24] sm:$0xff]
    %v1030 = vld [vmem:[#allocation9 + $0x2c] sm:$0xf]
    %v1031 = vld [vmem:[#allocation9 + $0x30] sm:$0xff]
    %v1032 = vld [vmem:[#allocation9 + $0x38] sm:$0xf]
    %v1033 = vld [vmem:[#allocation9 + $0x3c] sm:$0xff]
    %v1034 = vld [vmem:[#allocation9 + $0x44] sm:$0xf]
    %v1035 = vld [vmem:[#allocation9 + $0x48] sm:$0xff]
    %v1036 = vld [vmem:[#allocation9 + $0x50] sm:$0xf]
    %v1037 = vld [vmem:[#allocation9 + $0x54] sm:$0xff]
    %v1038 = vld [vmem:[#allocation9 + $0x5c] sm:$0xf]
    %v1039 = vld [vmem:[#allocation9 + $0x60] sm:$0xff]
    %v1040 = vld [vmem:[#allocation9 + $0x68] sm:$0xf]
    %v1041 = vld [vmem:[#allocation9 + $0x6c] sm:$0xff]
    %v1042 = vld [vmem:[#allocation9 + $0x74] sm:$0xf]
    %v1043 = vld [vmem:[#allocation9 + $0x78] sm:$0xff]
    %v1044 = vld [vmem:[#allocation9 + $0x80] sm:$0xf]
    %v1045 = vld [vmem:[#allocation9 + $0x84] sm:$0xff]
    %v1046 = vld [vmem:[#allocation9 + $0x8c] sm:$0xf]
    %v1047 = vld [vmem:[#allocation9 + $0x90] sm:$0xff]
    %v1048 = vld [vmem:[#allocation9 + $0x98] sm:$0xf]
    %v1049 = vld [vmem:[#allocation9 + $0x9c] sm:$0xff]
    %v1050 = vld [vmem:[#allocation9 + $0xa4] sm:$0xf]
    %v1051 = vld [vmem:[#allocation9 + $0xa8] sm:$0xff]
    %v1052 = vld [vmem:[#allocation9 + $0xb0] sm:$0xf]
    %v1053 = vld [vmem:[#allocation9 + $0xb4] sm:$0xff]
    %v1054 = vld [vmem:[#allocation9 + $0xbc] sm:$0xf]
    %v1087 = vunpack.c.l.b16 %v1023
    %v1088 = vunpack.c.h.b16 %v1023
    %v1089 = vunpack.c.l.b16 %v1024
    %v1090 = vunpack.c.l.b16 %v1025
    %v1091 = vunpack.c.h.b16 %v1025
    %v1092 = vunpack.c.l.b16 %v1026
    %v1093 = vunpack.c.l.b16 %v1027
    %v1094 = vunpack.c.h.b16 %v1027
    %v1095 = vunpack.c.l.b16 %v1028
    %v1096 = vunpack.c.l.b16 %v1029
    %v1097 = vunpack.c.h.b16 %v1029
    %v1098 = vunpack.c.l.b16 %v1030
    %v1099 = vunpack.c.l.b16 %v1031
    %v1100 = vunpack.c.h.b16 %v1031
    %v1101 = vunpack.c.l.b16 %v1032
    %v1102 = vunpack.c.l.b16 %v1033
    %v1103 = vunpack.c.h.b16 %v1033
    %v1104 = vunpack.c.l.b16 %v1034
    %v1105 = vunpack.c.l.b16 %v1035
    %v1106 = vunpack.c.h.b16 %v1035
    %v1107 = vunpack.c.l.b16 %v1036
    %v1108 = vunpack.c.l.b16 %v1037
    %v1109 = vunpack.c.h.b16 %v1037
    %v1110 = vunpack.c.l.b16 %v1038
    %v1111 = vunpack.c.l.b16 %v1039
    %v1112 = vunpack.c.h.b16 %v1039
    %v1113 = vunpack.c.l.b16 %v1040
    %v1114 = vunpack.c.l.b16 %v1041
    %v1115 = vunpack.c.h.b16 %v1041
    %v1116 = vunpack.c.l.b16 %v1042
    %v1117 = vunpack.c.l.b16 %v1043
    %v1118 = vunpack.c.h.b16 %v1043
    %v1119 = vunpack.c.l.b16 %v1044
    %v1120 = vunpack.c.l.b16 %v1045
    %v1121 = vunpack.c.h.b16 %v1045
    %v1122 = vunpack.c.l.b16 %v1046
    %v1123 = vunpack.c.l.b16 %v1047
    %v1124 = vunpack.c.h.b16 %v1047
    %v1125 = vunpack.c.l.b16 %v1048
    %v1126 = vunpack.c.l.b16 %v1049
    %v1127 = vunpack.c.h.b16 %v1049
    %v1128 = vunpack.c.l.b16 %v1050
    %v1129 = vunpack.c.l.b16 %v1051
    %v1130 = vunpack.c.h.b16 %v1051
    %v1131 = vunpack.c.l.b16 %v1052
    %v1132 = vunpack.c.l.b16 %v1053
    %v1133 = vunpack.c.h.b16 %v1053
    %v1134 = vunpack.c.l.b16 %v1054
    %v1135 = vpack.c.b16 %v1090, %v1087
    %v1136 = vpack.c.b16 %v1091, %v1088
    %v1137 = vpack.c.b16 %v1092, %v1089
    %v1138 = vpack.c.b16 %v1096, %v1093
    %v1139 = vpack.c.b16 %v1097, %v1094
    %v1140 = vpack.c.b16 %v1098, %v1095
    %v1141 = vpack.c.b16 %v1102, %v1099
    %v1142 = vpack.c.b16 %v1103, %v1100
    %v1143 = vpack.c.b16 %v1104, %v1101
    %v1144 = vpack.c.b16 %v1108, %v1105
    %v1145 = vpack.c.b16 %v1109, %v1106
    %v1146 = vpack.c.b16 %v1110, %v1107
    %v1147 = vpack.c.b16 %v1114, %v1111
    %v1148 = vpack.c.b16 %v1115, %v1112
    %v1149 = vpack.c.b16 %v1116, %v1113
    %v1150 = vpack.c.b16 %v1120, %v1117
    %v1151 = vpack.c.b16 %v1121, %v1118
    %v1152 = vpack.c.b16 %v1122, %v1119
    %v1153 = vpack.c.b16 %v1126, %v1123
    %v1154 = vpack.c.b16 %v1127, %v1124
    %v1155 = vpack.c.b16 %v1128, %v1125
    %v1156 = vpack.c.b16 %v1132, %v1129
    %v1157 = vpack.c.b16 %v1133, %v1130
    %v1158 = vpack.c.b16 %v1134, %v1131
    %1183 = vmatprep.subr.bf16.mxu0 %v1136
    %1184 = vmatpush1.bf16.msra.mxu0 %v1135
    %1185 = vmatprep.subr.bf16.mxu0 %v1139
    %1186 = vmatpush1.bf16.msra.mxu0 %v1138
    %1187 = vmatprep.subr.bf16.mxu0 %v1142
    %1188 = vmatpush1.bf16.msra.mxu0 %v1141
    %1189 = vmatprep.subr.bf16.mxu0 %v1145
    %1190 = vmatpush1.bf16.msra.mxu0 %v1144
    %1191 = vmatprep.subr.bf16.mxu0 %v1148
    %1192 = vmatpush1.bf16.msra.mxu0 %v1147
    %1193 = vmatprep.subr.bf16.mxu0 %v1151
    %1194 = vmatpush1.bf16.msra.mxu0 %v1150
    %1195 = vmatprep.subr.bf16.mxu0 %v1154
    %1196 = vmatpush1.bf16.msra.mxu0 %v1153
    %1197 = vmatprep.subr.bf16.mxu0 %v1157
    %1198 = vmatpush1.bf16.msra.mxu0 %v1156
    %1199 = vmatprep.subr.bf16.mxu0 0
    %1200 = vmatpush1.bf16.msra.mxu0 0
    %1201 = vmatprep.subr.bf16.mxu0 0
    %1202 = vmatpush1.bf16.msra.mxu0 0
    %1203 = vmatprep.subr.bf16.mxu0 0
    %1204 = vmatpush1.bf16.msra.mxu0 0
    %1205 = vmatprep.subr.bf16.mxu0 0
    %1206 = vmatpush1.bf16.msra.mxu0 0
    %1207 = vmatprep.subr.bf16.mxu0 0
    %1208 = vmatpush1.bf16.msra.mxu0 0
    %1209 = vmatprep.subr.bf16.mxu0 0
    %1210 = vmatpush1.bf16.msra.mxu0 0
    %1211 = vmatprep.subr.bf16.mxu0 0
    %1212 = vmatpush1.bf16.msra.mxu0 0
    %1213 = vmatprep.subr.bf16.mxu0 0
    %1214 = vmatpush1.bf16.msra.mxu0 0
    %1215 = vmatprep.mubr.bf16.mxu0 0
    %1216 = vmatmul.mubr.bf16.gmra.mrb[0].mxu0 %v1022
    %v1217 = vpop.f32.mrb[0].mxu0
    %v1218 = vadd.f32 0.0, %v1217
    %v1219 = vpop.f32.mrb[0].mxu0
    %v1220 = vadd.f32 0.0, %v1219
    %v1221 = vpop.f32.mrb[0].mxu0
    %v1222 = vpop.f32.mrb[0].mxu0
    %1223 = vdwg.mxu0
    %1224 = vmatprep.subr.bf16.mxu0 0
    %1225 = vmatpush1.bf16.msra.mxu0 %v1137
    %1226 = vmatprep.subr.bf16.mxu0 0
    %1227 = vmatpush1.bf16.msra.mxu0 %v1140
    %1228 = vmatprep.subr.bf16.mxu0 0
    %1229 = vmatpush1.bf16.msra.mxu0 %v1143
    %1230 = vmatprep.subr.bf16.mxu0 0
    %1231 = vmatpush1.bf16.msra.mxu0 %v1146
    %1232 = vmatprep.subr.bf16.mxu0 0
    %1233 = vmatpush1.bf16.msra.mxu0 %v1149
    %1234 = vmatprep.subr.bf16.mxu0 0
    %1235 = vmatpush1.bf16.msra.mxu0 %v1152
    %1236 = vmatprep.subr.bf16.mxu0 0
    %1237 = vmatpush1.bf16.msra.mxu0 %v1155
    %1238 = vmatprep.subr.bf16.mxu0 0
    %1239 = vmatpush1.bf16.msra.mxu0 %v1158
    %1240 = vmatprep.subr.bf16.mxu0 0
    %1241 = vmatpush1.bf16.msra.mxu0 0
    %1242 = vmatprep.subr.bf16.mxu0 0
    %1243 = vmatpush1.bf16.msra.mxu0 0
    %1244 = vmatprep.subr.bf16.mxu0 0
    %1245 = vmatpush1.bf16.msra.mxu0 0
    %1246 = vmatprep.subr.bf16.mxu0 0
    %1247 = vmatpush1.bf16.msra.mxu0 0
    %1248 = vmatprep.subr.bf16.mxu0 0
    %1249 = vmatpush1.bf16.msra.mxu0 0
    %1250 = vmatprep.subr.bf16.mxu0 0
    %1251 = vmatpush1.bf16.msra.mxu0 0
    %1252 = vmatprep.subr.bf16.mxu0 0
    %1253 = vmatpush1.bf16.msra.mxu0 0
    %1254 = vmatprep.subr.bf16.mxu0 0
    %1255 = vmatpush1.bf16.msra.mxu0 0
    %1256 = vmatprep.mubr.bf16.mxu0 0
    %1257 = vmatmul.mubr.bf16.gmra.mrb[0].mxu0 %v1022
    %v1258 = vpop.f32.mrb[0].mxu0
    %v1259 = vadd.f32 0.0, %v1258
    %v1260 = vpop.f32.mrb[0].mxu0
    %v1261 = vpop.f32.mrb[0].mxu0
    %v1262 = vpop.f32.mrb[0].mxu0
    %1263 = vdwg.mxu0
    %v1264 = vadd.f32 %v976, %v1218
    %v1265 = vxor.u32 %v1264, 2147483648
    %v1266 = vmul.f32 %v1265, 1.442695
    %v1267 = vpow.pop %v1266
    %v1268 = vadd.f32 %v1267, 1.0
    %v1269 = vrcp.pop %v1268
    %v1270 = vmul.f32 1.0, %v1269
    %v1271 = vadd.f32 %v978, %v1220
    %v1272 = vxor.u32 %v1271, 2147483648
    %v1273 = vmul.f32 %v1272, 1.442695
    %v1274 = vpow.pop %v1273
    %v1275 = vadd.f32 %v1274, 1.0
    %v1276 = vrcp.pop %v1275
    %v1277 = vmul.f32 1.0, %v1276
    %v1278 = vadd.f32 %v1259, %v477
    %v1279 = vmul.f32 %v1270, %v1278
    %v1280 = vadd.f32 %v1017, %v1279
    %v1281 = vtanh.pop %v1280
    %v1282 = vsub.f32 1.0, %v1277
    %v1283 = vmul.f32 %v1282, %v1281
    %v1284 = vmul.f32 %v1277, %v494
    %v1285 = vadd.f32 %v1283, %v1284
    %1286 = vadd.xlane.f32.xlu0 %v1285
    %v1287 = vpop.xlane.xlu0 %1286
    %v1288 = vmul.f32 %v1287, 0.015625
    %v1289 = vmul.f32 %v1285, %v1285
    %1290 = vadd.xlane.f32.xlu0 %v1289
    %v1291 = vpop.xlane.xlu0 %1290
    %v1292 = vmul.f32 %v1291, 0.015625
    %v1293 = vmul.f32 %v1288, %v1288
    %v1294 = vsub.f32 %v1292, %v1293
    %v1295 = vmax.f32 %v1294, 0.0
    %v1296 = vsub.f32 %v1285, %v1288
    %v1297 = vadd.f32 %v1295, 1e-05
    %v1298 = vrsqrt.pop %v1297
    %v1299 = vmul.f32 %v1296, %v1298
    %v1300 = vmul.f32 %v1299, %v484
    %v1301 = vadd.f32 %v1300, %v491
    %s1302 = scalar_lea.vmem [#allocation2], 12
    %v1303 = vld [vmem:[%s1302] sm:$0xff]
    %v1304 = vld [vmem:[%s1302 + $0x8] sm:$0xf]
    %v1305 = vunpack.c.l.bf16 %v1303
    %v1306 = vunpack.c.h.bf16 %v1303
    %v1307 = vunpack.c.l.bf16 %v1304
    %1308 = vmatprep.subr.bf16.mxu0 %v614
    %1309 = vmatpush1.bf16.msra.mxu0 %v613
    %1310 = vmatprep.subr.bf16.mxu0 %v617
    %1311 = vmatpush1.bf16.msra.mxu0 %v616
    %1312 = vmatprep.subr.bf16.mxu0 %v620
    %1313 = vmatpush1.bf16.msra.mxu0 %v619
    %1314 = vmatprep.subr.bf16.mxu0 %v623
    %1315 = vmatpush1.bf16.msra.mxu0 %v622
    %1316 = vmatprep.subr.bf16.mxu0 %v626
    %1317 = vmatpush1.bf16.msra.mxu0 %v625
    %1318 = vmatprep.subr.bf16.mxu0 %v629
    %1319 = vmatpush1.bf16.msra.mxu0 %v628
    %1320 = vmatprep.subr.bf16.mxu0 %v632
    %1321 = vmatpush1.bf16.msra.mxu0 %v631
    %1322 = vmatprep.subr.bf16.mxu0 %v635
    %1323 = vmatpush1.bf16.msra.mxu0 %v634
    %1324 = vmatprep.subr.bf16.mxu0 0
    %1325 = vmatpush1.bf16.msra.mxu0 0
    %1326 = vmatprep.subr.bf16.mxu0 0
    %1327 = vmatpush1.bf16.msra.mxu0 0
    %1328 = vmatprep.subr.bf16.mxu0 0
    %1329 = vmatpush1.bf16.msra.mxu0 0
    %1330 = vmatprep.subr.bf16.mxu0 0
    %1331 = vmatpush1.bf16.msra.mxu0 0
    %1332 = vmatprep.subr.bf16.mxu0 0
    %1333 = vmatpush1.bf16.msra.mxu0 0
    %1334 = vmatprep.subr.bf16.mxu0 0
    %1335 = vmatpush1.bf16.msra.mxu0 0
    %1336 = vmatprep.subr.bf16.mxu0 0
    %1337 = vmatpush1.bf16.msra.mxu0 0
    %1338 = vmatprep.subr.bf16.mxu0 0
    %1339 = vmatpush1.bf16.msra.mxu0 0
    %1340 = vmatprep.mubr.bf16.mxu0 0
    %1341 = vmatmul.mubr.bf16.gmra.mrb[0].mxu0 %v780
    %v1342 = vpop.f32.mrb[0].mxu0
    %v1343 = vadd.f32 0.0, %v1342
    %v1344 = vpop.f32.mrb[0].mxu0
    %v1345 = vadd.f32 0.0, %v1344
    %v1346 = vpop.f32.mrb[0].mxu0
    %v1347 = vpop.f32.mrb[0].mxu0
    %1348 = vdwg.mxu0
    %1349 = vmatprep.subr.bf16.mxu0 0
    %1350 = vmatpush1.bf16.msra.mxu0 %v615
    %1351 = vmatprep.subr.bf16.mxu0 0
    %1352 = vmatpush1.bf16.msra.mxu0 %v618
    %1353 = vmatprep.subr.bf16.mxu0 0
    %1354 = vmatpush1.bf16.msra.mxu0 %v621
    %1355 = vmatprep.subr.bf16.mxu0 0
    %1356 = vmatpush1.bf16.msra.mxu0 %v624
    %1357 = vmatprep.subr.bf16.mxu0 0
    %1358 = vmatpush1.bf16.msra.mxu0 %v627
    %1359 = vmatprep.subr.bf16.mxu0 0
    %1360 = vmatpush1.bf16.msra.mxu0 %v630
    %1361 = vmatprep.subr.bf16.mxu0 0
    %1362 = vmatpush1.bf16.msra.mxu0 %v633
    %1363 = vmatprep.subr.bf16.mxu0 0
    %1364 = vmatpush1.bf16.msra.mxu0 %v636
    %1365 = vmatprep.subr.bf16.mxu0 0
    %1366 = vmatpush1.bf16.msra.mxu0 0
    %1367 = vmatprep.subr.bf16.mxu0 0
    %1368 = vmatpush1.bf16.msra.mxu0 0
    %1369 = vmatprep.subr.bf16.mxu0 0
    %1370 = vmatpush1.bf16.msra.mxu0 0
    %1371 = vmatprep.subr.bf16.mxu0 0
    %1372 = vmatpush1.bf16.msra.mxu0 0
    %1373 = vmatprep.subr.bf16.mxu0 0
    %1374 = vmatpush1.bf16.msra.mxu0 0
    %1375 = vmatprep.subr.bf16.mxu0 0
    %1376 = vmatpush1.bf16.msra.mxu0 0
    %1377 = vmatprep.subr.bf16.mxu0 0
    %1378 = vmatpush1.bf16.msra.mxu0 0
    %1379 = vmatprep.subr.bf16.mxu0 0
    %1380 = vmatpush1.bf16.msra.mxu0 0
    %1381 = vmatprep.mubr.bf16.mxu0 0
    %1382 = vmatmul.mubr.bf16.gmra.mrb[0].mxu0 %v780
    %v1383 = vpop.f32.mrb[0].mxu0
    %v1384 = vadd.f32 0.0, %v1383
    %v1385 = vpop.f32.mrb[0].mxu0
    %v1386 = vpop.f32.mrb[0].mxu0
    %v1387 = vpop.f32.mrb[0].mxu0
    %1388 = vdwg.mxu0
    %v1389 = vadd.f32 %v1305, %v1343
    %v1390 = vxor.u32 %v1389, 2147483648
    %v1391 = vmul.f32 %v1390, 1.442695
    %v1392 = vpow.pop %v1391
    %v1393 = vadd.f32 %v1392, 1.0
    %v1394 = vrcp.pop %v1393
    %v1395 = vmul.f32 1.0, %v1394
    %v1396 = vadd.f32 %v1306, %v1345
    %v1397 = vxor.u32 %v1396, 2147483648
    %v1398 = vmul.f32 %v1397, 1.442695
    %v1399 = vpow.pop %v1398
    %v1400 = vadd.f32 %v1399, 1.0
    %v1401 = vrcp.pop %v1400
    %v1402 = vmul.f32 1.0, %v1401
    %v1403 = vadd.f32 %v1384, %v439
    %v1404 = vmul.f32 %v1395, %v1403
    %v1405 = vadd.f32 %v1307, %v1404
    %v1406 = vtanh.pop %v1405
    %v1407 = vsub.f32 1.0, %v1402
    %v1408 = vmul.f32 %v1407, %v1406
    %v1409 = vmul.f32 %v1402, %v779
    %v1410 = vadd.f32 %v1408, %v1409
    %1411 = vadd.xlane.f32.xlu0 %v1410
    %v1412 = vpop.xlane.xlu0 %1411
    %v1413 = vmul.f32 %v1412, 0.0078125
    %v1414 = vmul.f32 %v1410, %v1410
    %1415 = vadd.xlane.f32.xlu0 %v1414
    %v1416 = vpop.xlane.xlu0 %1415
    %v1417 = vmul.f32 %v1416, 0.0078125
    %v1418 = vmul.f32 %v1413, %v1413
    %v1419 = vsub.f32 %v1417, %v1418
    %v1420 = vmax.f32 %v1419, 0.0
    %v1421 = vsub.f32 %v1410, %v1413
    %v1422 = vadd.f32 %v1420, 1e-05
    %v1423 = vrsqrt.pop %v1422
    %v1424 = vmul.f32 %v1421, %v1423
    %v1425 = vmul.f32 %v1424, %v446
    %v1426 = vadd.f32 %v1425, %v453
    %v1427 = vpack.c.bf16 %v1426, %v1426
    %1428 = vmatprep.subr.bf16.mxu0 %v894
    %1429 = vmatpush1.bf16.msra.mxu0 %v893
    %1430 = vmatprep.subr.bf16.mxu0 %v897
    %1431 = vmatpush1.bf16.msra.mxu0 %v896
    %1432 = vmatprep.subr.bf16.mxu0 %v900
    %1433 = vmatpush1.bf16.msra.mxu0 %v899
    %1434 = vmatprep.subr.bf16.mxu0 %v903
    %1435 = vmatpush1.bf16.msra.mxu0 %v902
    %1436 = vmatprep.subr.bf16.mxu0 %v906
    %1437 = vmatpush1.bf16.msra.mxu0 %v905
    %1438 = vmatprep.subr.bf16.mxu0 %v909
    %1439 = vmatpush1.bf16.msra.mxu0 %v908
    %1440 = vmatprep.subr.bf16.mxu0 %v912
    %1441 = vmatpush1.bf16.msra.mxu0 %v911
    %1442 = vmatprep.subr.bf16.mxu0 %v915
    %1443 = vmatpush1.bf16.msra.mxu0 %v914
    %1444 = vmatprep.subr.bf16.mxu0 0
    %1445 = vmatpush1.bf16.msra.mxu0 0
    %1446 = vmatprep.subr.bf16.mxu0 0
    %1447 = vmatpush1.bf16.msra.mxu0 0
    %1448 = vmatprep.subr.bf16.mxu0 0
    %1449 = vmatpush1.bf16.msra.mxu0 0
    %1450 = vmatprep.subr.bf16.mxu0 0
    %1451 = vmatpush1.bf16.msra.mxu0 0
    %1452 = vmatprep.subr.bf16.mxu0 0
    %1453 = vmatpush1.bf16.msra.mxu0 0
    %1454 = vmatprep.subr.bf16.mxu0 0
    %1455 = vmatpush1.bf16.msra.mxu0 0
    %1456 = vmatprep.subr.bf16.mxu0 0
    %1457 = vmatpush1.bf16.msra.mxu0 0
    %1458 = vmatprep.subr.bf16.mxu0 0
    %1459 = vmatpush1.bf16.msra.mxu0 0
    %1460 = vmatprep.mubr.bf16.mxu0 0
    %1461 = vmatmul.mubr.bf16.gmra.mrb[0].mxu0 %v1427
    %v1462 = vpop.f32.mrb[0].mxu0
    %v1463 = vadd.f32 %v460, %v1462
    %v1464 = vpop.f32.mrb[0].mxu0
    %v1465 = vadd.f32 %v464, %v1464
    %v1466 = vpop.f32.mrb[0].mxu0
    %v1467 = vpop.f32.mrb[0].mxu0
    %1468 = vdwg.mxu0
    %1469 = vmatprep.subr.bf16.mxu0 0
    %1470 = vmatpush1.bf16.msra.mxu0 %v895
    %1471 = vmatprep.subr.bf16.mxu0 0
    %1472 = vmatpush1.bf16.msra.mxu0 %v898
    %1473 = vmatprep.subr.bf16.mxu0 0
    %1474 = vmatpush1.bf16.msra.mxu0 %v901
    %1475 = vmatprep.subr.bf16.mxu0 0
    %1476 = vmatpush1.bf16.msra.mxu0 %v904
    %1477 = vmatprep.subr.bf16.mxu0 0
    %1478 = vmatpush1.bf16.msra.mxu0 %v907
    %1479 = vmatprep.subr.bf16.mxu0 0
    %1480 = vmatpush1.bf16.msra.mxu0 %v910
    %1481 = vmatprep.subr.bf16.mxu0 0
    %1482 = vmatpush1.bf16.msra.mxu0 %v913
    %1483 = vmatprep.subr.bf16.mxu0 0
    %1484 = vmatpush1.bf16.msra.mxu0 %v916
    %1485 = vmatprep.subr.bf16.mxu0 0
    %1486 = vmatpush1.bf16.msra.mxu0 0
    %1487 = vmatprep.subr.bf16.mxu0 0
    %1488 = vmatpush1.bf16.msra.mxu0 0
    %1489 = vmatprep.subr.bf16.mxu0 0
    %1490 = vmatpush1.bf16.msra.mxu0 0
    %1491 = vmatprep.subr.bf16.mxu0 0
    %1492 = vmatpush1.bf16.msra.mxu0 0
    %1493 = vmatprep.subr.bf16.mxu0 0
    %1494 = vmatpush1.bf16.msra.mxu0 0
    %1495 = vmatprep.subr.bf16.mxu0 0
    %1496 = vmatpush1.bf16.msra.mxu0 0
    %1497 = vmatprep.subr.bf16.mxu0 0
    %1498 = vmatpush1.bf16.msra.mxu0 0
    %1499 = vmatprep.subr.bf16.mxu0 0
    %1500 = vmatpush1.bf16.msra.mxu0 0
    %1501 = vmatprep.mubr.bf16.mxu0 0
    %1502 = vmatmul.mubr.bf16.gmra.mrb[0].mxu0 %v1427
    %v1503 = vpop.f32.mrb[0].mxu0
    %v1504 = vadd.f32 %v468, %v1503
    %v1505 = vpop.f32.mrb[0].mxu0
    %v1506 = vpop.f32.mrb[0].mxu0
    %v1507 = vpop.f32.mrb[0].mxu0
    %1508 = vdwg.mxu0
    %v1509 = vpack.c.bf16 %v1301, %v1301
    %1510 = vmatprep.subr.bf16.mxu0 %v1136
    %1511 = vmatpush1.bf16.msra.mxu0 %v1135
    %1512 = vmatprep.subr.bf16.mxu0 %v1139
    %1513 = vmatpush1.bf16.msra.mxu0 %v1138
    %1514 = vmatprep.subr.bf16.mxu0 %v1142
    %1515 = vmatpush1.bf16.msra.mxu0 %v1141
    %1516 = vmatprep.subr.bf16.mxu0 %v1145
    %1517 = vmatpush1.bf16.msra.mxu0 %v1144
    %1518 = vmatprep.subr.bf16.mxu0 %v1148
    %1519 = vmatpush1.bf16.msra.mxu0 %v1147
    %1520 = vmatprep.subr.bf16.mxu0 %v1151
    %1521 = vmatpush1.bf16.msra.mxu0 %v1150
    %1522 = vmatprep.subr.bf16.mxu0 %v1154
    %1523 = vmatpush1.bf16.msra.mxu0 %v1153
    %1524 = vmatprep.subr.bf16.mxu0 %v1157
    %1525 = vmatpush1.bf16.msra.mxu0 %v1156
    %1526 = vmatprep.subr.bf16.mxu0 0
    %1527 = vmatpush1.bf16.msra.mxu0 0
    %1528 = vmatprep.subr.bf16.mxu0 0
    %1529 = vmatpush1.bf16.msra.mxu0 0
    %1530 = vmatprep.subr.bf16.mxu0 0
    %1531 = vmatpush1.bf16.msra.mxu0 0
    %1532 = vmatprep.subr.bf16.mxu0 0
    %1533 = vmatpush1.bf16.msra.mxu0 0
    %1534 = vmatprep.subr.bf16.mxu0 0
    %1535 = vmatpush1.bf16.msra.mxu0 0
    %1536 = vmatprep.subr.bf16.mxu0 0
    %1537 = vmatpush1.bf16.msra.mxu0 0
    %1538 = vmatprep.subr.bf16.mxu0 0
    %1539 = vmatpush1.bf16.msra.mxu0 0
    %1540 = vmatprep.subr.bf16.mxu0 0
    %1541 = vmatpush1.bf16.msra.mxu0 0
    %1542 = vmatprep.mubr.bf16.mxu0 0
    %1543 = vmatmul.mubr.bf16.gmra.mrb[0].mxu0 %v1509
    %v1544 = vpop.f32.mrb[0].mxu0
    %v1545 = vadd.f32 0.0, %v1544
    %v1546 = vpop.f32.mrb[0].mxu0
    %v1547 = vadd.f32 0.0, %v1546
    %v1548 = vpop.f32.mrb[0].mxu0
    %v1549 = vpop.f32.mrb[0].mxu0
    %1550 = vdwg.mxu0
    %1551 = vmatprep.subr.bf16.mxu0 0
    %1552 = vmatpush1.bf16.msra.mxu0 %v1137
    %1553 = vmatprep.subr.bf16.mxu0 0
    %1554 = vmatpush1.bf16.msra.mxu0 %v1140
    %1555 = vmatprep.subr.bf16.mxu0 0
    %1556 = vmatpush1.bf16.msra.mxu0 %v1143
    %1557 = vmatprep.subr.bf16.mxu0 0
    %1558 = vmatpush1.bf16.msra.mxu0 %v1146
    %1559 = vmatprep.subr.bf16.mxu0 0
    %1560 = vmatpush1.bf16.msra.mxu0 %v1149
    %1561 = vmatprep.subr.bf16.mxu0 0
    %1562 = vmatpush1.bf16.msra.mxu0 %v1152
    %1563 = vmatprep.subr.bf16.mxu0 0
    %1564 = vmatpush1.bf16.msra.mxu0 %v1155
    %1565 = vmatprep.subr.bf16.mxu0 0
    %1566 = vmatpush1.bf16.msra.mxu0 %v1158
    %1567 = vmatprep.subr.bf16.mxu0 0
    %1568 = vmatpush1.bf16.msra.mxu0 0
    %1569 = vmatprep.subr.bf16.mxu0 0
    %1570 = vmatpush1.bf16.msra.mxu0 0
    %1571 = vmatprep.subr.bf16.mxu0 0
    %1572 = vmatpush1.bf16.msra.mxu0 0
    %1573 = vmatprep.subr.bf16.mxu0 0
    %1574 = vmatpush1.bf16.msra.mxu0 0
    %1575 = vmatprep.subr.bf16.mxu0 0
    %1576 = vmatpush1.bf16.msra.mxu0 0
    %1577 = vmatprep.subr.bf16.mxu0 0
    %1578 = vmatpush1.bf16.msra.mxu0 0
    %1579 = vmatprep.subr.bf16.mxu0 0
    %1580 = vmatpush1.bf16.msra.mxu0 0
    %1581 = vmatprep.subr.bf16.mxu0 0
    %1582 = vmatpush1.bf16.msra.mxu0 0
    %1583 = vmatprep.mubr.bf16.mxu0 0
    %1584 = vmatmul.mubr.bf16.gmra.mrb[0].mxu0 %v1509
    %v1585 = vpop.f32.mrb[0].mxu0
    %v1586 = vadd.f32 0.0, %v1585
    %v1587 = vpop.f32.mrb[0].mxu0
    %v1588 = vpop.f32.mrb[0].mxu0
    %v1589 = vpop.f32.mrb[0].mxu0
    %1590 = vdwg.mxu0
    %v1591 = vadd.f32 %v1463, %v1545
    %v1592 = vxor.u32 %v1591, 2147483648
    %v1593 = vmul.f32 %v1592, 1.442695
    %v1594 = vpow.pop %v1593
    %v1595 = vadd.f32 %v1594, 1.0
    %v1596 = vrcp.pop %v1595
    %v1597 = vmul.f32 1.0, %v1596
    %v1598 = vadd.f32 %v1465, %v1547
    %v1599 = vxor.u32 %v1598, 2147483648
    %v1600 = vmul.f32 %v1599, 1.442695
    %v1601 = vpow.pop %v1600
    %v1602 = vadd.f32 %v1601, 1.0
    %v1603 = vrcp.pop %v1602
    %v1604 = vmul.f32 1.0, %v1603
    %v1605 = vadd.f32 %v1586, %v477
    %v1606 = vmul.f32 %v1597, %v1605
    %v1607 = vadd.f32 %v1504, %v1606
    %v1608 = vtanh.pop %v1607
    %v1609 = vsub.f32 1.0, %v1604
    %v1610 = vmul.f32 %v1609, %v1608
    %v1611 = vmul.f32 %v1604, %v1301
    %v1612 = vadd.f32 %v1610, %v1611
    %1613 = vadd.xlane.f32.xlu0 %v1612
    %v1614 = vpop.xlane.xlu0 %1613
    %v1615 = vmul.f32 %v1614, 0.015625
    %v1616 = vmul.f32 %v1612, %v1612
    %1617 = vadd.xlane.f32.xlu0 %v1616
    %v1618 = vpop.xlane.xlu0 %1617
    %v1619 = vmul.f32 %v1618, 0.015625
    %v1620 = vmul.f32 %v1615, %v1615
    %v1621 = vsub.f32 %v1619, %v1620
    %v1622 = vmax.f32 %v1621, 0.0
    %v1623 = vsub.f32 %v1612, %v1615
    %v1624 = vadd.f32 %v1622, 1e-05
    %v1625 = vrsqrt.pop %v1624
    %v1626 = vmul.f32 %v1623, %v1625
    %v1627 = vmul.f32 %v1626, %v484
    %v1628 = vadd.f32 %v1627, %v491
    %s1629 = scalar_lea.vmem [#allocation2], 24
    %v1630 = vld [vmem:[%s1629] sm:$0xff]
    %v1631 = vld [vmem:[%s1629 + $0x8] sm:$0xf]
    %v1632 = vunpack.c.l.bf16 %v1630
    %v1633 = vunpack.c.h.bf16 %v1630
    %v1634 = vunpack.c.l.bf16 %v1631
    %1635 = vmatprep.subr.bf16.mxu0 %v614
    %1636 = vmatpush1.bf16.msra.mxu0 %v613
    %1637 = vmatprep.subr.bf16.mxu0 %v617
    %1638 = vmatpush1.bf16.msra.mxu0 %v616
    %1639 = vmatprep.subr.bf16.mxu0 %v620
    %1640 = vmatpush1.bf16.msra.mxu0 %v619
    %1641 = vmatprep.subr.bf16.mxu0 %v623
    %1642 = vmatpush1.bf16.msra.mxu0 %v622
    %1643 = vmatprep.subr.bf16.mxu0 %v626
    %1644 = vmatpush1.bf16.msra.mxu0 %v625
    %1645 = vmatprep.subr.bf16.mxu0 %v629
    %1646 = vmatpush1.bf16.msra.mxu0 %v628
    %1647 = vmatprep.subr.bf16.mxu0 %v632
    %1648 = vmatpush1.bf16.msra.mxu0 %v631
    %1649 = vmatprep.subr.bf16.mxu0 %v635
    %1650 = vmatpush1.bf16.msra.mxu0 %v634
    %1651 = vmatprep.subr.bf16.mxu0 0
    %1652 = vmatpush1.bf16.msra.mxu0 0
    %1653 = vmatprep.subr.bf16.mxu0 0
    %1654 = vmatpush1.bf16.msra.mxu0 0
    %1655 = vmatprep.subr.bf16.mxu0 0
    %1656 = vmatpush1.bf16.msra.mxu0 0
    %1657 = vmatprep.subr.bf16.mxu0 0
    %1658 = vmatpush1.bf16.msra.mxu0 0
    %1659 = vmatprep.subr.bf16.mxu0 0
    %1660 = vmatpush1.bf16.msra.mxu0 0
    %1661 = vmatprep.subr.bf16.mxu0 0
    %1662 = vmatpush1.bf16.msra.mxu0 0
    %1663 = vmatprep.subr.bf16.mxu0 0
    %1664 = vmatpush1.bf16.msra.mxu0 0
    %1665 = vmatprep.subr.bf16.mxu0 0
    %1666 = vmatpush1.bf16.msra.mxu0 0
    %1667 = vmatprep.mubr.bf16.mxu0 0
    %1668 = vmatmul.mubr.bf16.gmra.mrb[0].mxu0 %v1427
    %v1669 = vpop.f32.mrb[0].mxu0
    %v1670 = vadd.f32 0.0, %v1669
    %v1671 = vpop.f32.mrb[0].mxu0
    %v1672 = vadd.f32 0.0, %v1671
    %v1673 = vpop.f32.mrb[0].mxu0
    %v1674 = vpop.f32.mrb[0].mxu0
    %1675 = vdwg.mxu0
    %1676 = vmatprep.subr.bf16.mxu0 0
    %1677 = vmatpush1.bf16.msra.mxu0 %v615
    %1678 = vmatprep.subr.bf16.mxu0 0
    %1679 = vmatpush1.bf16.msra.mxu0 %v618
    %1680 = vmatprep.subr.bf16.mxu0 0
    %1681 = vmatpush1.bf16.msra.mxu0 %v621
    %1682 = vmatprep.subr.bf16.mxu0 0
    %1683 = vmatpush1.bf16.msra.mxu0 %v624
    %1684 = vmatprep.subr.bf16.mxu0 0
    %1685 = vmatpush1.bf16.msra.mxu0 %v627
    %1686 = vmatprep.subr.bf16.mxu0 0
    %1687 = vmatpush1.bf16.msra.mxu0 %v630
    %1688 = vmatprep.subr.bf16.mxu0 0
    %1689 = vmatpush1.bf16.msra.mxu0 %v633
    %1690 = vmatprep.subr.bf16.mxu0 0
    %1691 = vmatpush1.bf16.msra.mxu0 %v636
    %1692 = vmatprep.subr.bf16.mxu0 0
    %1693 = vmatpush1.bf16.msra.mxu0 0
    %1694 = vmatprep.subr.bf16.mxu0 0
    %1695 = vmatpush1.bf16.msra.mxu0 0
    %1696 = vmatprep.subr.bf16.mxu0 0
    %1697 = vmatpush1.bf16.msra.mxu0 0
    %1698 = vmatprep.subr.bf16.mxu0 0
    %1699 = vmatpush1.bf16.msra.mxu0 0
    %1700 = vmatprep.subr.bf16.mxu0 0
    %1701 = vmatpush1.bf16.msra.mxu0 0
    %1702 = vmatprep.subr.bf16.mxu0 0
    %1703 = vmatpush1.bf16.msra.mxu0 0
    %1704 = vmatprep.subr.bf16.mxu0 0
    %1705 = vmatpush1.bf16.msra.mxu0 0
    %1706 = vmatprep.subr.bf16.mxu0 0
    %1707 = vmatpush1.bf16.msra.mxu0 0
    %1708 = vmatprep.mubr.bf16.mxu0 0
    %1709 = vmatmul.mubr.bf16.gmra.mrb[0].mxu0 %v1427
    %v1710 = vpop.f32.mrb[0].mxu0
    %v1711 = vadd.f32 0.0, %v1710
    %v1712 = vpop.f32.mrb[0].mxu0
    %v1713 = vpop.f32.mrb[0].mxu0
    %v1714 = vpop.f32.mrb[0].mxu0
    %1715 = vdwg.mxu0
    %v1716 = vadd.f32 %v1632, %v1670
    %v1717 = vxor.u32 %v1716, 2147483648
    %v1718 = vmul.f32 %v1717, 1.442695
    %v1719 = vpow.pop %v1718
    %v1720 = vadd.f32 %v1719, 1.0
    %v1721 = vrcp.pop %v1720
    %v1722 = vmul.f32 1.0, %v1721
    %v1723 = vadd.f32 %v1633, %v1672
    %v1724 = vxor.u32 %v1723, 2147483648
    %v1725 = vmul.f32 %v1724, 1.442695
    %v1726 = vpow.pop %v1725
    %v1727 = vadd.f32 %v1726, 1.0
    %v1728 = vrcp.pop %v1727
    %v1729 = vmul.f32 1.0, %v1728
    %v1730 = vadd.f32 %v1711, %v439
    %v1731 = vmul.f32 %v1722, %v1730
    %v1732 = vadd.f32 %v1634, %v1731
    %v1733 = vtanh.pop %v1732
    %v1734 = vsub.f32 1.0, %v1729
    %v1735 = vmul.f32 %v1734, %v1733
    %v1736 = vmul.f32 %v1729, %v1426
    %v1737 = vadd.f32 %v1735, %v1736
    %1738 = vadd.xlane.f32.xlu0 %v1737
    %v1739 = vpop.xlane.xlu0 %1738
    %v1740 = vmul.f32 %v1739, 0.0078125
    %v1741 = vmul.f32 %v1737, %v1737
    %1742 = vadd.xlane.f32.xlu0 %v1741
    %v1743 = vpop.xlane.xlu0 %1742
    %v1744 = vmul.f32 %v1743, 0.0078125
    %v1745 = vmul.f32 %v1740, %v1740
    %v1746 = vsub.f32 %v1744, %v1745
    %v1747 = vmax.f32 %v1746, 0.0
    %v1748 = vsub.f32 %v1737, %v1740
    %v1749 = vadd.f32 %v1747, 1e-05
    %v1750 = vrsqrt.pop %v1749
    %v1751 = vmul.f32 %v1748, %v1750
    %v1752 = vmul.f32 %v1751, %v446
    %v1753 = vadd.f32 %v1752, %v453
    %v1754 = vpack.c.bf16 %v1753, %v1753
    %1755 = vmatprep.subr.bf16.mxu0 %v894
    %1756 = vmatpush1.bf16.msra.mxu0 %v893
    %1757 = vmatprep.subr.bf16.mxu0 %v897
    %1758 = vmatpush1.bf16.msra.mxu0 %v896
    %1759 = vmatprep.subr.bf16.mxu0 %v900
    %1760 = vmatpush1.bf16.msra.mxu0 %v899
    %1761 = vmatprep.subr.bf16.mxu0 %v903
    %1762 = vmatpush1.bf16.msra.mxu0 %v902
    %1763 = vmatprep.subr.bf16.mxu0 %v906
    %1764 = vmatpush1.bf16.msra.mxu0 %v905
    %1765 = vmatprep.subr.bf16.mxu0 %v909
    %1766 = vmatpush1.bf16.msra.mxu0 %v908
    %1767 = vmatprep.subr.bf16.mxu0 %v912
    %1768 = vmatpush1.bf16.msra.mxu0 %v911
    %1769 = vmatprep.subr.bf16.mxu0 %v915
    %1770 = vmatpush1.bf16.msra.mxu0 %v914
    %1771 = vmatprep.subr.bf16.mxu0 0
    %1772 = vmatpush1.bf16.msra.mxu0 0
    %1773 = vmatprep.subr.bf16.mxu0 0
    %1774 = vmatpush1.bf16.msra.mxu0 0
    %1775 = vmatprep.subr.bf16.mxu0 0
    %1776 = vmatpush1.bf16.msra.mxu0 0
    %1777 = vmatprep.subr.bf16.mxu0 0
    %1778 = vmatpush1.bf16.msra.mxu0 0
    %1779 = vmatprep.subr.bf16.mxu0 0
    %1780 = vmatpush1.bf16.msra.mxu0 0
    %1781 = vmatprep.subr.bf16.mxu0 0
    %1782 = vmatpush1.bf16.msra.mxu0 0
    %1783 = vmatprep.subr.bf16.mxu0 0
    %1784 = vmatpush1.bf16.msra.mxu0 0
    %1785 = vmatprep.subr.bf16.mxu0 0
    %1786 = vmatpush1.bf16.msra.mxu0 0
    %1787 = vmatprep.mubr.bf16.mxu0 0
    %1788 = vmatmul.mubr.bf16.gmra.mrb[0].mxu0 %v1754
    %v1789 = vpop.f32.mrb[0].mxu0
    %v1790 = vadd.f32 %v460, %v1789
    %v1791 = vpop.f32.mrb[0].mxu0
    %v1792 = vadd.f32 %v464, %v1791
    %v1793 = vpop.f32.mrb[0].mxu0
    %v1794 = vpop.f32.mrb[0].mxu0
    %1795 = vdwg.mxu0
    %1796 = vmatprep.subr.bf16.mxu0 0
    %1797 = vmatpush1.bf16.msra.mxu0 %v895
    %1798 = vmatprep.subr.bf16.mxu0 0
    %1799 = vmatpush1.bf16.msra.mxu0 %v898
    %1800 = vmatprep.subr.bf16.mxu0 0
    %1801 = vmatpush1.bf16.msra.mxu0 %v901
    %1802 = vmatprep.subr.bf16.mxu0 0
    %1803 = vmatpush1.bf16.msra.mxu0 %v904
    %1804 = vmatprep.subr.bf16.mxu0 0
    %1805 = vmatpush1.bf16.msra.mxu0 %v907
    %1806 = vmatprep.subr.bf16.mxu0 0
    %1807 = vmatpush1.bf16.msra.mxu0 %v910
    %1808 = vmatprep.subr.bf16.mxu0 0
    %1809 = vmatpush1.bf16.msra.mxu0 %v913
    %1810 = vmatprep.subr.bf16.mxu0 0
    %1811 = vmatpush1.bf16.msra.mxu0 %v916
    %1812 = vmatprep.subr.bf16.mxu0 0
    %1813 = vmatpush1.bf16.msra.mxu0 0
    %1814 = vmatprep.subr.bf16.mxu0 0
    %1815 = vmatpush1.bf16.msra.mxu0 0
    %1816 = vmatprep.subr.bf16.mxu0 0
    %1817 = vmatpush1.bf16.msra.mxu0 0
    %1818 = vmatprep.subr.bf16.mxu0 0
    %1819 = vmatpush1.bf16.msra.mxu0 0
    %1820 = vmatprep.subr.bf16.mxu0 0
    %1821 = vmatpush1.bf16.msra.mxu0 0
    %1822 = vmatprep.subr.bf16.mxu0 0
    %1823 = vmatpush1.bf16.msra.mxu0 0
    %1824 = vmatprep.subr.bf16.mxu0 0
    %1825 = vmatpush1.bf16.msra.mxu0 0
    %1826 = vmatprep.subr.bf16.mxu0 0
    %1827 = vmatpush1.bf16.msra.mxu0 0
    %1828 = vmatprep.mubr.bf16.mxu0 0
    %1829 = vmatmul.mubr.bf16.gmra.mrb[0].mxu0 %v1754
    %v1830 = vpop.f32.mrb[0].mxu0
    %v1831 = vadd.f32 %v468, %v1830
    %v1832 = vpop.f32.mrb[0].mxu0
    %v1833 = vpop.f32.mrb[0].mxu0
    %v1834 = vpop.f32.mrb[0].mxu0
    %1835 = vdwg.mxu0
    %v1836 = vpack.c.bf16 %v1628, %v1628
    %1837 = vmatprep.subr.bf16.mxu0 %v1136
    %1838 = vmatpush1.bf16.msra.mxu0 %v1135
    %1839 = vmatprep.subr.bf16.mxu0 %v1139
    %1840 = vmatpush1.bf16.msra.mxu0 %v1138
    %1841 = vmatprep.subr.bf16.mxu0 %v1142
    %1842 = vmatpush1.bf16.msra.mxu0 %v1141
    %1843 = vmatprep.subr.bf16.mxu0 %v1145
    %1844 = vmatpush1.bf16.msra.mxu0 %v1144
    %1845 = vmatprep.subr.bf16.mxu0 %v1148
    %1846 = vmatpush1.bf16.msra.mxu0 %v1147
    %1847 = vmatprep.subr.bf16.mxu0 %v1151
    %1848 = vmatpush1.bf16.msra.mxu0 %v1150
    %1849 = vmatprep.subr.bf16.mxu0 %v1154
    %1850 = vmatpush1.bf16.msra.mxu0 %v1153
    %1851 = vmatprep.subr.bf16.mxu0 %v1157
    %1852 = vmatpush1.bf16.msra.mxu0 %v1156
    %1853 = vmatprep.subr.bf16.mxu0 0
    %1854 = vmatpush1.bf16.msra.mxu0 0
    %1855 = vmatprep.subr.bf16.mxu0 0
    %1856 = vmatpush1.bf16.msra.mxu0 0
    %1857 = vmatprep.subr.bf16.mxu0 0
    %1858 = vmatpush1.bf16.msra.mxu0 0
    %1859 = vmatprep.subr.bf16.mxu0 0
    %1860 = vmatpush1.bf16.msra.mxu0 0
    %1861 = vmatprep.subr.bf16.mxu0 0
    %1862 = vmatpush1.bf16.msra.mxu0 0
    %1863 = vmatprep.subr.bf16.mxu0 0
    %1864 = vmatpush1.bf16.msra.mxu0 0
    %1865 = vmatprep.subr.bf16.mxu0 0
    %1866 = vmatpush1.bf16.msra.mxu0 0
    %1867 = vmatprep.subr.bf16.mxu0 0
    %1868 = vmatpush1.bf16.msra.mxu0 0
    %1869 = vmatprep.mubr.bf16.mxu0 0
    %1870 = vmatmul.mubr.bf16.gmra.mrb[0].mxu0 %v1836
    %v1871 = vpop.f32.mrb[0].mxu0
    %v1872 = vadd.f32 0.0, %v1871
    %v1873 = vpop.f32.mrb[0].mxu0
    %v1874 = vadd.f32 0.0, %v1873
    %v1875 = vpop.f32.mrb[0].mxu0
    %v1876 = vpop.f32.mrb[0].mxu0
    %1877 = vdwg.mxu0
    %1878 = vmatprep.subr.bf16.mxu0 0
    %1879 = vmatpush1.bf16.msra.mxu0 %v1137
    %1880 = vmatprep.subr.bf16.mxu0 0
    %1881 = vmatpush1.bf16.msra.mxu0 %v1140
    %1882 = vmatprep.subr.bf16.mxu0 0
    %1883 = vmatpush1.bf16.msra.mxu0 %v1143
    %1884 = vmatprep.subr.bf16.mxu0 0
    %1885 = vmatpush1.bf16.msra.mxu0 %v1146
    %1886 = vmatprep.subr.bf16.mxu0 0
    %1887 = vmatpush1.bf16.msra.mxu0 %v1149
    %1888 = vmatprep.subr.bf16.mxu0 0
    %1889 = vmatpush1.bf16.msra.mxu0 %v1152
    %1890 = vmatprep.subr.bf16.mxu0 0
    %1891 = vmatpush1.bf16.msra.mxu0 %v1155
    %1892 = vmatprep.subr.bf16.mxu0 0
    %1893 = vmatpush1.bf16.msra.mxu0 %v1158
    %1894 = vmatprep.subr.bf16.mxu0 0
    %1895 = vmatpush1.bf16.msra.mxu0 0
    %1896 = vmatprep.subr.bf16.mxu0 0
    %1897 = vmatpush1.bf16.msra.mxu0 0
    %1898 = vmatprep.subr.bf16.mxu0 0
    %1899 = vmatpush1.bf16.msra.mxu0 0
    %1900 = vmatprep.subr.bf16.mxu0 0
    %1901 = vmatpush1.bf16.msra.mxu0 0
    %1902 = vmatprep.subr.bf16.mxu0 0
    %1903 = vmatpush1.bf16.msra.mxu0 0
    %1904 = vmatprep.subr.bf16.mxu0 0
    %1905 = vmatpush1.bf16.msra.mxu0 0
    %1906 = vmatprep.subr.bf16.mxu0 0
    %1907 = vmatpush1.bf16.msra.mxu0 0
    %1908 = vmatprep.subr.bf16.mxu0 0
    %1909 = vmatpush1.bf16.msra.mxu0 0
    %1910 = vmatprep.mubr.bf16.mxu0 0
    %1911 = vmatmul.mubr.bf16.gmra.mrb[0].mxu0 %v1836
    %v1912 = vpop.f32.mrb[0].mxu0
    %v1913 = vadd.f32 0.0, %v1912
    %v1914 = vpop.f32.mrb[0].mxu0
    %v1915 = vpop.f32.mrb[0].mxu0
    %v1916 = vpop.f32.mrb[0].mxu0
    %1917 = vdwg.mxu0
    %v1918 = vadd.f32 %v1790, %v1872
    %v1919 = vxor.u32 %v1918, 2147483648
    %v1920 = vmul.f32 %v1919, 1.442695
    %v1921 = vpow.pop %v1920
    %v1922 = vadd.f32 %v1921, 1.0
    %v1923 = vrcp.pop %v1922
    %v1924 = vmul.f32 1.0, %v1923
    %v1925 = vadd.f32 %v1792, %v1874
    %v1926 = vxor.u32 %v1925, 2147483648
    %v1927 = vmul.f32 %v1926, 1.442695
    %v1928 = vpow.pop %v1927
    %v1929 = vadd.f32 %v1928, 1.0
    %v1930 = vrcp.pop %v1929
    %v1931 = vmul.f32 1.0, %v1930
    %v1932 = vadd.f32 %v1913, %v477
    %v1933 = vmul.f32 %v1924, %v1932
    %v1934 = vadd.f32 %v1831, %v1933
    %v1935 = vtanh.pop %v1934
    %v1936 = vsub.f32 1.0, %v1931
    %v1937 = vmul.f32 %v1936, %v1935
    %v1938 = vmul.f32 %v1931, %v1628
    %v1939 = vadd.f32 %v1937, %v1938
    %1940 = vadd.xlane.f32.xlu0 %v1939
    %v1941 = vpop.xlane.xlu0 %1940
    %v1942 = vmul.f32 %v1941, 0.015625
    %v1943 = vmul.f32 %v1939, %v1939
    %1944 = vadd.xlane.f32.xlu0 %v1943
    %v1945 = vpop.xlane.xlu0 %1944
    %v1946 = vmul.f32 %v1945, 0.015625
    %v1947 = vmul.f32 %v1942, %v1942
    %v1948 = vsub.f32 %v1946, %v1947
    %v1949 = vmax.f32 %v1948, 0.0
    %v1950 = vsub.f32 %v1939, %v1942
    %v1951 = vadd.f32 %v1949, 1e-05
    %v1952 = vrsqrt.pop %v1951
    %v1953 = vmul.f32 %v1950, %v1952
    %v1954 = vmul.f32 %v1953, %v484
    %v1955 = vadd.f32 %v1954, %v491
    %s1956 = scalar_lea.vmem [#allocation2], 36
    %v1957 = vld [vmem:[%s1956] sm:$0xff]
    %v1958 = vld [vmem:[%s1956 + $0x8] sm:$0xf]
    %v1959 = vunpack.c.l.bf16 %v1957
    %v1960 = vunpack.c.h.bf16 %v1957
    %v1961 = vunpack.c.l.bf16 %v1958
    %1962 = vmatprep.subr.bf16.mxu0 %v614
    %1963 = vmatpush1.bf16.msra.mxu0 %v613
    %1964 = vmatprep.subr.bf16.mxu0 %v617
    %1965 = vmatpush1.bf16.msra.mxu0 %v616
    %1966 = vmatprep.subr.bf16.mxu0 %v620
    %1967 = vmatpush1.bf16.msra.mxu0 %v619
    %1968 = vmatprep.subr.bf16.mxu0 %v623
    %1969 = vmatpush1.bf16.msra.mxu0 %v622
    %1970 = vmatprep.subr.bf16.mxu0 %v626
    %1971 = vmatpush1.bf16.msra.mxu0 %v625
    %1972 = vmatprep.subr.bf16.mxu0 %v629
    %1973 = vmatpush1.bf16.msra.mxu0 %v628
    %1974 = vmatprep.subr.bf16.mxu0 %v632
    %1975 = vmatpush1.bf16.msra.mxu0 %v631
    %1976 = vmatprep.subr.bf16.mxu0 %v635
    %1977 = vmatpush1.bf16.msra.mxu0 %v634
    %1978 = vmatprep.subr.bf16.mxu0 0
    %1979 = vmatpush1.bf16.msra.mxu0 0
    %1980 = vmatprep.subr.bf16.mxu0 0
    %1981 = vmatpush1.bf16.msra.mxu0 0
    %1982 = vmatprep.subr.bf16.mxu0 0
    %1983 = vmatpush1.bf16.msra.mxu0 0
    %1984 = vmatprep.subr.bf16.mxu0 0
    %1985 = vmatpush1.bf16.msra.mxu0 0
    %1986 = vmatprep.subr.bf16.mxu0 0
    %1987 = vmatpush1.bf16.msra.mxu0 0
    %1988 = vmatprep.subr.bf16.mxu0 0
    %1989 = vmatpush1.bf16.msra.mxu0 0
    %1990 = vmatprep.subr.bf16.mxu0 0
    %1991 = vmatpush1.bf16.msra.mxu0 0
    %1992 = vmatprep.subr.bf16.mxu0 0
    %1993 = vmatpush1.bf16.msra.mxu0 0
    %1994 = vmatprep.mubr.bf16.mxu0 0
    %1995 = vmatmul.mubr.bf16.gmra.mrb[0].mxu0 %v1754
    %v1996 = vpop.f32.mrb[0].mxu0
    %v1997 = vadd.f32 0.0, %v1996
    %v1998 = vpop.f32.mrb[0].mxu0
    %v1999 = vadd.f32 0.0, %v1998
    %v2000 = vpop.f32.mrb[0].mxu0
    %v2001 = vpop.f32.mrb[0].mxu0
    %2002 = vdwg.mxu0
    %2003 = vmatprep.subr.bf16.mxu0 0
    %2004 = vmatpush1.bf16.msra.mxu0 %v615
    %2005 = vmatprep.subr.bf16.mxu0 0
    %2006 = vmatpush1.bf16.msra.mxu0 %v618
    %2007 = vmatprep.subr.bf16.mxu0 0
    %2008 = vmatpush1.bf16.msra.mxu0 %v621
    %2009 = vmatprep.subr.bf16.mxu0 0
    %2010 = vmatpush1.bf16.msra.mxu0 %v624
    %2011 = vmatprep.subr.bf16.mxu0 0
    %2012 = vmatpush1.bf16.msra.mxu0 %v627
    %2013 = vmatprep.subr.bf16.mxu0 0
    %2014 = vmatpush1.bf16.msra.mxu0 %v630
    %2015 = vmatprep.subr.bf16.mxu0 0
    %2016 = vmatpush1.bf16.msra.mxu0 %v633
    %2017 = vmatprep.subr.bf16.mxu0 0
    %2018 = vmatpush1.bf16.msra.mxu0 %v636
    %2019 = vmatprep.subr.bf16.mxu0 0
    %2020 = vmatpush1.bf16.msra.mxu0 0
    %2021 = vmatprep.subr.bf16.mxu0 0
    %2022 = vmatpush1.bf16.msra.mxu0 0
    %2023 = vmatprep.subr.bf16.mxu0 0
    %2024 = vmatpush1.bf16.msra.mxu0 0
    %2025 = vmatprep.subr.bf16.mxu0 0
    %2026 = vmatpush1.bf16.msra.mxu0 0
    %2027 = vmatprep.subr.bf16.mxu0 0
    %2028 = vmatpush1.bf16.msra.mxu0 0
    %2029 = vmatprep.subr.bf16.mxu0 0
    %2030 = vmatpush1.bf16.msra.mxu0 0
    %2031 = vmatprep.subr.bf16.mxu0 0
    %2032 = vmatpush1.bf16.msra.mxu0 0
    %2033 = vmatprep.subr.bf16.mxu0 0
    %2034 = vmatpush1.bf16.msra.mxu0 0
    %2035 = vmatprep.mubr.bf16.mxu0 0
    %2036 = vmatmul.mubr.bf16.gmra.mrb[0].mxu0 %v1754
    %v2037 = vpop.f32.mrb[0].mxu0
    %v2038 = vadd.f32 0.0, %v2037
    %v2039 = vpop.f32.mrb[0].mxu0
    %v2040 = vpop.f32.mrb[0].mxu0
    %v2041 = vpop.f32.mrb[0].mxu0
    %2042 = vdwg.mxu0
    %v2043 = vadd.f32 %v1959, %v1997
    %v2044 = vxor.u32 %v2043, 2147483648
    %v2045 = vmul.f32 %v2044, 1.442695
    %v2046 = vpow.pop %v2045
    %v2047 = vadd.f32 %v2046, 1.0
    %v2048 = vrcp.pop %v2047
    %v2049 = vmul.f32 1.0, %v2048
    %v2050 = vadd.f32 %v1960, %v1999
    %v2051 = vxor.u32 %v2050, 2147483648
    %v2052 = vmul.f32 %v2051, 1.442695
    %v2053 = vpow.pop %v2052
    %v2054 = vadd.f32 %v2053, 1.0
    %v2055 = vrcp.pop %v2054
    %v2056 = vmul.f32 1.0, %v2055
    %v2057 = vadd.f32 %v2038, %v439
    %v2058 = vmul.f32 %v2049, %v2057
    %v2059 = vadd.f32 %v1961, %v2058
    %v2060 = vtanh.pop %v2059
    %v2061 = vsub.f32 1.0, %v2056
    %v2062 = vmul.f32 %v2061, %v2060
    %v2063 = vmul.f32 %v2056, %v1753
    %v2064 = vadd.f32 %v2062, %v2063
    %2065 = vadd.xlane.f32.xlu0 %v2064
    %v2066 = vpop.xlane.xlu0 %2065
    %v2067 = vmul.f32 %v2066, 0.0078125
    %v2068 = vmul.f32 %v2064, %v2064
    %2069 = vadd.xlane.f32.xlu0 %v2068
    %v2070 = vpop.xlane.xlu0 %2069
    %v2071 = vmul.f32 %v2070, 0.0078125
    %v2072 = vmul.f32 %v2067, %v2067
    %v2073 = vsub.f32 %v2071, %v2072
    %v2074 = vmax.f32 %v2073, 0.0
    %v2075 = vsub.f32 %v2064, %v2067
    %v2076 = vadd.f32 %v2074, 1e-05
    %v2077 = vrsqrt.pop %v2076
    %v2078 = vmul.f32 %v2075, %v2077
    %v2079 = vmul.f32 %v2078, %v446
    %v2080 = vadd.f32 %v2079, %v453
    %v2081 = vpack.c.bf16 %v2080, %v2080
    %2082 = vmatprep.subr.bf16.mxu0 %v894
    %2083 = vmatpush1.bf16.msra.mxu0 %v893
    %2084 = vmatprep.subr.bf16.mxu0 %v897
    %2085 = vmatpush1.bf16.msra.mxu0 %v896
    %2086 = vmatprep.subr.bf16.mxu0 %v900
    %2087 = vmatpush1.bf16.msra.mxu0 %v899
    %2088 = vmatprep.subr.bf16.mxu0 %v903
    %2089 = vmatpush1.bf16.msra.mxu0 %v902
    %2090 = vmatprep.subr.bf16.mxu0 %v906
    %2091 = vmatpush1.bf16.msra.mxu0 %v905
    %2092 = vmatprep.subr.bf16.mxu0 %v909
    %2093 = vmatpush1.bf16.msra.mxu0 %v908
    %2094 = vmatprep.subr.bf16.mxu0 %v912
    %2095 = vmatpush1.bf16.msra.mxu0 %v911
    %2096 = vmatprep.subr.bf16.mxu0 %v915
    %2097 = vmatpush1.bf16.msra.mxu0 %v914
    %2098 = vmatprep.subr.bf16.mxu0 0
    %2099 = vmatpush1.bf16.msra.mxu0 0
    %2100 = vmatprep.subr.bf16.mxu0 0
    %2101 = vmatpush1.bf16.msra.mxu0 0
    %2102 = vmatprep.subr.bf16.mxu0 0
    %2103 = vmatpush1.bf16.msra.mxu0 0
    %2104 = vmatprep.subr.bf16.mxu0 0
    %2105 = vmatpush1.bf16.msra.mxu0 0
    %2106 = vmatprep.subr.bf16.mxu0 0
    %2107 = vmatpush1.bf16.msra.mxu0 0
    %2108 = vmatprep.subr.bf16.mxu0 0
    %2109 = vmatpush1.bf16.msra.mxu0 0
    %2110 = vmatprep.subr.bf16.mxu0 0
    %2111 = vmatpush1.bf16.msra.mxu0 0
    %2112 = vmatprep.subr.bf16.mxu0 0
    %2113 = vmatpush1.bf16.msra.mxu0 0
    %2114 = vmatprep.mubr.bf16.mxu0 0
    %2115 = vmatmul.mubr.bf16.gmra.mrb[0].mxu0 %v2081
    %v2116 = vpop.f32.mrb[0].mxu0
    %v2117 = vadd.f32 %v460, %v2116
    %v2118 = vpop.f32.mrb[0].mxu0
    %v2119 = vadd.f32 %v464, %v2118
    %v2120 = vpop.f32.mrb[0].mxu0
    %v2121 = vpop.f32.mrb[0].mxu0
    %2122 = vdwg.mxu0
    %2123 = vmatprep.subr.bf16.mxu0 0
    %2124 = vmatpush1.bf16.msra.mxu0 %v895
    %2125 = vmatprep.subr.bf16.mxu0 0
    %2126 = vmatpush1.bf16.msra.mxu0 %v898
    %2127 = vmatprep.subr.bf16.mxu0 0
    %2128 = vmatpush1.bf16.msra.mxu0 %v901
    %2129 = vmatprep.subr.bf16.mxu0 0
    %2130 = vmatpush1.bf16.msra.mxu0 %v904
    %2131 = vmatprep.subr.bf16.mxu0 0
    %2132 = vmatpush1.bf16.msra.mxu0 %v907
    %2133 = vmatprep.subr.bf16.mxu0 0
    %2134 = vmatpush1.bf16.msra.mxu0 %v910
    %2135 = vmatprep.subr.bf16.mxu0 0
    %2136 = vmatpush1.bf16.msra.mxu0 %v913
    %2137 = vmatprep.subr.bf16.mxu0 0
    %2138 = vmatpush1.bf16.msra.mxu0 %v916
    %2139 = vmatprep.subr.bf16.mxu0 0
    %2140 = vmatpush1.bf16.msra.mxu0 0
    %2141 = vmatprep.subr.bf16.mxu0 0
    %2142 = vmatpush1.bf16.msra.mxu0 0
    %2143 = vmatprep.subr.bf16.mxu0 0
    %2144 = vmatpush1.bf16.msra.mxu0 0
    %2145 = vmatprep.subr.bf16.mxu0 0
    %2146 = vmatpush1.bf16.msra.mxu0 0
    %2147 = vmatprep.subr.bf16.mxu0 0
    %2148 = vmatpush1.bf16.msra.mxu0 0
    %2149 = vmatprep.subr.bf16.mxu0 0
    %2150 = vmatpush1.bf16.msra.mxu0 0
    %2151 = vmatprep.subr.bf16.mxu0 0
    %2152 = vmatpush1.bf16.msra.mxu0 0
    %2153 = vmatprep.subr.bf16.mxu0 0
    %2154 = vmatpush1.bf16.msra.mxu0 0
    %2155 = vmatprep.mubr.bf16.mxu0 0
    %2156 = vmatmul.mubr.bf16.gmra.mrb[0].mxu0 %v2081
    %v2157 = vpop.f32.mrb[0].mxu0
    %v2158 = vadd.f32 %v468, %v2157
    %v2159 = vpop.f32.mrb[0].mxu0
    %v2160 = vpop.f32.mrb[0].mxu0
    %v2161 = vpop.f32.mrb[0].mxu0
    %2162 = vdwg.mxu0
    %v2163 = vpack.c.bf16 %v1955, %v1955
    %2164 = vmatprep.subr.bf16.mxu0 %v1136
    %2165 = vmatpush1.bf16.msra.mxu0 %v1135
    %2166 = vmatprep.subr.bf16.mxu0 %v1139
    %2167 = vmatpush1.bf16.msra.mxu0 %v1138
    %2168 = vmatprep.subr.bf16.mxu0 %v1142
    %2169 = vmatpush1.bf16.msra.mxu0 %v1141
    %2170 = vmatprep.subr.bf16.mxu0 %v1145
    %2171 = vmatpush1.bf16.msra.mxu0 %v1144
    %2172 = vmatprep.subr.bf16.mxu0 %v1148
    %2173 = vmatpush1.bf16.msra.mxu0 %v1147
    %2174 = vmatprep.subr.bf16.mxu0 %v1151
    %2175 = vmatpush1.bf16.msra.mxu0 %v1150
    %2176 = vmatprep.subr.bf16.mxu0 %v1154
    %2177 = vmatpush1.bf16.msra.mxu0 %v1153
    %2178 = vmatprep.subr.bf16.mxu0 %v1157
    %2179 = vmatpush1.bf16.msra.mxu0 %v1156
    %2180 = vmatprep.subr.bf16.mxu0 0
    %2181 = vmatpush1.bf16.msra.mxu0 0
    %2182 = vmatprep.subr.bf16.mxu0 0
    %2183 = vmatpush1.bf16.msra.mxu0 0
    %2184 = vmatprep.subr.bf16.mxu0 0
    %2185 = vmatpush1.bf16.msra.mxu0 0
    %2186 = vmatprep.subr.bf16.mxu0 0
    %2187 = vmatpush1.bf16.msra.mxu0 0
    %2188 = vmatprep.subr.bf16.mxu0 0
    %2189 = vmatpush1.bf16.msra.mxu0 0
    %2190 = vmatprep.subr.bf16.mxu0 0
    %2191 = vmatpush1.bf16.msra.mxu0 0
    %2192 = vmatprep.subr.bf16.mxu0 0
    %2193 = vmatpush1.bf16.msra.mxu0 0
    %2194 = vmatprep.subr.bf16.mxu0 0
    %2195 = vmatpush1.bf16.msra.mxu0 0
    %2196 = vmatprep.mubr.bf16.mxu0 0
    %2197 = vmatmul.mubr.bf16.gmra.mrb[0].mxu0 %v2163
    %v2198 = vpop.f32.mrb[0].mxu0
    %v2199 = vadd.f32 0.0, %v2198
    %v2200 = vpop.f32.mrb[0].mxu0
    %v2201 = vadd.f32 0.0, %v2200
    %v2202 = vpop.f32.mrb[0].mxu0
    %v2203 = vpop.f32.mrb[0].mxu0
    %2204 = vdwg.mxu0
    %2205 = vmatprep.subr.bf16.mxu0 0
    %2206 = vmatpush1.bf16.msra.mxu0 %v1137
    %2207 = vmatprep.subr.bf16.mxu0 0
    %2208 = vmatpush1.bf16.msra.mxu0 %v1140
    %2209 = vmatprep.subr.bf16.mxu0 0
    %2210 = vmatpush1.bf16.msra.mxu0 %v1143
    %2211 = vmatprep.subr.bf16.mxu0 0
    %2212 = vmatpush1.bf16.msra.mxu0 %v1146
    %2213 = vmatprep.subr.bf16.mxu0 0
    %2214 = vmatpush1.bf16.msra.mxu0 %v1149
    %2215 = vmatprep.subr.bf16.mxu0 0
    %2216 = vmatpush1.bf16.msra.mxu0 %v1152
    %2217 = vmatprep.subr.bf16.mxu0 0
    %2218 = vmatpush1.bf16.msra.mxu0 %v1155
    %2219 = vmatprep.subr.bf16.mxu0 0
    %2220 = vmatpush1.bf16.msra.mxu0 %v1158
    %2221 = vmatprep.subr.bf16.mxu0 0
    %2222 = vmatpush1.bf16.msra.mxu0 0
    %2223 = vmatprep.subr.bf16.mxu0 0
    %2224 = vmatpush1.bf16.msra.mxu0 0
    %2225 = vmatprep.subr.bf16.mxu0 0
    %2226 = vmatpush1.bf16.msra.mxu0 0
    %2227 = vmatprep.subr.bf16.mxu0 0
    %2228 = vmatpush1.bf16.msra.mxu0 0
    %2229 = vmatprep.subr.bf16.mxu0 0
    %2230 = vmatpush1.bf16.msra.mxu0 0
    %2231 = vmatprep.subr.bf16.mxu0 0
    %2232 = vmatpush1.bf16.msra.mxu0 0
    %2233 = vmatprep.subr.bf16.mxu0 0
    %2234 = vmatpush1.bf16.msra.mxu0 0
    %2235 = vmatprep.subr.bf16.mxu0 0
    %2236 = vmatpush1.bf16.msra.mxu0 0
    %2237 = vmatprep.mubr.bf16.mxu0 0
    %2238 = vmatmul.mubr.bf16.gmra.mrb[0].mxu0 %v2163
    %v2239 = vpop.f32.mrb[0].mxu0
    %v2240 = vadd.f32 0.0, %v2239
    %v2241 = vpop.f32.mrb[0].mxu0
    %v2242 = vpop.f32.mrb[0].mxu0
    %v2243 = vpop.f32.mrb[0].mxu0
    %2244 = vdwg.mxu0
    %v2245 = vadd.f32 %v2117, %v2199
    %v2246 = vxor.u32 %v2245, 2147483648
    %v2247 = vmul.f32 %v2246, 1.442695
    %v2248 = vpow.pop %v2247
    %v2249 = vadd.f32 %v2248, 1.0
    %v2250 = vrcp.pop %v2249
    %v2251 = vmul.f32 1.0, %v2250
    %v2252 = vadd.f32 %v2119, %v2201
    %v2253 = vxor.u32 %v2252, 2147483648
    %v2254 = vmul.f32 %v2253, 1.442695
    %v2255 = vpow.pop %v2254
    %v2256 = vadd.f32 %v2255, 1.0
    %v2257 = vrcp.pop %v2256
    %v2258 = vmul.f32 1.0, %v2257
    %v2259 = vadd.f32 %v2240, %v477
    %v2260 = vmul.f32 %v2251, %v2259
    %v2261 = vadd.f32 %v2158, %v2260
    %v2262 = vtanh.pop %v2261
    %v2263 = vsub.f32 1.0, %v2258
    %v2264 = vmul.f32 %v2263, %v2262
    %v2265 = vmul.f32 %v2258, %v1955
    %v2266 = vadd.f32 %v2264, %v2265
    %2267 = vadd.xlane.f32.xlu0 %v2266
    %v2268 = vpop.xlane.xlu0 %2267
    %v2269 = vmul.f32 %v2268, 0.015625
    %v2270 = vmul.f32 %v2266, %v2266
    %2271 = vadd.xlane.f32.xlu0 %v2270
    %v2272 = vpop.xlane.xlu0 %2271
    %v2273 = vmul.f32 %v2272, 0.015625
    %v2274 = vmul.f32 %v2269, %v2269
    %v2275 = vsub.f32 %v2273, %v2274
    %v2276 = vmax.f32 %v2275, 0.0
    %v2277 = vsub.f32 %v2266, %v2269
    %v2278 = vadd.f32 %v2276, 1e-05
    %v2279 = vrsqrt.pop %v2278
    %v2280 = vmul.f32 %v2277, %v2279
    %v2281 = vmul.f32 %v2280, %v484
    %v2282 = vadd.f32 %v2281, %v491
    %s2283 = scalar_lea.vmem [#allocation2], 48
    %v2284 = vld [vmem:[%s2283] sm:$0xff]
    %v2285 = vld [vmem:[%s2283 + $0x8] sm:$0xf]
    %v2286 = vunpack.c.l.bf16 %v2284
    %v2287 = vunpack.c.h.bf16 %v2284
    %v2288 = vunpack.c.l.bf16 %v2285
    %2289 = vmatprep.subr.bf16.mxu0 %v614
    %2290 = vmatpush1.bf16.msra.mxu0 %v613
    %2291 = vmatprep.subr.bf16.mxu0 %v617
    %2292 = vmatpush1.bf16.msra.mxu0 %v616
    %2293 = vmatprep.subr.bf16.mxu0 %v620
    %2294 = vmatpush1.bf16.msra.mxu0 %v619
    %2295 = vmatprep.subr.bf16.mxu0 %v623
    %2296 = vmatpush1.bf16.msra.mxu0 %v622
    %2297 = vmatprep.subr.bf16.mxu0 %v626
    %2298 = vmatpush1.bf16.msra.mxu0 %v625
    %2299 = vmatprep.subr.bf16.mxu0 %v629
    %2300 = vmatpush1.bf16.msra.mxu0 %v628
    %2301 = vmatprep.subr.bf16.mxu0 %v632
    %2302 = vmatpush1.bf16.msra.mxu0 %v631
    %2303 = vmatprep.subr.bf16.mxu0 %v635
    %2304 = vmatpush1.bf16.msra.mxu0 %v634
    %2305 = vmatprep.subr.bf16.mxu0 0
    %2306 = vmatpush1.bf16.msra.mxu0 0
    %2307 = vmatprep.subr.bf16.mxu0 0
    %2308 = vmatpush1.bf16.msra.mxu0 0
    %2309 = vmatprep.subr.bf16.mxu0 0
    %2310 = vmatpush1.bf16.msra.mxu0 0
    %2311 = vmatprep.subr.bf16.mxu0 0
    %2312 = vmatpush1.bf16.msra.mxu0 0
    %2313 = vmatprep.subr.bf16.mxu0 0
    %2314 = vmatpush1.bf16.msra.mxu0 0
    %2315 = vmatprep.subr.bf16.mxu0 0
    %2316 = vmatpush1.bf16.msra.mxu0 0
    %2317 = vmatprep.subr.bf16.mxu0 0
    %2318 = vmatpush1.bf16.msra.mxu0 0
    %2319 = vmatprep.subr.bf16.mxu0 0
    %2320 = vmatpush1.bf16.msra.mxu0 0
    %2321 = vmatprep.mubr.bf16.mxu0 0
    %2322 = vmatmul.mubr.bf16.gmra.mrb[0].mxu0 %v2081
    %v2323 = vpop.f32.mrb[0].mxu0
    %v2324 = vadd.f32 0.0, %v2323
    %v2325 = vpop.f32.mrb[0].mxu0
    %v2326 = vadd.f32 0.0, %v2325
    %v2327 = vpop.f32.mrb[0].mxu0
    %v2328 = vpop.f32.mrb[0].mxu0
    %2329 = vdwg.mxu0
    %2330 = vmatprep.subr.bf16.mxu0 0
    %2331 = vmatpush1.bf16.msra.mxu0 %v615
    %2332 = vmatprep.subr.bf16.mxu0 0
    %2333 = vmatpush1.bf16.msra.mxu0 %v618
    %2334 = vmatprep.subr.bf16.mxu0 0
    %2335 = vmatpush1.bf16.msra.mxu0 %v621
    %2336 = vmatprep.subr.bf16.mxu0 0
    %2337 = vmatpush1.bf16.msra.mxu0 %v624
    %2338 = vmatprep.subr.bf16.mxu0 0
    %2339 = vmatpush1.bf16.msra.mxu0 %v627
    %2340 = vmatprep.subr.bf16.mxu0 0
    %2341 = vmatpush1.bf16.msra.mxu0 %v630
    %2342 = vmatprep.subr.bf16.mxu0 0
    %2343 = vmatpush1.bf16.msra.mxu0 %v633
    %2344 = vmatprep.subr.bf16.mxu0 0
    %2345 = vmatpush1.bf16.msra.mxu0 %v636
    %2346 = vmatprep.subr.bf16.mxu0 0
    %2347 = vmatpush1.bf16.msra.mxu0 0
    %2348 = vmatprep.subr.bf16.mxu0 0
    %2349 = vmatpush1.bf16.msra.mxu0 0
    %2350 = vmatprep.subr.bf16.mxu0 0
    %2351 = vmatpush1.bf16.msra.mxu0 0
    %2352 = vmatprep.subr.bf16.mxu0 0
    %2353 = vmatpush1.bf16.msra.mxu0 0
    %2354 = vmatprep.subr.bf16.mxu0 0
    %2355 = vmatpush1.bf16.msra.mxu0 0
    %2356 = vmatprep.subr.bf16.mxu0 0
    %2357 = vmatpush1.bf16.msra.mxu0 0
    %2358 = vmatprep.subr.bf16.mxu0 0
    %2359 = vmatpush1.bf16.msra.mxu0 0
    %2360 = vmatprep.subr.bf16.mxu0 0
    %2361 = vmatpush1.bf16.msra.mxu0 0
    %2362 = vmatprep.mubr.bf16.mxu0 0
    %2363 = vmatmul.mubr.bf16.gmra.mrb[0].mxu0 %v2081
    %v2364 = vpop.f32.mrb[0].mxu0
    %v2365 = vadd.f32 0.0, %v2364
    %v2366 = vpop.f32.mrb[0].mxu0
    %v2367 = vpop.f32.mrb[0].mxu0
    %v2368 = vpop.f32.mrb[0].mxu0
    %2369 = vdwg.mxu0
    %v2370 = vadd.f32 %v2286, %v2324
    %v2371 = vxor.u32 %v2370, 2147483648
    %v2372 = vmul.f32 %v2371, 1.442695
    %v2373 = vpow.pop %v2372
    %v2374 = vadd.f32 %v2373, 1.0
    %v2375 = vrcp.pop %v2374
    %v2376 = vmul.f32 1.0, %v2375
    %v2377 = vadd.f32 %v2287, %v2326
    %v2378 = vxor.u32 %v2377, 2147483648
    %v2379 = vmul.f32 %v2378, 1.442695
    %v2380 = vpow.pop %v2379
    %v2381 = vadd.f32 %v2380, 1.0
    %v2382 = vrcp.pop %v2381
    %v2383 = vmul.f32 1.0, %v2382
    %v2384 = vadd.f32 %v2365, %v439
    %v2385 = vmul.f32 %v2376, %v2384
    %v2386 = vadd.f32 %v2288, %v2385
    %v2387 = vtanh.pop %v2386
    %v2388 = vsub.f32 1.0, %v2383
    %v2389 = vmul.f32 %v2388, %v2387
    %v2390 = vmul.f32 %v2383, %v2080
    %v2391 = vadd.f32 %v2389, %v2390
    %2392 = vadd.xlane.f32.xlu0 %v2391
    %v2393 = vpop.xlane.xlu0 %2392
    %v2394 = vmul.f32 %v2393, 0.0078125
    %v2395 = vmul.f32 %v2391, %v2391
    %2396 = vadd.xlane.f32.xlu0 %v2395
    %v2397 = vpop.xlane.xlu0 %2396
    %v2398 = vmul.f32 %v2397, 0.0078125
    %v2399 = vmul.f32 %v2394, %v2394
    %v2400 = vsub.f32 %v2398, %v2399
    %v2401 = vmax.f32 %v2400, 0.0
    %v2402 = vsub.f32 %v2391, %v2394
    %v2403 = vadd.f32 %v2401, 1e-05
    %v2404 = vrsqrt.pop %v2403
    %v2405 = vmul.f32 %v2402, %v2404
    %v2406 = vmul.f32 %v2405, %v446
    %v2407 = vadd.f32 %v2406, %v453
    %v2408 = vpack.c.bf16 %v2407, %v2407
    %2409 = vmatprep.subr.bf16.mxu0 %v894
    %2410 = vmatpush1.bf16.msra.mxu0 %v893
    %2411 = vmatprep.subr.bf16.mxu0 %v897
    %2412 = vmatpush1.bf16.msra.mxu0 %v896
    %2413 = vmatprep.subr.bf16.mxu0 %v900
    %2414 = vmatpush1.bf16.msra.mxu0 %v899
    %2415 = vmatprep.subr.bf16.mxu0 %v903
    %2416 = vmatpush1.bf16.msra.mxu0 %v902
    %2417 = vmatprep.subr.bf16.mxu0 %v906
    %2418 = vmatpush1.bf16.msra.mxu0 %v905
    %2419 = vmatprep.subr.bf16.mxu0 %v909
    %2420 = vmatpush1.bf16.msra.mxu0 %v908
    %2421 = vmatprep.subr.bf16.mxu0 %v912
    %2422 = vmatpush1.bf16.msra.mxu0 %v911
    %2423 = vmatprep.subr.bf16.mxu0 %v915
    %2424 = vmatpush1.bf16.msra.mxu0 %v914
    %2425 = vmatprep.subr.bf16.mxu0 0
    %2426 = vmatpush1.bf16.msra.mxu0 0
    %2427 = vmatprep.subr.bf16.mxu0 0
    %2428 = vmatpush1.bf16.msra.mxu0 0
    %2429 = vmatprep.subr.bf16.mxu0 0
    %2430 = vmatpush1.bf16.msra.mxu0 0
    %2431 = vmatprep.subr.bf16.mxu0 0
    %2432 = vmatpush1.bf16.msra.mxu0 0
    %2433 = vmatprep.subr.bf16.mxu0 0
    %2434 = vmatpush1.bf16.msra.mxu0 0
    %2435 = vmatprep.subr.bf16.mxu0 0
    %2436 = vmatpush1.bf16.msra.mxu0 0
    %2437 = vmatprep.subr.bf16.mxu0 0
    %2438 = vmatpush1.bf16.msra.mxu0 0
    %2439 = vmatprep.subr.bf16.mxu0 0
    %2440 = vmatpush1.bf16.msra.mxu0 0
    %2441 = vmatprep.mubr.bf16.mxu0 0
    %2442 = vmatmul.mubr.bf16.gmra.mrb[0].mxu0 %v2408
    %v2443 = vpop.f32.mrb[0].mxu0
    %v2444 = vadd.f32 %v460, %v2443
    %v2445 = vpop.f32.mrb[0].mxu0
    %v2446 = vadd.f32 %v464, %v2445
    %v2447 = vpop.f32.mrb[0].mxu0
    %v2448 = vpop.f32.mrb[0].mxu0
    %2449 = vdwg.mxu0
    %2450 = vmatprep.subr.bf16.mxu0 0
    %2451 = vmatpush1.bf16.msra.mxu0 %v895
    %2452 = vmatprep.subr.bf16.mxu0 0
    %2453 = vmatpush1.bf16.msra.mxu0 %v898
    %2454 = vmatprep.subr.bf16.mxu0 0
    %2455 = vmatpush1.bf16.msra.mxu0 %v901
    %2456 = vmatprep.subr.bf16.mxu0 0
    %2457 = vmatpush1.bf16.msra.mxu0 %v904
    %2458 = vmatprep.subr.bf16.mxu0 0
    %2459 = vmatpush1.bf16.msra.mxu0 %v907
    %2460 = vmatprep.subr.bf16.mxu0 0
    %2461 = vmatpush1.bf16.msra.mxu0 %v910
    %2462 = vmatprep.subr.bf16.mxu0 0
    %2463 = vmatpush1.bf16.msra.mxu0 %v913
    %2464 = vmatprep.subr.bf16.mxu0 0
    %2465 = vmatpush1.bf16.msra.mxu0 %v916
    %2466 = vmatprep.subr.bf16.mxu0 0
    %2467 = vmatpush1.bf16.msra.mxu0 0
    %2468 = vmatprep.subr.bf16.mxu0 0
    %2469 = vmatpush1.bf16.msra.mxu0 0
    %2470 = vmatprep.subr.bf16.mxu0 0
    %2471 = vmatpush1.bf16.msra.mxu0 0
    %2472 = vmatprep.subr.bf16.mxu0 0
    %2473 = vmatpush1.bf16.msra.mxu0 0
    %2474 = vmatprep.subr.bf16.mxu0 0
    %2475 = vmatpush1.bf16.msra.mxu0 0
    %2476 = vmatprep.subr.bf16.mxu0 0
    %2477 = vmatpush1.bf16.msra.mxu0 0
    %2478 = vmatprep.subr.bf16.mxu0 0
    %2479 = vmatpush1.bf16.msra.mxu0 0
    %2480 = vmatprep.subr.bf16.mxu0 0
    %2481 = vmatpush1.bf16.msra.mxu0 0
    %2482 = vmatprep.mubr.bf16.mxu0 0
    %2483 = vmatmul.mubr.bf16.gmra.mrb[0].mxu0 %v2408
    %v2484 = vpop.f32.mrb[0].mxu0
    %v2485 = vadd.f32 %v468, %v2484
    %v2486 = vpop.f32.mrb[0].mxu0
    %v2487 = vpop.f32.mrb[0].mxu0
    %v2488 = vpop.f32.mrb[0].mxu0
    %2489 = vdwg.mxu0
    %v2490 = vpack.c.bf16 %v2282, %v2282
    %2491 = vmatprep.subr.bf16.mxu0 %v1136
    %2492 = vmatpush1.bf16.msra.mxu0 %v1135
    %2493 = vmatprep.subr.bf16.mxu0 %v1139
    %2494 = vmatpush1.bf16.msra.mxu0 %v1138
    %2495 = vmatprep.subr.bf16.mxu0 %v1142
    %2496 = vmatpush1.bf16.msra.mxu0 %v1141
    %2497 = vmatprep.subr.bf16.mxu0 %v1145
    %2498 = vmatpush1.bf16.msra.mxu0 %v1144
    %2499 = vmatprep.subr.bf16.mxu0 %v1148
    %2500 = vmatpush1.bf16.msra.mxu0 %v1147
    %2501 = vmatprep.subr.bf16.mxu0 %v1151
    %2502 = vmatpush1.bf16.msra.mxu0 %v1150
    %2503 = vmatprep.subr.bf16.mxu0 %v1154
    %2504 = vmatpush1.bf16.msra.mxu0 %v1153
    %2505 = vmatprep.subr.bf16.mxu0 %v1157
    %2506 = vmatpush1.bf16.msra.mxu0 %v1156
    %2507 = vmatprep.subr.bf16.mxu0 0
    %2508 = vmatpush1.bf16.msra.mxu0 0
    %2509 = vmatprep.subr.bf16.mxu0 0
    %2510 = vmatpush1.bf16.msra.mxu0 0
    %2511 = vmatprep.subr.bf16.mxu0 0
    %2512 = vmatpush1.bf16.msra.mxu0 0
    %2513 = vmatprep.subr.bf16.mxu0 0
    %2514 = vmatpush1.bf16.msra.mxu0 0
    %2515 = vmatprep.subr.bf16.mxu0 0
    %2516 = vmatpush1.bf16.msra.mxu0 0
    %2517 = vmatprep.subr.bf16.mxu0 0
    %2518 = vmatpush1.bf16.msra.mxu0 0
    %2519 = vmatprep.subr.bf16.mxu0 0
    %2520 = vmatpush1.bf16.msra.mxu0 0
    %2521 = vmatprep.subr.bf16.mxu0 0
    %2522 = vmatpush1.bf16.msra.mxu0 0
    %2523 = vmatprep.mubr.bf16.mxu0 0
    %2524 = vmatmul.mubr.bf16.gmra.mrb[0].mxu0 %v2490
    %v2525 = vpop.f32.mrb[0].mxu0
    %v2526 = vadd.f32 0.0, %v2525
    %v2527 = vpop.f32.mrb[0].mxu0
    %v2528 = vadd.f32 0.0, %v2527
    %v2529 = vpop.f32.mrb[0].mxu0
    %v2530 = vpop.f32.mrb[0].mxu0
    %2531 = vdwg.mxu0
    %2532 = vmatprep.subr.bf16.mxu0 0
    %2533 = vmatpush1.bf16.msra.mxu0 %v1137
    %2534 = vmatprep.subr.bf16.mxu0 0
    %2535 = vmatpush1.bf16.msra.mxu0 %v1140
    %2536 = vmatprep.subr.bf16.mxu0 0
    %2537 = vmatpush1.bf16.msra.mxu0 %v1143
    %2538 = vmatprep.subr.bf16.mxu0 0
    %2539 = vmatpush1.bf16.msra.mxu0 %v1146
    %2540 = vmatprep.subr.bf16.mxu0 0
    %2541 = vmatpush1.bf16.msra.mxu0 %v1149
    %2542 = vmatprep.subr.bf16.mxu0 0
    %2543 = vmatpush1.bf16.msra.mxu0 %v1152
    %2544 = vmatprep.subr.bf16.mxu0 0
    %2545 = vmatpush1.bf16.msra.mxu0 %v1155
    %2546 = vmatprep.subr.bf16.mxu0 0
    %2547 = vmatpush1.bf16.msra.mxu0 %v1158
    %2548 = vmatprep.subr.bf16.mxu0 0
    %2549 = vmatpush1.bf16.msra.mxu0 0
    %2550 = vmatprep.subr.bf16.mxu0 0
    %2551 = vmatpush1.bf16.msra.mxu0 0
    %2552 = vmatprep.subr.bf16.mxu0 0
    %2553 = vmatpush1.bf16.msra.mxu0 0
    %2554 = vmatprep.subr.bf16.mxu0 0
    %2555 = vmatpush1.bf16.msra.mxu0 0
    %2556 = vmatprep.subr.bf16.mxu0 0
    %2557 = vmatpush1.bf16.msra.mxu0 0
    %2558 = vmatprep.subr.bf16.mxu0 0
    %2559 = vmatpush1.bf16.msra.mxu0 0
    %2560 = vmatprep.subr.bf16.mxu0 0
    %2561 = vmatpush1.bf16.msra.mxu0 0
    %2562 = vmatprep.subr.bf16.mxu0 0
    %2563 = vmatpush1.bf16.msra.mxu0 0
    %2564 = vmatprep.mubr.bf16.mxu0 0
    %2565 = vmatmul.mubr.bf16.gmra.mrb[0].mxu0 %v2490
    %v2566 = vpop.f32.mrb[0].mxu0
    %v2567 = vadd.f32 0.0, %v2566
    %v2568 = vpop.f32.mrb[0].mxu0
    %v2569 = vpop.f32.mrb[0].mxu0
    %v2570 = vpop.f32.mrb[0].mxu0
    %2571 = vdwg.mxu0
    %v2572 = vadd.f32 %v2444, %v2526
    %v2573 = vxor.u32 %v2572, 2147483648
    %v2574 = vmul.f32 %v2573, 1.442695
    %v2575 = vpow.pop %v2574
    %v2576 = vadd.f32 %v2575, 1.0
    %v2577 = vrcp.pop %v2576
    %v2578 = vmul.f32 1.0, %v2577
    %v2579 = vadd.f32 %v2446, %v2528
    %v2580 = vxor.u32 %v2579, 2147483648
    %v2581 = vmul.f32 %v2580, 1.442695
    %v2582 = vpow.pop %v2581
    %v2583 = vadd.f32 %v2582, 1.0
    %v2584 = vrcp.pop %v2583
    %v2585 = vmul.f32 1.0, %v2584
    %v2586 = vadd.f32 %v2567, %v477
    %v2587 = vmul.f32 %v2578, %v2586
    %v2588 = vadd.f32 %v2485, %v2587
    %v2589 = vtanh.pop %v2588
    %v2590 = vsub.f32 1.0, %v2585
    %v2591 = vmul.f32 %v2590, %v2589
    %v2592 = vmul.f32 %v2585, %v2282
    %v2593 = vadd.f32 %v2591, %v2592
    %2594 = vadd.xlane.f32.xlu0 %v2593
    %v2595 = vpop.xlane.xlu0 %2594
    %v2596 = vmul.f32 %v2595, 0.015625
    %v2597 = vmul.f32 %v2593, %v2593
    %2598 = vadd.xlane.f32.xlu0 %v2597
    %v2599 = vpop.xlane.xlu0 %2598
    %v2600 = vmul.f32 %v2599, 0.015625
    %v2601 = vmul.f32 %v2596, %v2596
    %v2602 = vsub.f32 %v2600, %v2601
    %v2603 = vmax.f32 %v2602, 0.0
    %v2604 = vsub.f32 %v2593, %v2596
    %v2605 = vadd.f32 %v2603, 1e-05
    %v2606 = vrsqrt.pop %v2605
    %v2607 = vmul.f32 %v2604, %v2606
    %v2608 = vmul.f32 %v2607, %v484
    %v2609 = vadd.f32 %v2608, %v491
    %s2610 = scalar_lea.vmem [#allocation2], 60
    %v2611 = vld [vmem:[%s2610] sm:$0xff]
    %v2612 = vld [vmem:[%s2610 + $0x8] sm:$0xf]
    %v2613 = vunpack.c.l.bf16 %v2611
    %v2614 = vunpack.c.h.bf16 %v2611
    %v2615 = vunpack.c.l.bf16 %v2612
    %2616 = vmatprep.subr.bf16.mxu0 %v614
    %2617 = vmatpush1.bf16.msra.mxu0 %v613
    %2618 = vmatprep.subr.bf16.mxu0 %v617
    %2619 = vmatpush1.bf16.msra.mxu0 %v616
    %2620 = vmatprep.subr.bf16.mxu0 %v620
    %2621 = vmatpush1.bf16.msra.mxu0 %v619
    %2622 = vmatprep.subr.bf16.mxu0 %v623
    %2623 = vmatpush1.bf16.msra.mxu0 %v622
    %2624 = vmatprep.subr.bf16.mxu0 %v626
    %2625 = vmatpush1.bf16.msra.mxu0 %v625
    %2626 = vmatprep.subr.bf16.mxu0 %v629
    %2627 = vmatpush1.bf16.msra.mxu0 %v628
    %2628 = vmatprep.subr.bf16.mxu0 %v632
    %2629 = vmatpush1.bf16.msra.mxu0 %v631
    %2630 = vmatprep.subr.bf16.mxu0 %v635
    %2631 = vmatpush1.bf16.msra.mxu0 %v634
    %2632 = vmatprep.subr.bf16.mxu0 0
    %2633 = vmatpush1.bf16.msra.mxu0 0
    %2634 = vmatprep.subr.bf16.mxu0 0
    %2635 = vmatpush1.bf16.msra.mxu0 0
    %2636 = vmatprep.subr.bf16.mxu0 0
    %2637 = vmatpush1.bf16.msra.mxu0 0
    %2638 = vmatprep.subr.bf16.mxu0 0
    %2639 = vmatpush1.bf16.msra.mxu0 0
    %2640 = vmatprep.subr.bf16.mxu0 0
    %2641 = vmatpush1.bf16.msra.mxu0 0
    %2642 = vmatprep.subr.bf16.mxu0 0
    %2643 = vmatpush1.bf16.msra.mxu0 0
    %2644 = vmatprep.subr.bf16.mxu0 0
    %2645 = vmatpush1.bf16.msra.mxu0 0
    %2646 = vmatprep.subr.bf16.mxu0 0
    %2647 = vmatpush1.bf16.msra.mxu0 0
    %2648 = vmatprep.mubr.bf16.mxu0 0
    %2649 = vmatmul.mubr.bf16.gmra.mrb[0].mxu0 %v2408
    %v2650 = vpop.f32.mrb[0].mxu0
    %v2651 = vadd.f32 0.0, %v2650
    %v2652 = vpop.f32.mrb[0].mxu0
    %v2653 = vadd.f32 0.0, %v2652
    %v2654 = vpop.f32.mrb[0].mxu0
    %v2655 = vpop.f32.mrb[0].mxu0
    %2656 = vdwg.mxu0
    %2657 = vmatprep.subr.bf16.mxu0 0
    %2658 = vmatpush1.bf16.msra.mxu0 %v615
    %2659 = vmatprep.subr.bf16.mxu0 0
    %2660 = vmatpush1.bf16.msra.mxu0 %v618
    %2661 = vmatprep.subr.bf16.mxu0 0
    %2662 = vmatpush1.bf16.msra.mxu0 %v621
    %2663 = vmatprep.subr.bf16.mxu0 0
    %2664 = vmatpush1.bf16.msra.mxu0 %v624
    %2665 = vmatprep.subr.bf16.mxu0 0
    %2666 = vmatpush1.bf16.msra.mxu0 %v627
    %2667 = vmatprep.subr.bf16.mxu0 0
    %2668 = vmatpush1.bf16.msra.mxu0 %v630
    %2669 = vmatprep.subr.bf16.mxu0 0
    %2670 = vmatpush1.bf16.msra.mxu0 %v633
    %2671 = vmatprep.subr.bf16.mxu0 0
    %2672 = vmatpush1.bf16.msra.mxu0 %v636
    %2673 = vmatprep.subr.bf16.mxu0 0
    %2674 = vmatpush1.bf16.msra.mxu0 0
    %2675 = vmatprep.subr.bf16.mxu0 0
    %2676 = vmatpush1.bf16.msra.mxu0 0
    %2677 = vmatprep.subr.bf16.mxu0 0
    %2678 = vmatpush1.bf16.msra.mxu0 0
    %2679 = vmatprep.subr.bf16.mxu0 0
    %2680 = vmatpush1.bf16.msra.mxu0 0
    %2681 = vmatprep.subr.bf16.mxu0 0
    %2682 = vmatpush1.bf16.msra.mxu0 0
    %2683 = vmatprep.subr.bf16.mxu0 0
    %2684 = vmatpush1.bf16.msra.mxu0 0
    %2685 = vmatprep.subr.bf16.mxu0 0
    %2686 = vmatpush1.bf16.msra.mxu0 0
    %2687 = vmatprep.subr.bf16.mxu0 0
    %2688 = vmatpush1.bf16.msra.mxu0 0
    %2689 = vmatprep.mubr.bf16.mxu0 0
    %2690 = vmatmul.mubr.bf16.gmra.mrb[0].mxu0 %v2408
    %v2691 = vpop.f32.mrb[0].mxu0
    %v2692 = vadd.f32 0.0, %v2691
    %v2693 = vpop.f32.mrb[0].mxu0
    %v2694 = vpop.f32.mrb[0].mxu0
    %v2695 = vpop.f32.mrb[0].mxu0
    %2696 = vdwg.mxu0
    %v2697 = vadd.f32 %v2613, %v2651
    %v2698 = vxor.u32 %v2697, 2147483648
    %v2699 = vmul.f32 %v2698, 1.442695
    %v2700 = vpow.pop %v2699
    %v2701 = vadd.f32 %v2700, 1.0
    %v2702 = vrcp.pop %v2701
    %v2703 = vmul.f32 1.0, %v2702
    %v2704 = vadd.f32 %v2614, %v2653
    %v2705 = vxor.u32 %v2704, 2147483648
    %v2706 = vmul.f32 %v2705, 1.442695
    %v2707 = vpow.pop %v2706
    %v2708 = vadd.f32 %v2707, 1.0
    %v2709 = vrcp.pop %v2708
    %v2710 = vmul.f32 1.0, %v2709
    %v2711 = vadd.f32 %v2692, %v439
    %v2712 = vmul.f32 %v2703, %v2711
    %v2713 = vadd.f32 %v2615, %v2712
    %v2714 = vtanh.pop %v2713
    %v2715 = vsub.f32 1.0, %v2710
    %v2716 = vmul.f32 %v2715, %v2714
    %v2717 = vmul.f32 %v2710, %v2407
    %v2718 = vadd.f32 %v2716, %v2717
    %2719 = vadd.xlane.f32.xlu0 %v2718
    %v2720 = vpop.xlane.xlu0 %2719
    %v2721 = vmul.f32 %v2720, 0.0078125
    %v2722 = vmul.f32 %v2718, %v2718
    %2723 = vadd.xlane.f32.xlu0 %v2722
    %v2724 = vpop.xlane.xlu0 %2723
    %v2725 = vmul.f32 %v2724, 0.0078125
    %v2726 = vmul.f32 %v2721, %v2721
    %v2727 = vsub.f32 %v2725, %v2726
    %v2728 = vmax.f32 %v2727, 0.0
    %v2729 = vsub.f32 %v2718, %v2721
    %v2730 = vadd.f32 %v2728, 1e-05
    %v2731 = vrsqrt.pop %v2730
    %v2732 = vmul.f32 %v2729, %v2731
    %v2733 = vmul.f32 %v2732, %v446
    %v2734 = vadd.f32 %v2733, %v453
    %v2735 = vpack.c.bf16 %v2734, %v2734
    %2736 = vmatprep.subr.bf16.mxu0 %v894
    %2737 = vmatpush1.bf16.msra.mxu0 %v893
    %2738 = vmatprep.subr.bf16.mxu0 %v897
    %2739 = vmatpush1.bf16.msra.mxu0 %v896
    %2740 = vmatprep.subr.bf16.mxu0 %v900
    %2741 = vmatpush1.bf16.msra.mxu0 %v899
    %2742 = vmatprep.subr.bf16.mxu0 %v903
    %2743 = vmatpush1.bf16.msra.mxu0 %v902
    %2744 = vmatprep.subr.bf16.mxu0 %v906
    %2745 = vmatpush1.bf16.msra.mxu0 %v905
    %2746 = vmatprep.subr.bf16.mxu0 %v909
    %2747 = vmatpush1.bf16.msra.mxu0 %v908
    %2748 = vmatprep.subr.bf16.mxu0 %v912
    %2749 = vmatpush1.bf16.msra.mxu0 %v911
    %2750 = vmatprep.subr.bf16.mxu0 %v915
    %2751 = vmatpush1.bf16.msra.mxu0 %v914
    %2752 = vmatprep.subr.bf16.mxu0 0
    %2753 = vmatpush1.bf16.msra.mxu0 0
    %2754 = vmatprep.subr.bf16.mxu0 0
    %2755 = vmatpush1.bf16.msra.mxu0 0
    %2756 = vmatprep.subr.bf16.mxu0 0
    %2757 = vmatpush1.bf16.msra.mxu0 0
    %2758 = vmatprep.subr.bf16.mxu0 0
    %2759 = vmatpush1.bf16.msra.mxu0 0
    %2760 = vmatprep.subr.bf16.mxu0 0
    %2761 = vmatpush1.bf16.msra.mxu0 0
    %2762 = vmatprep.subr.bf16.mxu0 0
    %2763 = vmatpush1.bf16.msra.mxu0 0
    %2764 = vmatprep.subr.bf16.mxu0 0
    %2765 = vmatpush1.bf16.msra.mxu0 0
    %2766 = vmatprep.subr.bf16.mxu0 0
    %2767 = vmatpush1.bf16.msra.mxu0 0
    %2768 = vmatprep.mubr.bf16.mxu0 0
    %2769 = vmatmul.mubr.bf16.gmra.mrb[0].mxu0 %v2735
    %v2770 = vpop.f32.mrb[0].mxu0
    %v2771 = vadd.f32 %v460, %v2770
    %v2772 = vpop.f32.mrb[0].mxu0
    %v2773 = vadd.f32 %v464, %v2772
    %v2774 = vpop.f32.mrb[0].mxu0
    %v2775 = vpop.f32.mrb[0].mxu0
    %2776 = vdwg.mxu0
    %2777 = vmatprep.subr.bf16.mxu0 0
    %2778 = vmatpush1.bf16.msra.mxu0 %v895
    %2779 = vmatprep.subr.bf16.mxu0 0
    %2780 = vmatpush1.bf16.msra.mxu0 %v898
    %2781 = vmatprep.subr.bf16.mxu0 0
    %2782 = vmatpush1.bf16.msra.mxu0 %v901
    %2783 = vmatprep.subr.bf16.mxu0 0
    %2784 = vmatpush1.bf16.msra.mxu0 %v904
    %2785 = vmatprep.subr.bf16.mxu0 0
    %2786 = vmatpush1.bf16.msra.mxu0 %v907
    %2787 = vmatprep.subr.bf16.mxu0 0
    %2788 = vmatpush1.bf16.msra.mxu0 %v910
    %2789 = vmatprep.subr.bf16.mxu0 0
    %2790 = vmatpush1.bf16.msra.mxu0 %v913
    %2791 = vmatprep.subr.bf16.mxu0 0
    %2792 = vmatpush1.bf16.msra.mxu0 %v916
    %2793 = vmatprep.subr.bf16.mxu0 0
    %2794 = vmatpush1.bf16.msra.mxu0 0
    %2795 = vmatprep.subr.bf16.mxu0 0
    %2796 = vmatpush1.bf16.msra.mxu0 0
    %2797 = vmatprep.subr.bf16.mxu0 0
    %2798 = vmatpush1.bf16.msra.mxu0 0
    %2799 = vmatprep.subr.bf16.mxu0 0
    %2800 = vmatpush1.bf16.msra.mxu0 0
    %2801 = vmatprep.subr.bf16.mxu0 0
    %2802 = vmatpush1.bf16.msra.mxu0 0
    %2803 = vmatprep.subr.bf16.mxu0 0
    %2804 = vmatpush1.bf16.msra.mxu0 0
    %2805 = vmatprep.subr.bf16.mxu0 0
    %2806 = vmatpush1.bf16.msra.mxu0 0
    %2807 = vmatprep.subr.bf16.mxu0 0
    %2808 = vmatpush1.bf16.msra.mxu0 0
    %2809 = vmatprep.mubr.bf16.mxu0 0
    %2810 = vmatmul.mubr.bf16.gmra.mrb[0].mxu0 %v2735
    %v2811 = vpop.f32.mrb[0].mxu0
    %v2812 = vadd.f32 %v468, %v2811
    %v2813 = vpop.f32.mrb[0].mxu0
    %v2814 = vpop.f32.mrb[0].mxu0
    %v2815 = vpop.f32.mrb[0].mxu0
    %2816 = vdwg.mxu0
    %v2817 = vpack.c.bf16 %v2609, %v2609
    %2818 = vmatprep.subr.bf16.mxu0 %v1136
    %2819 = vmatpush1.bf16.msra.mxu0 %v1135
    %2820 = vmatprep.subr.bf16.mxu0 %v1139
    %2821 = vmatpush1.bf16.msra.mxu0 %v1138
    %2822 = vmatprep.subr.bf16.mxu0 %v1142
    %2823 = vmatpush1.bf16.msra.mxu0 %v1141
    %2824 = vmatprep.subr.bf16.mxu0 %v1145
    %2825 = vmatpush1.bf16.msra.mxu0 %v1144
    %2826 = vmatprep.subr.bf16.mxu0 %v1148
    %2827 = vmatpush1.bf16.msra.mxu0 %v1147
    %2828 = vmatprep.subr.bf16.mxu0 %v1151
    %2829 = vmatpush1.bf16.msra.mxu0 %v1150
    %2830 = vmatprep.subr.bf16.mxu0 %v1154
    %2831 = vmatpush1.bf16.msra.mxu0 %v1153
    %2832 = vmatprep.subr.bf16.mxu0 %v1157
    %2833 = vmatpush1.bf16.msra.mxu0 %v1156
    %2834 = vmatprep.subr.bf16.mxu0 0
    %2835 = vmatpush1.bf16.msra.mxu0 0
    %2836 = vmatprep.subr.bf16.mxu0 0
    %2837 = vmatpush1.bf16.msra.mxu0 0
    %2838 = vmatprep.subr.bf16.mxu0 0
    %2839 = vmatpush1.bf16.msra.mxu0 0
    %2840 = vmatprep.subr.bf16.mxu0 0
    %2841 = vmatpush1.bf16.msra.mxu0 0
    %2842 = vmatprep.subr.bf16.mxu0 0
    %2843 = vmatpush1.bf16.msra.mxu0 0
    %2844 = vmatprep.subr.bf16.mxu0 0
    %2845 = vmatpush1.bf16.msra.mxu0 0
    %2846 = vmatprep.subr.bf16.mxu0 0
    %2847 = vmatpush1.bf16.msra.mxu0 0
    %2848 = vmatprep.subr.bf16.mxu0 0
    %2849 = vmatpush1.bf16.msra.mxu0 0
    %2850 = vmatprep.mubr.bf16.mxu0 0
    %2851 = vmatmul.mubr.bf16.gmra.mrb[0].mxu0 %v2817
    %v2852 = vpop.f32.mrb[0].mxu0
    %v2853 = vadd.f32 0.0, %v2852
    %v2854 = vpop.f32.mrb[0].mxu0
    %v2855 = vadd.f32 0.0, %v2854
    %v2856 = vpop.f32.mrb[0].mxu0
    %v2857 = vpop.f32.mrb[0].mxu0
    %2858 = vdwg.mxu0
    %2859 = vmatprep.subr.bf16.mxu0 0
    %2860 = vmatpush1.bf16.msra.mxu0 %v1137
    %2861 = vmatprep.subr.bf16.mxu0 0
    %2862 = vmatpush1.bf16.msra.mxu0 %v1140
    %2863 = vmatprep.subr.bf16.mxu0 0
    %2864 = vmatpush1.bf16.msra.mxu0 %v1143
    %2865 = vmatprep.subr.bf16.mxu0 0
    %2866 = vmatpush1.bf16.msra.mxu0 %v1146
    %2867 = vmatprep.subr.bf16.mxu0 0
    %2868 = vmatpush1.bf16.msra.mxu0 %v1149
    %2869 = vmatprep.subr.bf16.mxu0 0
    %2870 = vmatpush1.bf16.msra.mxu0 %v1152
    %2871 = vmatprep.subr.bf16.mxu0 0
    %2872 = vmatpush1.bf16.msra.mxu0 %v1155
    %2873 = vmatprep.subr.bf16.mxu0 0
    %2874 = vmatpush1.bf16.msra.mxu0 %v1158
    %2875 = vmatprep.subr.bf16.mxu0 0
    %2876 = vmatpush1.bf16.msra.mxu0 0
    %2877 = vmatprep.subr.bf16.mxu0 0
    %2878 = vmatpush1.bf16.msra.mxu0 0
    %2879 = vmatprep.subr.bf16.mxu0 0
    %2880 = vmatpush1.bf16.msra.mxu0 0
    %2881 = vmatprep.subr.bf16.mxu0 0
    %2882 = vmatpush1.bf16.msra.mxu0 0
    %2883 = vmatprep.subr.bf16.mxu0 0
    %2884 = vmatpush1.bf16.msra.mxu0 0
    %2885 = vmatprep.subr.bf16.mxu0 0
    %2886 = vmatpush1.bf16.msra.mxu0 0
    %2887 = vmatprep.subr.bf16.mxu0 0
    %2888 = vmatpush1.bf16.msra.mxu0 0
    %2889 = vmatprep.subr.bf16.mxu0 0
    %2890 = vmatpush1.bf16.msra.mxu0 0
    %2891 = vmatprep.mubr.bf16.mxu0 0
    %2892 = vmatmul.mubr.bf16.gmra.mrb[0].mxu0 %v2817
    %v2893 = vpop.f32.mrb[0].mxu0
    %v2894 = vadd.f32 0.0, %v2893
    %v2895 = vpop.f32.mrb[0].mxu0
    %v2896 = vpop.f32.mrb[0].mxu0
    %v2897 = vpop.f32.mrb[0].mxu0
    %2898 = vdwg.mxu0
    %v2899 = vadd.f32 %v2771, %v2853
    %v2900 = vxor.u32 %v2899, 2147483648
    %v2901 = vmul.f32 %v2900, 1.442695
    %v2902 = vpow.pop %v2901
    %v2903 = vadd.f32 %v2902, 1.0
    %v2904 = vrcp.pop %v2903
    %v2905 = vmul.f32 1.0, %v2904
    %v2906 = vadd.f32 %v2773, %v2855
    %v2907 = vxor.u32 %v2906, 2147483648
    %v2908 = vmul.f32 %v2907, 1.442695
    %v2909 = vpow.pop %v2908
    %v2910 = vadd.f32 %v2909, 1.0
    %v2911 = vrcp.pop %v2910
    %v2912 = vmul.f32 1.0, %v2911
    %v2913 = vadd.f32 %v2894, %v477
    %v2914 = vmul.f32 %v2905, %v2913
    %v2915 = vadd.f32 %v2812, %v2914
    %v2916 = vtanh.pop %v2915
    %v2917 = vsub.f32 1.0, %v2912
    %v2918 = vmul.f32 %v2917, %v2916
    %v2919 = vmul.f32 %v2912, %v2609
    %v2920 = vadd.f32 %v2918, %v2919
    %2921 = vadd.xlane.f32.xlu0 %v2920
    %v2922 = vpop.xlane.xlu0 %2921
    %v2923 = vmul.f32 %v2922, 0.015625
    %v2924 = vmul.f32 %v2920, %v2920
    %2925 = vadd.xlane.f32.xlu0 %v2924
    %v2926 = vpop.xlane.xlu0 %2925
    %v2927 = vmul.f32 %v2926, 0.015625
    %v2928 = vmul.f32 %v2923, %v2923
    %v2929 = vsub.f32 %v2927, %v2928
    %v2930 = vmax.f32 %v2929, 0.0
    %v2931 = vsub.f32 %v2920, %v2923
    %v2932 = vadd.f32 %v2930, 1e-05
    %v2933 = vrsqrt.pop %v2932
    %v2934 = vmul.f32 %v2931, %v2933
    %v2935 = vmul.f32 %v2934, %v484
    %v2936 = vadd.f32 %v2935, %v491
    %s2937 = scalar_lea.vmem [#allocation2], 72
    %v2938 = vld [vmem:[%s2937] sm:$0xff]
    %v2939 = vld [vmem:[%s2937 + $0x8] sm:$0xf]
    %v2940 = vunpack.c.l.bf16 %v2938
    %v2941 = vunpack.c.h.bf16 %v2938
    %v2942 = vunpack.c.l.bf16 %v2939
    %2943 = vmatprep.subr.bf16.mxu0 %v614
    %2944 = vmatpush1.bf16.msra.mxu0 %v613
    %2945 = vmatprep.subr.bf16.mxu0 %v617
    %2946 = vmatpush1.bf16.msra.mxu0 %v616
    %2947 = vmatprep.subr.bf16.mxu0 %v620
    %2948 = vmatpush1.bf16.msra.mxu0 %v619
    %2949 = vmatprep.subr.bf16.mxu0 %v623
    %2950 = vmatpush1.bf16.msra.mxu0 %v622
    %2951 = vmatprep.subr.bf16.mxu0 %v626
    %2952 = vmatpush1.bf16.msra.mxu0 %v625
    %2953 = vmatprep.subr.bf16.mxu0 %v629
    %2954 = vmatpush1.bf16.msra.mxu0 %v628
    %2955 = vmatprep.subr.bf16.mxu0 %v632
    %2956 = vmatpush1.bf16.msra.mxu0 %v631
    %2957 = vmatprep.subr.bf16.mxu0 %v635
    %2958 = vmatpush1.bf16.msra.mxu0 %v634
    %2959 = vmatprep.subr.bf16.mxu0 0
    %2960 = vmatpush1.bf16.msra.mxu0 0
    %2961 = vmatprep.subr.bf16.mxu0 0
    %2962 = vmatpush1.bf16.msra.mxu0 0
    %2963 = vmatprep.subr.bf16.mxu0 0
    %2964 = vmatpush1.bf16.msra.mxu0 0
    %2965 = vmatprep.subr.bf16.mxu0 0
    %2966 = vmatpush1.bf16.msra.mxu0 0
    %2967 = vmatprep.subr.bf16.mxu0 0
    %2968 = vmatpush1.bf16.msra.mxu0 0
    %2969 = vmatprep.subr.bf16.mxu0 0
    %2970 = vmatpush1.bf16.msra.mxu0 0
    %2971 = vmatprep.subr.bf16.mxu0 0
    %2972 = vmatpush1.bf16.msra.mxu0 0
    %2973 = vmatprep.subr.bf16.mxu0 0
    %2974 = vmatpush1.bf16.msra.mxu0 0
    %2975 = vmatprep.mubr.bf16.mxu0 0
    %2976 = vmatmul.mubr.bf16.gmra.mrb[0].mxu0 %v2735
    %v2977 = vpop.f32.mrb[0].mxu0
    %v2978 = vadd.f32 0.0, %v2977
    %v2979 = vpop.f32.mrb[0].mxu0
    %v2980 = vadd.f32 0.0, %v2979
    %v2981 = vpop.f32.mrb[0].mxu0
    %v2982 = vpop.f32.mrb[0].mxu0
    %2983 = vdwg.mxu0
    %2984 = vmatprep.subr.bf16.mxu0 0
    %2985 = vmatpush1.bf16.msra.mxu0 %v615
    %2986 = vmatprep.subr.bf16.mxu0 0
    %2987 = vmatpush1.bf16.msra.mxu0 %v618
    %2988 = vmatprep.subr.bf16.mxu0 0
    %2989 = vmatpush1.bf16.msra.mxu0 %v621
    %2990 = vmatprep.subr.bf16.mxu0 0
    %2991 = vmatpush1.bf16.msra.mxu0 %v624
    %2992 = vmatprep.subr.bf16.mxu0 0
    %2993 = vmatpush1.bf16.msra.mxu0 %v627
    %2994 = vmatprep.subr.bf16.mxu0 0
    %2995 = vmatpush1.bf16.msra.mxu0 %v630
    %2996 = vmatprep.subr.bf16.mxu0 0
    %2997 = vmatpush1.bf16.msra.mxu0 %v633
    %2998 = vmatprep.subr.bf16.mxu0 0
    %2999 = vmatpush1.bf16.msra.mxu0 %v636
    %3000 = vmatprep.subr.bf16.mxu0 0
    %3001 = vmatpush1.bf16.msra.mxu0 0
    %3002 = vmatprep.subr.bf16.mxu0 0
    %3003 = vmatpush1.bf16.msra.mxu0 0
    %3004 = vmatprep.subr.bf16.mxu0 0
    %3005 = vmatpush1.bf16.msra.mxu0 0
    %3006 = vmatprep.subr.bf16.mxu0 0
    %3007 = vmatpush1.bf16.msra.mxu0 0
    %3008 = vmatprep.subr.bf16.mxu0 0
    %3009 = vmatpush1.bf16.msra.mxu0 0
    %3010 = vmatprep.subr.bf16.mxu0 0
    %3011 = vmatpush1.bf16.msra.mxu0 0
    %3012 = vmatprep.subr.bf16.mxu0 0
    %3013 = vmatpush1.bf16.msra.mxu0 0
    %3014 = vmatprep.subr.bf16.mxu0 0
    %3015 = vmatpush1.bf16.msra.mxu0 0
    %3016 = vmatprep.mubr.bf16.mxu0 0
    %3017 = vmatmul.mubr.bf16.gmra.mrb[0].mxu0 %v2735
    %v3018 = vpop.f32.mrb[0].mxu0
    %v3019 = vadd.f32 0.0, %v3018
    %v3020 = vpop.f32.mrb[0].mxu0
    %v3021 = vpop.f32.mrb[0].mxu0
    %v3022 = vpop.f32.mrb[0].mxu0
    %3023 = vdwg.mxu0
    %v3024 = vadd.f32 %v2940, %v2978
    %v3025 = vxor.u32 %v3024, 2147483648
    %v3026 = vmul.f32 %v3025, 1.442695
    %v3027 = vpow.pop %v3026
    %v3028 = vadd.f32 %v3027, 1.0
    %v3029 = vrcp.pop %v3028
    %v3030 = vmul.f32 1.0, %v3029
    %v3031 = vadd.f32 %v2941, %v2980
    %v3032 = vxor.u32 %v3031, 2147483648
    %v3033 = vmul.f32 %v3032, 1.442695
    %v3034 = vpow.pop %v3033
    %v3035 = vadd.f32 %v3034, 1.0
    %v3036 = vrcp.pop %v3035
    %v3037 = vmul.f32 1.0, %v3036
    %v3038 = vadd.f32 %v3019, %v439
    %v3039 = vmul.f32 %v3030, %v3038
    %v3040 = vadd.f32 %v2942, %v3039
    %v3041 = vtanh.pop %v3040
    %v3042 = vsub.f32 1.0, %v3037
    %v3043 = vmul.f32 %v3042, %v3041
    %v3044 = vmul.f32 %v3037, %v2734
    %v3045 = vadd.f32 %v3043, %v3044
    %3046 = vadd.xlane.f32.xlu0 %v3045
    %v3047 = vpop.xlane.xlu0 %3046
    %v3048 = vmul.f32 %v3047, 0.0078125
    %v3049 = vmul.f32 %v3045, %v3045
    %3050 = vadd.xlane.f32.xlu0 %v3049
    %v3051 = vpop.xlane.xlu0 %3050
    %v3052 = vmul.f32 %v3051, 0.0078125
    %v3053 = vmul.f32 %v3048, %v3048
    %v3054 = vsub.f32 %v3052, %v3053
    %v3055 = vmax.f32 %v3054, 0.0
    %v3056 = vsub.f32 %v3045, %v3048
    %v3057 = vadd.f32 %v3055, 1e-05
    %v3058 = vrsqrt.pop %v3057
    %v3059 = vmul.f32 %v3056, %v3058
    %v3060 = vmul.f32 %v3059, %v446
    %v3061 = vadd.f32 %v3060, %v453
    %v3062 = vpack.c.bf16 %v3061, %v3061
    %3063 = vmatprep.subr.bf16.mxu0 %v894
    %3064 = vmatpush1.bf16.msra.mxu0 %v893
    %3065 = vmatprep.subr.bf16.mxu0 %v897
    %3066 = vmatpush1.bf16.msra.mxu0 %v896
    %3067 = vmatprep.subr.bf16.mxu0 %v900
    %3068 = vmatpush1.bf16.msra.mxu0 %v899
    %3069 = vmatprep.subr.bf16.mxu0 %v903
    %3070 = vmatpush1.bf16.msra.mxu0 %v902
    %3071 = vmatprep.subr.bf16.mxu0 %v906
    %3072 = vmatpush1.bf16.msra.mxu0 %v905
    %3073 = vmatprep.subr.bf16.mxu0 %v909
    %3074 = vmatpush1.bf16.msra.mxu0 %v908
    %3075 = vmatprep.subr.bf16.mxu0 %v912
    %3076 = vmatpush1.bf16.msra.mxu0 %v911
    %3077 = vmatprep.subr.bf16.mxu0 %v915
    %3078 = vmatpush1.bf16.msra.mxu0 %v914
    %3079 = vmatprep.subr.bf16.mxu0 0
    %3080 = vmatpush1.bf16.msra.mxu0 0
    %3081 = vmatprep.subr.bf16.mxu0 0
    %3082 = vmatpush1.bf16.msra.mxu0 0
    %3083 = vmatprep.subr.bf16.mxu0 0
    %3084 = vmatpush1.bf16.msra.mxu0 0
    %3085 = vmatprep.subr.bf16.mxu0 0
    %3086 = vmatpush1.bf16.msra.mxu0 0
    %3087 = vmatprep.subr.bf16.mxu0 0
    %3088 = vmatpush1.bf16.msra.mxu0 0
    %3089 = vmatprep.subr.bf16.mxu0 0
    %3090 = vmatpush1.bf16.msra.mxu0 0
    %3091 = vmatprep.subr.bf16.mxu0 0
    %3092 = vmatpush1.bf16.msra.mxu0 0
    %3093 = vmatprep.subr.bf16.mxu0 0
    %3094 = vmatpush1.bf16.msra.mxu0 0
    %3095 = vmatprep.mubr.bf16.mxu0 0
    %3096 = vmatmul.mubr.bf16.gmra.mrb[0].mxu0 %v3062
    %v3097 = vpop.f32.mrb[0].mxu0
    %v3098 = vadd.f32 %v460, %v3097
    %v3099 = vpop.f32.mrb[0].mxu0
    %v3100 = vadd.f32 %v464, %v3099
    %v3101 = vpop.f32.mrb[0].mxu0
    %v3102 = vpop.f32.mrb[0].mxu0
    %3103 = vdwg.mxu0
    %3104 = vmatprep.subr.bf16.mxu0 0
    %3105 = vmatpush1.bf16.msra.mxu0 %v895
    %3106 = vmatprep.subr.bf16.mxu0 0
    %3107 = vmatpush1.bf16.msra.mxu0 %v898
    %3108 = vmatprep.subr.bf16.mxu0 0
    %3109 = vmatpush1.bf16.msra.mxu0 %v901
    %3110 = vmatprep.subr.bf16.mxu0 0
    %3111 = vmatpush1.bf16.msra.mxu0 %v904
    %3112 = vmatprep.subr.bf16.mxu0 0
    %3113 = vmatpush1.bf16.msra.mxu0 %v907
    %3114 = vmatprep.subr.bf16.mxu0 0
    %3115 = vmatpush1.bf16.msra.mxu0 %v910
    %3116 = vmatprep.subr.bf16.mxu0 0
    %3117 = vmatpush1.bf16.msra.mxu0 %v913
    %3118 = vmatprep.subr.bf16.mxu0 0
    %3119 = vmatpush1.bf16.msra.mxu0 %v916
    %3120 = vmatprep.subr.bf16.mxu0 0
    %3121 = vmatpush1.bf16.msra.mxu0 0
    %3122 = vmatprep.subr.bf16.mxu0 0
    %3123 = vmatpush1.bf16.msra.mxu0 0
    %3124 = vmatprep.subr.bf16.mxu0 0
    %3125 = vmatpush1.bf16.msra.mxu0 0
    %3126 = vmatprep.subr.bf16.mxu0 0
    %3127 = vmatpush1.bf16.msra.mxu0 0
    %3128 = vmatprep.subr.bf16.mxu0 0
    %3129 = vmatpush1.bf16.msra.mxu0 0
    %3130 = vmatprep.subr.bf16.mxu0 0
    %3131 = vmatpush1.bf16.msra.mxu0 0
    %3132 = vmatprep.subr.bf16.mxu0 0
    %3133 = vmatpush1.bf16.msra.mxu0 0
    %3134 = vmatprep.subr.bf16.mxu0 0
    %3135 = vmatpush1.bf16.msra.mxu0 0
    %3136 = vmatprep.mubr.bf16.mxu0 0
    %3137 = vmatmul.mubr.bf16.gmra.mrb[0].mxu0 %v3062
    %v3138 = vpop.f32.mrb[0].mxu0
    %v3139 = vadd.f32 %v468, %v3138
    %v3140 = vpop.f32.mrb[0].mxu0
    %v3141 = vpop.f32.mrb[0].mxu0
    %v3142 = vpop.f32.mrb[0].mxu0
    %3143 = vdwg.mxu0
    %v3144 = vpack.c.bf16 %v2936, %v2936
    %3145 = vmatprep.subr.bf16.mxu0 %v1136
    %3146 = vmatpush1.bf16.msra.mxu0 %v1135
    %3147 = vmatprep.subr.bf16.mxu0 %v1139
    %3148 = vmatpush1.bf16.msra.mxu0 %v1138
    %3149 = vmatprep.subr.bf16.mxu0 %v1142
    %3150 = vmatpush1.bf16.msra.mxu0 %v1141
    %3151 = vmatprep.subr.bf16.mxu0 %v1145
    %3152 = vmatpush1.bf16.msra.mxu0 %v1144
    %3153 = vmatprep.subr.bf16.mxu0 %v1148
    %3154 = vmatpush1.bf16.msra.mxu0 %v1147
    %3155 = vmatprep.subr.bf16.mxu0 %v1151
    %3156 = vmatpush1.bf16.msra.mxu0 %v1150
    %3157 = vmatprep.subr.bf16.mxu0 %v1154
    %3158 = vmatpush1.bf16.msra.mxu0 %v1153
    %3159 = vmatprep.subr.bf16.mxu0 %v1157
    %3160 = vmatpush1.bf16.msra.mxu0 %v1156
    %3161 = vmatprep.subr.bf16.mxu0 0
    %3162 = vmatpush1.bf16.msra.mxu0 0
    %3163 = vmatprep.subr.bf16.mxu0 0
    %3164 = vmatpush1.bf16.msra.mxu0 0
    %3165 = vmatprep.subr.bf16.mxu0 0
    %3166 = vmatpush1.bf16.msra.mxu0 0
    %3167 = vmatprep.subr.bf16.mxu0 0
    %3168 = vmatpush1.bf16.msra.mxu0 0
    %3169 = vmatprep.subr.bf16.mxu0 0
    %3170 = vmatpush1.bf16.msra.mxu0 0
    %3171 = vmatprep.subr.bf16.mxu0 0
    %3172 = vmatpush1.bf16.msra.mxu0 0
    %3173 = vmatprep.subr.bf16.mxu0 0
    %3174 = vmatpush1.bf16.msra.mxu0 0
    %3175 = vmatprep.subr.bf16.mxu0 0
    %3176 = vmatpush1.bf16.msra.mxu0 0
    %3177 = vmatprep.mubr.bf16.mxu0 0
    %3178 = vmatmul.mubr.bf16.gmra.mrb[0].mxu0 %v3144
    %v3179 = vpop.f32.mrb[0].mxu0
    %v3180 = vadd.f32 0.0, %v3179
    %v3181 = vpop.f32.mrb[0].mxu0
    %v3182 = vadd.f32 0.0, %v3181
    %v3183 = vpop.f32.mrb[0].mxu0
    %v3184 = vpop.f32.mrb[0].mxu0
    %3185 = vdwg.mxu0
    %3186 = vmatprep.subr.bf16.mxu0 0
    %3187 = vmatpush1.bf16.msra.mxu0 %v1137
    %3188 = vmatprep.subr.bf16.mxu0 0
    %3189 = vmatpush1.bf16.msra.mxu0 %v1140
    %3190 = vmatprep.subr.bf16.mxu0 0
    %3191 = vmatpush1.bf16.msra.mxu0 %v1143
    %3192 = vmatprep.subr.bf16.mxu0 0
    %3193 = vmatpush1.bf16.msra.mxu0 %v1146
    %3194 = vmatprep.subr.bf16.mxu0 0
    %3195 = vmatpush1.bf16.msra.mxu0 %v1149
    %3196 = vmatprep.subr.bf16.mxu0 0
    %3197 = vmatpush1.bf16.msra.mxu0 %v1152
    %3198 = vmatprep.subr.bf16.mxu0 0
    %3199 = vmatpush1.bf16.msra.mxu0 %v1155
    %3200 = vmatprep.subr.bf16.mxu0 0
    %3201 = vmatpush1.bf16.msra.mxu0 %v1158
    %3202 = vmatprep.subr.bf16.mxu0 0
    %3203 = vmatpush1.bf16.msra.mxu0 0
    %3204 = vmatprep.subr.bf16.mxu0 0
    %3205 = vmatpush1.bf16.msra.mxu0 0
    %3206 = vmatprep.subr.bf16.mxu0 0
    %3207 = vmatpush1.bf16.msra.mxu0 0
    %3208 = vmatprep.subr.bf16.mxu0 0
    %3209 = vmatpush1.bf16.msra.mxu0 0
    %3210 = vmatprep.subr.bf16.mxu0 0
    %3211 = vmatpush1.bf16.msra.mxu0 0
    %3212 = vmatprep.subr.bf16.mxu0 0
    %3213 = vmatpush1.bf16.msra.mxu0 0
    %3214 = vmatprep.subr.bf16.mxu0 0
    %3215 = vmatpush1.bf16.msra.mxu0 0
    %3216 = vmatprep.subr.bf16.mxu0 0
    %3217 = vmatpush1.bf16.msra.mxu0 0
    %3218 = vmatprep.mubr.bf16.mxu0 0
    %3219 = vmatmul.mubr.bf16.gmra.mrb[0].mxu0 %v3144
    %v3220 = vpop.f32.mrb[0].mxu0
    %v3221 = vadd.f32 0.0, %v3220
    %v3222 = vpop.f32.mrb[0].mxu0
    %v3223 = vpop.f32.mrb[0].mxu0
    %v3224 = vpop.f32.mrb[0].mxu0
    %3225 = vdwg.mxu0
    %v3226 = vadd.f32 %v3098, %v3180
    %v3227 = vxor.u32 %v3226, 2147483648
    %v3228 = vmul.f32 %v3227, 1.442695
    %v3229 = vpow.pop %v3228
    %v3230 = vadd.f32 %v3229, 1.0
    %v3231 = vrcp.pop %v3230
    %v3232 = vmul.f32 1.0, %v3231
    %v3233 = vadd.f32 %v3100, %v3182
    %v3234 = vxor.u32 %v3233, 2147483648
    %v3235 = vmul.f32 %v3234, 1.442695
    %v3236 = vpow.pop %v3235
    %v3237 = vadd.f32 %v3236, 1.0
    %v3238 = vrcp.pop %v3237
    %v3239 = vmul.f32 1.0, %v3238
    %v3240 = vadd.f32 %v3221, %v477
    %v3241 = vmul.f32 %v3232, %v3240
    %v3242 = vadd.f32 %v3139, %v3241
    %v3243 = vtanh.pop %v3242
    %v3244 = vsub.f32 1.0, %v3239
    %v3245 = vmul.f32 %v3244, %v3243
    %v3246 = vmul.f32 %v3239, %v2936
    %v3247 = vadd.f32 %v3245, %v3246
    %3248 = vadd.xlane.f32.xlu0 %v3247
    %v3249 = vpop.xlane.xlu0 %3248
    %v3250 = vmul.f32 %v3249, 0.015625
    %v3251 = vmul.f32 %v3247, %v3247
    %3252 = vadd.xlane.f32.xlu0 %v3251
    %v3253 = vpop.xlane.xlu0 %3252
    %v3254 = vmul.f32 %v3253, 0.015625
    %v3255 = vmul.f32 %v3250, %v3250
    %v3256 = vsub.f32 %v3254, %v3255
    %v3257 = vmax.f32 %v3256, 0.0
    %v3258 = vsub.f32 %v3247, %v3250
    %v3259 = vadd.f32 %v3257, 1e-05
    %v3260 = vrsqrt.pop %v3259
    %v3261 = vmul.f32 %v3258, %v3260
    %v3262 = vmul.f32 %v3261, %v484
    %v3263 = vadd.f32 %v3262, %v491
    %s3264 = scalar_lea.vmem [#allocation2], 84
    %v3265 = vld [vmem:[%s3264] sm:$0xff]
    %v3266 = vld [vmem:[%s3264 + $0x8] sm:$0xf]
    %v3267 = vunpack.c.l.bf16 %v3265
    %v3268 = vunpack.c.h.bf16 %v3265
    %v3269 = vunpack.c.l.bf16 %v3266
    %3270 = vmatprep.subr.bf16.mxu0 %v614
    %3271 = vmatpush1.bf16.msra.mxu0 %v613
    %3272 = vmatprep.subr.bf16.mxu0 %v617
    %3273 = vmatpush1.bf16.msra.mxu0 %v616
    %3274 = vmatprep.subr.bf16.mxu0 %v620
    %3275 = vmatpush1.bf16.msra.mxu0 %v619
    %3276 = vmatprep.subr.bf16.mxu0 %v623
    %3277 = vmatpush1.bf16.msra.mxu0 %v622
    %3278 = vmatprep.subr.bf16.mxu0 %v626
    %3279 = vmatpush1.bf16.msra.mxu0 %v625
    %3280 = vmatprep.subr.bf16.mxu0 %v629
    %3281 = vmatpush1.bf16.msra.mxu0 %v628
    %3282 = vmatprep.subr.bf16.mxu0 %v632
    %3283 = vmatpush1.bf16.msra.mxu0 %v631
    %3284 = vmatprep.subr.bf16.mxu0 %v635
    %3285 = vmatpush1.bf16.msra.mxu0 %v634
    %3286 = vmatprep.subr.bf16.mxu0 0
    %3287 = vmatpush1.bf16.msra.mxu0 0
    %3288 = vmatprep.subr.bf16.mxu0 0
    %3289 = vmatpush1.bf16.msra.mxu0 0
    %3290 = vmatprep.subr.bf16.mxu0 0
    %3291 = vmatpush1.bf16.msra.mxu0 0
    %3292 = vmatprep.subr.bf16.mxu0 0
    %3293 = vmatpush1.bf16.msra.mxu0 0
    %3294 = vmatprep.subr.bf16.mxu0 0
    %3295 = vmatpush1.bf16.msra.mxu0 0
    %3296 = vmatprep.subr.bf16.mxu0 0
    %3297 = vmatpush1.bf16.msra.mxu0 0
    %3298 = vmatprep.subr.bf16.mxu0 0
    %3299 = vmatpush1.bf16.msra.mxu0 0
    %3300 = vmatprep.subr.bf16.mxu0 0
    %3301 = vmatpush1.bf16.msra.mxu0 0
    %3302 = vmatprep.mubr.bf16.mxu0 0
    %3303 = vmatmul.mubr.bf16.gmra.mrb[0].mxu0 %v3062
    %v3304 = vpop.f32.mrb[0].mxu0
    %v3305 = vadd.f32 0.0, %v3304
    %v3306 = vpop.f32.mrb[0].mxu0
    %v3307 = vadd.f32 0.0, %v3306
    %v3308 = vpop.f32.mrb[0].mxu0
    %v3309 = vpop.f32.mrb[0].mxu0
    %3310 = vdwg.mxu0
    %3311 = vmatprep.subr.bf16.mxu0 0
    %3312 = vmatpush1.bf16.msra.mxu0 %v615
    %3313 = vmatprep.subr.bf16.mxu0 0
    %3314 = vmatpush1.bf16.msra.mxu0 %v618
    %3315 = vmatprep.subr.bf16.mxu0 0
    %3316 = vmatpush1.bf16.msra.mxu0 %v621
    %3317 = vmatprep.subr.bf16.mxu0 0
    %3318 = vmatpush1.bf16.msra.mxu0 %v624
    %3319 = vmatprep.subr.bf16.mxu0 0
    %3320 = vmatpush1.bf16.msra.mxu0 %v627
    %3321 = vmatprep.subr.bf16.mxu0 0
    %3322 = vmatpush1.bf16.msra.mxu0 %v630
    %3323 = vmatprep.subr.bf16.mxu0 0
    %3324 = vmatpush1.bf16.msra.mxu0 %v633
    %3325 = vmatprep.subr.bf16.mxu0 0
    %3326 = vmatpush1.bf16.msra.mxu0 %v636
    %3327 = vmatprep.subr.bf16.mxu0 0
    %3328 = vmatpush1.bf16.msra.mxu0 0
    %3329 = vmatprep.subr.bf16.mxu0 0
    %3330 = vmatpush1.bf16.msra.mxu0 0
    %3331 = vmatprep.subr.bf16.mxu0 0
    %3332 = vmatpush1.bf16.msra.mxu0 0
    %3333 = vmatprep.subr.bf16.mxu0 0
    %3334 = vmatpush1.bf16.msra.mxu0 0
    %3335 = vmatprep.subr.bf16.mxu0 0
    %3336 = vmatpush1.bf16.msra.mxu0 0
    %3337 = vmatprep.subr.bf16.mxu0 0
    %3338 = vmatpush1.bf16.msra.mxu0 0
    %3339 = vmatprep.subr.bf16.mxu0 0
    %3340 = vmatpush1.bf16.msra.mxu0 0
    %3341 = vmatprep.subr.bf16.mxu0 0
    %3342 = vmatpush1.bf16.msra.mxu0 0
    %3343 = vmatprep.mubr.bf16.mxu0 0
    %3344 = vmatmul.mubr.bf16.gmra.mrb[0].mxu0 %v3062
    %v3345 = vpop.f32.mrb[0].mxu0
    %v3346 = vadd.f32 0.0, %v3345
    %v3347 = vpop.f32.mrb[0].mxu0
    %v3348 = vpop.f32.mrb[0].mxu0
    %v3349 = vpop.f32.mrb[0].mxu0
    %3350 = vdwg.mxu0
    %v3351 = vadd.f32 %v3267, %v3305
    %v3352 = vxor.u32 %v3351, 2147483648
    %v3353 = vmul.f32 %v3352, 1.442695
    %v3354 = vpow.pop %v3353
    %v3355 = vadd.f32 %v3354, 1.0
    %v3356 = vrcp.pop %v3355
    %v3357 = vmul.f32 1.0, %v3356
    %v3358 = vadd.f32 %v3268, %v3307
    %v3359 = vxor.u32 %v3358, 2147483648
    %v3360 = vmul.f32 %v3359, 1.442695
    %v3361 = vpow.pop %v3360
    %v3362 = vadd.f32 %v3361, 1.0
    %v3363 = vrcp.pop %v3362
    %v3364 = vmul.f32 1.0, %v3363
    %v3365 = vadd.f32 %v3346, %v439
    %v3366 = vmul.f32 %v3357, %v3365
    %v3367 = vadd.f32 %v3269, %v3366
    %v3368 = vtanh.pop %v3367
    %v3369 = vsub.f32 1.0, %v3364
    %v3370 = vmul.f32 %v3369, %v3368
    %v3371 = vmul.f32 %v3364, %v3061
    %v3372 = vadd.f32 %v3370, %v3371
    %3373 = vadd.xlane.f32.xlu0 %v3372
    %v3374 = vpop.xlane.xlu0 %3373
    %v3375 = vmul.f32 %v3374, 0.0078125
    %v3376 = vmul.f32 %v3372, %v3372
    %3377 = vadd.xlane.f32.xlu0 %v3376
    %v3378 = vpop.xlane.xlu0 %3377
    %v3379 = vmul.f32 %v3378, 0.0078125
    %v3380 = vmul.f32 %v3375, %v3375
    %v3381 = vsub.f32 %v3379, %v3380
    %v3382 = vmax.f32 %v3381, 0.0
    %v3383 = vsub.f32 %v3372, %v3375
    %v3384 = vadd.f32 %v3382, 1e-05
    %v3385 = vrsqrt.pop %v3384
    %v3386 = vmul.f32 %v3383, %v3385
    %v3387 = vmul.f32 %v3386, %v446
    %v3388 = vadd.f32 %v3387, %v453
    %v3389 = vpack.c.bf16 %v3388, %v3388
    %3390 = vmatprep.subr.bf16.mxu0 %v894
    %3391 = vmatpush1.bf16.msra.mxu0 %v893
    %3392 = vmatprep.subr.bf16.mxu0 %v897
    %3393 = vmatpush1.bf16.msra.mxu0 %v896
    %3394 = vmatprep.subr.bf16.mxu0 %v900
    %3395 = vmatpush1.bf16.msra.mxu0 %v899
    %3396 = vmatprep.subr.bf16.mxu0 %v903
    %3397 = vmatpush1.bf16.msra.mxu0 %v902
    %3398 = vmatprep.subr.bf16.mxu0 %v906
    %3399 = vmatpush1.bf16.msra.mxu0 %v905
    %3400 = vmatprep.subr.bf16.mxu0 %v909
    %3401 = vmatpush1.bf16.msra.mxu0 %v908
    %3402 = vmatprep.subr.bf16.mxu0 %v912
    %3403 = vmatpush1.bf16.msra.mxu0 %v911
    %3404 = vmatprep.subr.bf16.mxu0 %v915
    %3405 = vmatpush1.bf16.msra.mxu0 %v914
    %3406 = vmatprep.subr.bf16.mxu0 0
    %3407 = vmatpush1.bf16.msra.mxu0 0
    %3408 = vmatprep.subr.bf16.mxu0 0
    %3409 = vmatpush1.bf16.msra.mxu0 0
    %3410 = vmatprep.subr.bf16.mxu0 0
    %3411 = vmatpush1.bf16.msra.mxu0 0
    %3412 = vmatprep.subr.bf16.mxu0 0
    %3413 = vmatpush1.bf16.msra.mxu0 0
    %3414 = vmatprep.subr.bf16.mxu0 0
    %3415 = vmatpush1.bf16.msra.mxu0 0
    %3416 = vmatprep.subr.bf16.mxu0 0
    %3417 = vmatpush1.bf16.msra.mxu0 0
    %3418 = vmatprep.subr.bf16.mxu0 0
    %3419 = vmatpush1.bf16.msra.mxu0 0
    %3420 = vmatprep.subr.bf16.mxu0 0
    %3421 = vmatpush1.bf16.msra.mxu0 0
    %3422 = vmatprep.mubr.bf16.mxu0 0
    %3423 = vmatmul.mubr.bf16.gmra.mrb[0].mxu0 %v3389
    %v3424 = vpop.f32.mrb[0].mxu0
    %v3425 = vadd.f32 %v460, %v3424
    %v3426 = vpop.f32.mrb[0].mxu0
    %v3427 = vadd.f32 %v464, %v3426
    %v3428 = vpop.f32.mrb[0].mxu0
    %v3429 = vpop.f32.mrb[0].mxu0
    %3430 = vdwg.mxu0
    %3431 = vmatprep.subr.bf16.mxu0 0
    %3432 = vmatpush1.bf16.msra.mxu0 %v895
    %3433 = vmatprep.subr.bf16.mxu0 0
    %3434 = vmatpush1.bf16.msra.mxu0 %v898
    %3435 = vmatprep.subr.bf16.mxu0 0
    %3436 = vmatpush1.bf16.msra.mxu0 %v901
    %3437 = vmatprep.subr.bf16.mxu0 0
    %3438 = vmatpush1.bf16.msra.mxu0 %v904
    %3439 = vmatprep.subr.bf16.mxu0 0
    %3440 = vmatpush1.bf16.msra.mxu0 %v907
    %3441 = vmatprep.subr.bf16.mxu0 0
    %3442 = vmatpush1.bf16.msra.mxu0 %v910
    %3443 = vmatprep.subr.bf16.mxu0 0
    %3444 = vmatpush1.bf16.msra.mxu0 %v913
    %3445 = vmatprep.subr.bf16.mxu0 0
    %3446 = vmatpush1.bf16.msra.mxu0 %v916
    %3447 = vmatprep.subr.bf16.mxu0 0
    %3448 = vmatpush1.bf16.msra.mxu0 0
    %3449 = vmatprep.subr.bf16.mxu0 0
    %3450 = vmatpush1.bf16.msra.mxu0 0
    %3451 = vmatprep.subr.bf16.mxu0 0
    %3452 = vmatpush1.bf16.msra.mxu0 0
    %3453 = vmatprep.subr.bf16.mxu0 0
    %3454 = vmatpush1.bf16.msra.mxu0 0
    %3455 = vmatprep.subr.bf16.mxu0 0
    %3456 = vmatpush1.bf16.msra.mxu0 0
    %3457 = vmatprep.subr.bf16.mxu0 0
    %3458 = vmatpush1.bf16.msra.mxu0 0
    %3459 = vmatprep.subr.bf16.mxu0 0
    %3460 = vmatpush1.bf16.msra.mxu0 0
    %3461 = vmatprep.subr.bf16.mxu0 0
    %3462 = vmatpush1.bf16.msra.mxu0 0
    %3463 = vmatprep.mubr.bf16.mxu0 0
    %3464 = vmatmul.mubr.bf16.gmra.mrb[0].mxu0 %v3389
    %v3465 = vpop.f32.mrb[0].mxu0
    %v3466 = vadd.f32 %v468, %v3465
    %v3467 = vpop.f32.mrb[0].mxu0
    %v3468 = vpop.f32.mrb[0].mxu0
    %v3469 = vpop.f32.mrb[0].mxu0
    %3470 = vdwg.mxu0
    %v3471 = vpack.c.bf16 %v3263, %v3263
    %3472 = vmatprep.subr.bf16.mxu0 %v1136
    %3473 = vmatpush1.bf16.msra.mxu0 %v1135
    %3474 = vmatprep.subr.bf16.mxu0 %v1139
    %3475 = vmatpush1.bf16.msra.mxu0 %v1138
    %3476 = vmatprep.subr.bf16.mxu0 %v1142
    %3477 = vmatpush1.bf16.msra.mxu0 %v1141
    %3478 = vmatprep.subr.bf16.mxu0 %v1145
    %3479 = vmatpush1.bf16.msra.mxu0 %v1144
    %3480 = vmatprep.subr.bf16.mxu0 %v1148
    %3481 = vmatpush1.bf16.msra.mxu0 %v1147
    %3482 = vmatprep.subr.bf16.mxu0 %v1151
    %3483 = vmatpush1.bf16.msra.mxu0 %v1150
    %3484 = vmatprep.subr.bf16.mxu0 %v1154
    %3485 = vmatpush1.bf16.msra.mxu0 %v1153
    %3486 = vmatprep.subr.bf16.mxu0 %v1157
    %3487 = vmatpush1.bf16.msra.mxu0 %v1156
    %3488 = vmatprep.subr.bf16.mxu0 0
    %3489 = vmatpush1.bf16.msra.mxu0 0
    %3490 = vmatprep.subr.bf16.mxu0 0
    %3491 = vmatpush1.bf16.msra.mxu0 0
    %3492 = vmatprep.subr.bf16.mxu0 0
    %3493 = vmatpush1.bf16.msra.mxu0 0
    %3494 = vmatprep.subr.bf16.mxu0 0
    %3495 = vmatpush1.bf16.msra.mxu0 0
    %3496 = vmatprep.subr.bf16.mxu0 0
    %3497 = vmatpush1.bf16.msra.mxu0 0
    %3498 = vmatprep.subr.bf16.mxu0 0
    %3499 = vmatpush1.bf16.msra.mxu0 0
    %3500 = vmatprep.subr.bf16.mxu0 0
    %3501 = vmatpush1.bf16.msra.mxu0 0
    %3502 = vmatprep.subr.bf16.mxu0 0
    %3503 = vmatpush1.bf16.msra.mxu0 0
    %3504 = vmatprep.mubr.bf16.mxu0 0
    %3505 = vmatmul.mubr.bf16.gmra.mrb[0].mxu0 %v3471
    %v3506 = vpop.f32.mrb[0].mxu0
    %v3507 = vadd.f32 0.0, %v3506
    %v3508 = vpop.f32.mrb[0].mxu0
    %v3509 = vadd.f32 0.0, %v3508
    %v3510 = vpop.f32.mrb[0].mxu0
    %v3511 = vpop.f32.mrb[0].mxu0
    %3512 = vdwg.mxu0
    %3513 = vmatprep.subr.bf16.mxu0 0
    %3514 = vmatpush1.bf16.msra.mxu0 %v1137
    %3515 = vmatprep.subr.bf16.mxu0 0
    %3516 = vmatpush1.bf16.msra.mxu0 %v1140
    %3517 = vmatprep.subr.bf16.mxu0 0
    %3518 = vmatpush1.bf16.msra.mxu0 %v1143
    %3519 = vmatprep.subr.bf16.mxu0 0
    %3520 = vmatpush1.bf16.msra.mxu0 %v1146
    %3521 = vmatprep.subr.bf16.mxu0 0
    %3522 = vmatpush1.bf16.msra.mxu0 %v1149
    %3523 = vmatprep.subr.bf16.mxu0 0
    %3524 = vmatpush1.bf16.msra.mxu0 %v1152
    %3525 = vmatprep.subr.bf16.mxu0 0
    %3526 = vmatpush1.bf16.msra.mxu0 %v1155
    %3527 = vmatprep.subr.bf16.mxu0 0
    %3528 = vmatpush1.bf16.msra.mxu0 %v1158
    %3529 = vmatprep.subr.bf16.mxu0 0
    %3530 = vmatpush1.bf16.msra.mxu0 0
    %3531 = vmatprep.subr.bf16.mxu0 0
    %3532 = vmatpush1.bf16.msra.mxu0 0
    %3533 = vmatprep.subr.bf16.mxu0 0
    %3534 = vmatpush1.bf16.msra.mxu0 0
    %3535 = vmatprep.subr.bf16.mxu0 0
    %3536 = vmatpush1.bf16.msra.mxu0 0
    %3537 = vmatprep.subr.bf16.mxu0 0
    %3538 = vmatpush1.bf16.msra.mxu0 0
    %3539 = vmatprep.subr.bf16.mxu0 0
    %3540 = vmatpush1.bf16.msra.mxu0 0
    %3541 = vmatprep.subr.bf16.mxu0 0
    %3542 = vmatpush1.bf16.msra.mxu0 0
    %3543 = vmatprep.subr.bf16.mxu0 0
    %3544 = vmatpush1.bf16.msra.mxu0 0
    %3545 = vmatprep.mubr.bf16.mxu0 0
    %3546 = vmatmul.mubr.bf16.gmra.mrb[0].mxu0 %v3471
    %v3547 = vpop.f32.mrb[0].mxu0
    %v3548 = vadd.f32 0.0, %v3547
    %v3549 = vpop.f32.mrb[0].mxu0
    %v3550 = vpop.f32.mrb[0].mxu0
    %v3551 = vpop.f32.mrb[0].mxu0
    %3552 = vdwg.mxu0
    %v3553 = vadd.f32 %v3425, %v3507
    %v3554 = vxor.u32 %v3553, 2147483648
    %v3555 = vmul.f32 %v3554, 1.442695
    %v3556 = vpow.pop %v3555
    %v3557 = vadd.f32 %v3556, 1.0
    %v3558 = vrcp.pop %v3557
    %v3559 = vmul.f32 1.0, %v3558
    %v3560 = vadd.f32 %v3427, %v3509
    %v3561 = vxor.u32 %v3560, 2147483648
    %v3562 = vmul.f32 %v3561, 1.442695
    %v3563 = vpow.pop %v3562
    %v3564 = vadd.f32 %v3563, 1.0
    %v3565 = vrcp.pop %v3564
    %v3566 = vmul.f32 1.0, %v3565
    %v3567 = vadd.f32 %v3548, %v477
    %v3568 = vmul.f32 %v3559, %v3567
    %v3569 = vadd.f32 %v3466, %v3568
    %v3570 = vtanh.pop %v3569
    %v3571 = vsub.f32 1.0, %v3566
    %v3572 = vmul.f32 %v3571, %v3570
    %v3573 = vmul.f32 %v3566, %v3263
    %v3574 = vadd.f32 %v3572, %v3573
    %3575 = vadd.xlane.f32.xlu0 %v3574
    %v3576 = vpop.xlane.xlu0 %3575
    %v3577 = vmul.f32 %v3576, 0.015625
    %v3578 = vmul.f32 %v3574, %v3574
    %3579 = vadd.xlane.f32.xlu0 %v3578
    %v3580 = vpop.xlane.xlu0 %3579
    %v3581 = vmul.f32 %v3580, 0.015625
    %v3582 = vmul.f32 %v3577, %v3577
    %v3583 = vsub.f32 %v3581, %v3582
    %v3584 = vmax.f32 %v3583, 0.0
    %v3585 = vsub.f32 %v3574, %v3577
    %v3586 = vadd.f32 %v3584, 1e-05
    %v3587 = vrsqrt.pop %v3586
    %v3588 = vmul.f32 %v3585, %v3587
    %v3589 = vmul.f32 %v3588, %v484
    %v3590 = vadd.f32 %v3589, %v491
    %3591 = vst [vmem:[#allocation3] sm:$0xff] %v3388
    %3592 = vst [vmem:[#allocation4] sm:$0xff] %v3590
    // Predicated region
    $region78: #{tpu_custom_call.1} parent=1 // pred_check
      %p3593 = pneg %p92
    $region79: #{tpu_custom_call.1} parent=1 // pred_check_branch
      %3595 = sbr.rel (%p3593) target = $region81
    $region80: #{tpu_custom_call.1} parent=1 // pred_region
      %v3596 = vpack.c.bf16 %v3590, %v3590
      %v3597 = vld [vmem:[%s13] sm:$0xf]
      %v3598 = vld [vmem:[%s13 + $0x4] sm:$0xf]
      %v3599 = vld [vmem:[%s13 + $0x8] sm:$0xf]
      %v3600 = vld [vmem:[%s13 + $0xc] sm:$0xf]
      %v3601 = vld [vmem:[%s13 + $0x10] sm:$0xf]
      %v3602 = vld [vmem:[%s13 + $0x14] sm:$0xf]
      %v3603 = vld [vmem:[%s13 + $0x18] sm:$0xf]
      %v3604 = vld [vmem:[%s13 + $0x1c] sm:$0xf]
      %v3605 = vld [vmem:[%s13 + $0x20] sm:$0xf]
      %v3606 = vld [vmem:[%s13 + $0x24] sm:$0xf]
      %v3607 = vld [vmem:[%s13 + $0x28] sm:$0xf]
      %v3608 = vld [vmem:[%s13 + $0x2c] sm:$0xf]
      %v3609 = vld [vmem:[%s13 + $0x30] sm:$0xf]
      %v3610 = vld [vmem:[%s13 + $0x34] sm:$0xf]
      %v3611 = vld [vmem:[%s13 + $0x38] sm:$0xf]
      %v3612 = vld [vmem:[%s13 + $0x3c] sm:$0xf]
      %v3613 = vld [vmem:[%s14] sm:$0x1]
      %v3615 = vlaneseq
      %v3616 = vshrl.u32 %v3615, 7
      %v3617 = vsub.s32 0, %v3616
      %v3618 = vrot.slane %v3613, %v3617
      %v3636 = vunpack.c.l.b16 %v3597
      %v3637 = vunpack.c.l.b16 %v3598
      %v3638 = vunpack.c.l.b16 %v3599
      %v3639 = vunpack.c.l.b16 %v3600
      %v3640 = vunpack.c.l.b16 %v3601
      %v3641 = vunpack.c.l.b16 %v3602
      %v3642 = vunpack.c.l.b16 %v3603
      %v3643 = vunpack.c.l.b16 %v3604
      %v3644 = vunpack.c.l.b16 %v3605
      %v3645 = vunpack.c.l.b16 %v3606
      %v3646 = vunpack.c.l.b16 %v3607
      %v3647 = vunpack.c.l.b16 %v3608
      %v3648 = vunpack.c.l.b16 %v3609
      %v3649 = vunpack.c.l.b16 %v3610
      %v3650 = vunpack.c.l.b16 %v3611
      %v3651 = vunpack.c.l.b16 %v3612
      %v3652 = vpack.c.b16 %v3637, %v3636
      %v3653 = vpack.c.b16 %v3639, %v3638
      %v3654 = vpack.c.b16 %v3641, %v3640
      %v3655 = vpack.c.b16 %v3643, %v3642
      %v3656 = vpack.c.b16 %v3645, %v3644
      %v3657 = vpack.c.b16 %v3647, %v3646
      %v3658 = vpack.c.b16 %v3649, %v3648
      %v3659 = vpack.c.b16 %v3651, %v3650
      %3668 = vmatprep.subr.bf16.mxu0 0
      %3669 = vmatpush1.bf16.msra.mxu0 %v3652
      %3670 = vmatprep.subr.bf16.mxu0 0
      %3671 = vmatpush1.bf16.msra.mxu0 %v3653
      %3672 = vmatprep.subr.bf16.mxu0 0
      %3673 = vmatpush1.bf16.msra.mxu0 %v3654
      %3674 = vmatprep.subr.bf16.mxu0 0
      %3675 = vmatpush1.bf16.msra.mxu0 %v3655
      %3676 = vmatprep.subr.bf16.mxu0 0
      %3677 = vmatpush1.bf16.msra.mxu0 %v3656
      %3678 = vmatprep.subr.bf16.mxu0 0
      %3679 = vmatpush1.bf16.msra.mxu0 %v3657
      %3680 = vmatprep.subr.bf16.mxu0 0
      %3681 = vmatpush1.bf16.msra.mxu0 %v3658
      %3682 = vmatprep.subr.bf16.mxu0 0
      %3683 = vmatpush1.bf16.msra.mxu0 %v3659
      %3684 = vmatprep.subr.bf16.mxu0 0
      %3685 = vmatpush1.bf16.msra.mxu0 0
      %3686 = vmatprep.subr.bf16.mxu0 0
      %3687 = vmatpush1.bf16.msra.mxu0 0
      %3688 = vmatprep.subr.bf16.mxu0 0
      %3689 = vmatpush1.bf16.msra.mxu0 0
      %3690 = vmatprep.subr.bf16.mxu0 0
      %3691 = vmatpush1.bf16.msra.mxu0 0
      %3692 = vmatprep.subr.bf16.mxu0 0
      %3693 = vmatpush1.bf16.msra.mxu0 0
      %3694 = vmatprep.subr.bf16.mxu0 0
      %3695 = vmatpush1.bf16.msra.mxu0 0
      %3696 = vmatprep.subr.bf16.mxu0 0
      %3697 = vmatpush1.bf16.msra.mxu0 0
      %3698 = vmatprep.subr.bf16.mxu0 0
      %3699 = vmatpush1.bf16.msra.mxu0 0
      %3700 = vmatprep.mubr.bf16.mxu0 0
      %3701 = vmatmul.mubr.bf16.gmra.mrb[0].mxu0 %v3596
      %v3702 = vpop.f32.mrb[0].mxu0
      %v3703 = vadd.f32 %v3618, %v3702
      %v3704 = vpop.f32.mrb[0].mxu0
      %v3705 = vpop.f32.mrb[0].mxu0
      %v3706 = vpop.f32.mrb[0].mxu0
      %3707 = vdwg.mxu0
      %vm3708 = vcmask 15360
      %3709 = vst.msk [vmem:[%s15] sm:$0xff] %vm3708, %v3703
    $region81: #{tpu_custom_call.1} parent=1 // pred_fallthru
      _
    // Predicated region
    $region82: #{tpu_custom_call.1} parent=1 // pred_check
      _
    $region83: #{tpu_custom_call.1} parent=1 // pred_check_branch
      %3711 = sbr.rel (0) target = $region85
    $region84: #{tpu_custom_call.1} parent=1 // pred_region
      _
    $region85: #{tpu_custom_call.1} parent=1 // pred_fallthru
      _
    // Predicated region
    $region86: #{tpu_custom_call.1} parent=1 // pred_check
      _
    $region87: #{tpu_custom_call.1} parent=1 // pred_check_branch
      %3713 = sbr.rel (0) target = $region89
    $region88: #{tpu_custom_call.1} parent=1 // pred_region
      _
    $region89: #{tpu_custom_call.1} parent=1 // pred_fallthru
      _
    %3714 = vsyncpa [#allocation6], 1
    %3715 = vsyncpa [#allocation8], 1

</llo_original>
